<compile_context>
chip_gen: v6e
topology: v6e:2x2x1
jax: 0.10.0
libtpu: 0.0.40
codegen_flags: <defaults>
</compile_context>

<pallas_src>
import jax
import jax.numpy as jnp
from jax.experimental import pallas as pl
from jax.experimental.pallas import tpu as pltpu

HIDDEN = 1024   # hard-coded in FactAttention: FCNet([.., 1024]) and Linear(1024, 1)

_HAS_BUFFERED = hasattr(pl, "Buffered")


def fact_context_kernel(fact_ref, query_ref, wv_ref, bv_ref, wq_ref, bq_ref,
                        wl_ref, out_ref):
    bt, m, df = fact_ref.shape
    hidden = wv_ref.shape[1]
    mxu_dtype = wv_ref.dtype

    fact = fact_ref[...]                                   # (bt, m, df), input dtype

    # FCNet v_proj: one (bt*m, df) x (df, 1024) MXU matmul, f32 accumulation.
    # NOTE: the (bt, m) -> (bt*m) collapse is layout-free when m % 8 == 0;
    # for other m Mosaic inserts a VMEM relayout of this tile (perf only).
    fact2d = fact.reshape(bt * m, df).astype(mxu_dtype)
    v_proj = jnp.dot(fact2d, wv_ref[...], preferred_element_type=jnp.float32)
    v_proj = jnp.maximum(v_proj + bv_ref[...], 0.0)        # (bt*m, 1024) f32

    # FCNet q_proj for the whole batch block, with the weight-normed
    # Linear(1024, 1) row folded in:  logits = sum_h v_proj * (q_proj * wl).
    q = query_ref[...].astype(wq_ref.dtype)
    q_proj = jnp.dot(q, wq_ref[...], preferred_element_type=jnp.float32)
    q_proj = jnp.maximum(q_proj + bq_ref[...], 0.0)        # (bt, 1024) f32
    qw = q_proj * wl_ref[...]                              # (bt, 1024) f32

    v3 = v_proj.reshape(bt, m, hidden)
    logits = jnp.sum(v3 * qw[:, None, :], axis=-1)         # (bt, m) f32
    # The Linear(1024, 1) bias adds the same scalar to every logit of a row
    # and cancels in the softmax over m, so it is intentionally omitted.

    # Softmax over the fact dimension m.
    # TODO(synk): add a fact-length mask (-inf on padded rows) if M is ever
    # padded upstream; the PyTorch module assumes all m rows are real.
    m_max = jnp.max(logits, axis=-1, keepdims=True)
    e = jnp.exp(logits - m_max)
    attn = e * pl.reciprocal(jnp.sum(e, axis=-1, keepdims=True), approx=True)

    # fEmbed = sum_m attn * fact: VPU broadcast-multiply + sublane reduce,
    # using the original (f32-cast) fact regardless of the MXU compute dtype.
    out = jnp.sum(attn[:, :, None] * fact.astype(jnp.float32), axis=1)
    out_ref[...] = out.astype(out_ref.dtype)               # (bt, df)


def _default_target_rows():
    """MXU row target per grid step: ~128 on v5e (4x128^2 MXUs), 256 otherwise."""
    try:
        kind = jax.devices()[0].device_kind.lower()
    except Exception:
        return 256
    if "v5e" in kind or "v5 lite" in kind or "v5lite" in kind:
        return 128
    return 256


def _choose_block_batch(B, M, Df, H, fact_itemsize, *, target_rows=256,
                        vmem_budget=24 * 1024 * 1024):
    """Pick how many batch items to process per grid step.

    Valid block-batch sizes are multiples of 8 (sublane rule on the (Bt, Df)
    output / (Bt, H) query blocks) or the full batch B.  Prefers Bt*M close to
    `target_rows` (full MXU row tiles), >= 2 grid steps when B allows (two
    TensorCores on v7x), and a conservative VMEM footprint (safe under the
    32 MiB scoped default on v5e/v6e/v7x).
    """
    def vmem_bytes(bt):
        rows = bt * M
        return (2 * rows * Df * fact_itemsize        # double-buffered fact block
                + 2 * bt * Df * 4                    # double-buffered output block
                + 2 * bt * H * 4                     # double-buffered query block
                + rows * HIDDEN * 4                  # f32 v_proj intermediate
                + rows * Df * 4                      # f32 weighted-sum temp
                + (Df + H) * HIDDEN * 2              # weights (single-buffered, bf16)
                + 3 * HIDDEN * 4)                    # biases + wl row (f32)

    want = max(1, -(-target_rows // M))
    cands = sorted({B} | {8 * k for k in range(1, B // 8 + 1)})
    fits = [bt for bt in cands if vmem_bytes(bt) <= vmem_budget]
    pool = fits if fits else [min(cands)]
    multi = [bt for bt in pool if -(-B // bt) >= 2]
    pool = multi if multi else pool
    under = [bt for bt in pool if bt <= want]
    return max(under) if under else min(pool)


def prepare_params(params, compute_dtype=jnp.bfloat16):
    """Fold/cast weights once (jit-constant friendly); bl cancels in softmax."""
    wv, bv, wq, bq, wl, bl = params
    del bl   # scalar Linear(1024,1) bias: cancels in the softmax over M
    return (jnp.asarray(wv).astype(compute_dtype),                 # (Df, 1024)
            jnp.asarray(bv, jnp.float32).reshape(1, HIDDEN),       # (1, 1024)
            jnp.asarray(wq).astype(compute_dtype),                 # (H, 1024)
            jnp.asarray(bq, jnp.float32).reshape(1, HIDDEN),       # (1, 1024)
            jnp.asarray(wl, jnp.float32).reshape(1, HIDDEN))       # (1, 1024)


def fact_context_coder(fact, query, prepared_params, *, target_rows=None,
                       single_buffer_weights=True):
    B, M, Df = fact.shape
    Bq, H = query.shape
    assert Bq == B
    wv_c, bv_c, wq_c, bq_c, wl_row = prepared_params
    assert wv_c.shape == (Df, HIDDEN) and wq_c.shape == (H, HIDDEN)

    if target_rows is None:
        target_rows = _default_target_rows()
    Bt = _choose_block_batch(B, M, Df, H, jnp.dtype(fact.dtype).itemsize,
                             target_rows=target_rows)
    grid = (pl.cdiv(B, Bt),)   # partial last block handled by masked stores

    def run(use_single_buffer):
        def wspec(arr):
            kwargs = {}
            if use_single_buffer:
                # Constant-index weights: the second pipeline buffer is dead
                # VMEM, so request a single buffer.
                kwargs["pipeline_mode"] = pl.Buffered(1)
            return pl.BlockSpec(arr.shape, lambda b: (0, 0), **kwargs)

        return pl.pallas_call(
            fact_context_kernel,
            out_shape=jax.ShapeDtypeStruct((B, Df), fact.dtype),
            grid_spec=pltpu.PrefetchScalarGridSpec(
                num_scalar_prefetch=0,
                grid=grid,
                in_specs=[
                    # fact / output last dims equal the full array dims, so no
                    # channel padding is needed (exempt from the (8,128) rule).
                    pl.BlockSpec((Bt, M, Df), lambda b: (b, 0, 0)),   # fact
                    pl.BlockSpec((Bt, H), lambda b: (b, 0)),          # query
                    wspec(wv_c),                                      # Wv
                    wspec(bv_c),                                      # bv
                    wspec(wq_c),                                      # Wq
                    wspec(bq_c),                                      # bq
                    wspec(wl_row),                                    # Wl row
                ],
                out_specs=pl.BlockSpec((Bt, Df), lambda b: (b, 0)),
            ),
            # NOTE: pltpu.CORE_PARALLEL on the batch axis is worth trying on
            # v7x (2 TCs/chip); plain "parallel" is kept for portability.
            compiler_params=pltpu.CompilerParams(
                dimension_semantics=("parallel",),
                vmem_limit_bytes=32 * 1024 * 1024),
        )(fact, query, wv_c, bv_c, wq_c, bq_c, wl_row)

    if single_buffer_weights and _HAS_BUFFERED:
        try:
            return run(True)
        except Exception:
            # pl.Buffered(1) not supported by this JAX/Mosaic: fall back to
            # default double-buffered weight blocks.
            pass
    return run(False)


# ----------------------------- reference & init ------------------------------

def weight_norm_effective(v, g):
    # PyTorch weight_norm(dim=None): w = g * v / ||v||_F  (scalar g)
    return g * v / jnp.sqrt(jnp.sum(v * v))


def init_params(key, Df, H):
    ks = jax.random.split(key, 6)
    scale = 0.05
    wv_v = scale * jax.random.normal(ks[0], (Df, HIDDEN), jnp.float32)
    wv = weight_norm_effective(wv_v, jnp.sqrt(jnp.sum(wv_v * wv_v)))
    bv = scale * jax.random.normal(ks[1], (1, HIDDEN), jnp.float32)
    wq_v = scale * jax.random.normal(ks[2], (H, HIDDEN), jnp.float32)
    wq = weight_norm_effective(wq_v, jnp.sqrt(jnp.sum(wq_v * wq_v)))
    bq = scale * jax.random.normal(ks[3], (1, HIDDEN), jnp.float32)
    wl_v = scale * jax.random.normal(ks[4], (HIDDEN, 1), jnp.float32)
    wl = weight_norm_effective(wl_v, jnp.sqrt(jnp.sum(wl_v * wl_v)))
    bl = scale * jax.random.normal(ks[5], (1, 1), jnp.float32)
    return (wv, bv, wq, bq, wl, bl)


def reference_forward(fact, query, params):
    wv, bv, wq, bq, wl, bl = params
    v_proj = jax.nn.relu(jnp.einsum("bmd,dh->bmh", fact, wv) + bv)       # (B,M,1024)
    q_proj = jax.nn.relu(query @ wq + bq)[:, None, :]                    # (B,1,1024)
    joint = v_proj * q_proj
    logits = jnp.einsum("bmh,ho->bmo", joint, wl) + bl                   # (B,M,1)
    attn = jax.nn.softmax(logits, axis=1)
    return jnp.sum(attn * fact, axis=1)                                  # (B,Df)


if __name__ == "__main__":
    params_cfg = dict(rnnHiddenSize=32, ansEmbedSize=32,
                      imgEmbedSize=32, imgFeatureSize=64)
    H = params_cfg["rnnHiddenSize"]
    Df = params_cfg["ansEmbedSize"] + params_cfg["rnnHiddenSize"]        # 64

    key = jax.random.PRNGKey(0)
    k_fact, k_query, k_params = jax.random.split(key, 3)
    params = init_params(k_params, Df, H)

    # Case 1: B divisible by the chosen block batch (>= 2 grid steps).
    B, M = 16, 8
    fact = jax.random.normal(k_fact, (B, M, Df), jnp.float32)
    query = jax.random.normal(k_query, (B, H), jnp.float32)
    ref = reference_forward(fact, query, params)

    # f32 MXU path: only the approx-reciprocal softmax differs from reference.
    prep_f32 = prepare_params(params, compute_dtype=jnp.float32)
    out_f32 = jax.block_until_ready(fact_context_coder(fact, query, prep_f32))
    assert out_f32.shape == (B, Df)
    err_f32 = float(jnp.max(jnp.abs(out_f32 - ref)))
    assert jnp.allclose(out_f32, ref, atol=5e-3, rtol=5e-3), \
        f"f32 path max abs err {err_f32}"

    # Default bf16-MXU path (f32 accumulation), looser tolerance.
    prep_bf16 = prepare_params(params, compute_dtype=jnp.bfloat16)
    out_bf16 = jax.block_until_ready(fact_context_coder(fact, query, prep_bf16))
    assert out_bf16.shape == (B, Df)
    err_bf16 = float(jnp.max(jnp.abs(out_bf16 - ref)))
    assert jnp.allclose(out_bf16, ref, atol=5e-2, rtol=5e-2), \
        f"bf16 path max abs err {err_bf16}"

    # Case 2: B not divisible by the block batch (cdiv grid, masked partial
    # last block) -- exercises the fixed Bt chooser for awkward B.
    B2 = 20
    fact2 = jax.random.normal(jax.random.PRNGKey(1), (B2, M, Df), jnp.float32)
    query2 = jax.random.normal(jax.random.PRNGKey(2), (B2, H), jnp.float32)
    ref2 = reference_forward(fact2, query2, params)
    out2 = jax.block_until_ready(fact_context_coder(fact2, query2, prep_f32))
    assert out2.shape == (B2, Df)
    err2 = float(jnp.max(jnp.abs(out2 - ref2)))
    assert jnp.allclose(out2, ref2, atol=5e-3, rtol=5e-3), \
        f"partial-block path max abs err {err2}"

    print("KERNEL_OK")
</pallas_src>

<mosaic_0001>
module attributes {stable_mosaic.version = 11 : i64} {
  func.func @fact_context_kernel(%arg0: i32, %arg1: memref<8x8x64xf32, #tpu.memory_space<vmem>>, %arg2: memref<8x32xf32, #tpu.memory_space<vmem>>, %arg3: memref<64x1024xf32, #tpu.memory_space<vmem>>, %arg4: memref<1x1024xf32, #tpu.memory_space<vmem>>, %arg5: memref<32x1024xf32, #tpu.memory_space<vmem>>, %arg6: memref<1x1024xf32, #tpu.memory_space<vmem>>, %arg7: memref<1x1024xf32, #tpu.memory_space<vmem>>, %arg8: memref<8x64xf32, #tpu.memory_space<vmem>>) attributes {dimension_semantics = [#tpu.dimension_semantics<parallel>], iteration_bounds = array<i64: 2>, scalar_prefetch = 0 : i64, scratch_operands = 0 : i64, tpu.core_type = #tpu.core_type<tc>, window_params = [{transform_indices = @transform_0, window_bounds = array<i64: 8, 8, 64>}, {transform_indices = @transform_1, window_bounds = array<i64: 8, 32>}, {pipeline_mode = #tpu.pipeline_mode<synchronous>, transform_indices = @transform_2, window_bounds = array<i64: 64, 1024>}, {pipeline_mode = #tpu.pipeline_mode<synchronous>, transform_indices = @transform_3, window_bounds = array<i64: 1, 1024>}, {pipeline_mode = #tpu.pipeline_mode<synchronous>, transform_indices = @transform_4, window_bounds = array<i64: 32, 1024>}, {pipeline_mode = #tpu.pipeline_mode<synchronous>, transform_indices = @transform_5, window_bounds = array<i64: 1, 1024>}, {pipeline_mode = #tpu.pipeline_mode<synchronous>, transform_indices = @transform_6, window_bounds = array<i64: 1, 1024>}, {transform_indices = @transform_7, window_bounds = array<i64: 8, 64>}]} {
    %c0 = arith.constant 0 : index
    %c0_0 = arith.constant 0 : index
    %c0_1 = arith.constant 0 : index
    %0 = vector.load %arg1[%c0, %c0_0, %c0_1] : memref<8x8x64xf32, #tpu.memory_space<vmem>>, vector<8x8x64xf32>
    %1 = vector.shape_cast %0 : vector<8x8x64xf32> to vector<64x64xf32>
    %c0_2 = arith.constant 0 : index
    %c0_3 = arith.constant 0 : index
    %2 = vector.load %arg3[%c0_2, %c0_3] : memref<64x1024xf32, #tpu.memory_space<vmem>>, vector<64x1024xf32>
    %cst = arith.constant dense<0.000000e+00> : vector<64x1024xf32>
    %3 = tpu.matmul %1, %2, %cst {dimension_numbers = #tpu.dot_dimension_numbers<[1], [0], [0], [1], [0, 0, 1, 1], [], []>} : vector<64x64xf32>, vector<64x1024xf32>, vector<64x1024xf32> -> vector<64x1024xf32>
    %c0_4 = arith.constant 0 : index
    %c0_5 = arith.constant 0 : index
    %4 = vector.load %arg4[%c0_4, %c0_5] : memref<1x1024xf32, #tpu.memory_space<vmem>>, vector<1x1024xf32>
    %5 = vector.broadcast %4 : vector<1x1024xf32> to vector<64x1024xf32>
    %6 = arith.addf %3, %5 : vector<64x1024xf32>
    %cst_6 = arith.constant 0.000000e+00 : f32
    %7 = vector.broadcast %cst_6 : f32 to vector<64x1024xf32>
    %8 = arith.maximumf %6, %7 : vector<64x1024xf32>
    %c0_7 = arith.constant 0 : index
    %c0_8 = arith.constant 0 : index
    %9 = vector.load %arg2[%c0_7, %c0_8] : memref<8x32xf32, #tpu.memory_space<vmem>>, vector<8x32xf32>
    %c0_9 = arith.constant 0 : index
    %c0_10 = arith.constant 0 : index
    %10 = vector.load %arg5[%c0_9, %c0_10] : memref<32x1024xf32, #tpu.memory_space<vmem>>, vector<32x1024xf32>
    %cst_11 = arith.constant dense<0.000000e+00> : vector<8x1024xf32>
    %11 = tpu.matmul %9, %10, %cst_11 {dimension_numbers = #tpu.dot_dimension_numbers<[1], [0], [0], [1], [0, 0, 1, 1], [], []>} : vector<8x32xf32>, vector<32x1024xf32>, vector<8x1024xf32> -> vector<8x1024xf32>
    %c0_12 = arith.constant 0 : index
    %c0_13 = arith.constant 0 : index
    %12 = vector.load %arg6[%c0_12, %c0_13] : memref<1x1024xf32, #tpu.memory_space<vmem>>, vector<1x1024xf32>
    %13 = vector.broadcast %12 : vector<1x1024xf32> to vector<8x1024xf32>
    %14 = arith.addf %11, %13 : vector<8x1024xf32>
    %cst_14 = arith.constant 0.000000e+00 : f32
    %15 = vector.broadcast %cst_14 : f32 to vector<8x1024xf32>
    %16 = arith.maximumf %14, %15 : vector<8x1024xf32>
    %c0_15 = arith.constant 0 : index
    %c0_16 = arith.constant 0 : index
    %17 = vector.load %arg7[%c0_15, %c0_16] : memref<1x1024xf32, #tpu.memory_space<vmem>>, vector<1x1024xf32>
    %18 = vector.broadcast %17 : vector<1x1024xf32> to vector<8x1024xf32>
    %19 = arith.mulf %16, %18 : vector<8x1024xf32>
    %20 = vector.shape_cast %8 : vector<64x1024xf32> to vector<8x8x1024xf32>
    %21 = vector.shape_cast %19 : vector<8x1024xf32> to vector<8x1x1024xf32>
    %22 = vector.broadcast %21 : vector<8x1x1024xf32> to vector<8x8x1024xf32>
    %23 = arith.mulf %20, %22 : vector<8x8x1024xf32>
    %cst_17 = arith.constant dense<0.000000e+00> : vector<8x8xf32>
    %24 = vector.multi_reduction <add>, %23, %cst_17 [2] : vector<8x8x1024xf32> to vector<8x8xf32>
    %cst_18 = arith.constant dense<0xFF800000> : vector<8xf32>
    %25 = vector.multi_reduction <maximumf>, %24, %cst_18 [1] : vector<8x8xf32> to vector<8xf32>
    %26 = vector.shape_cast %25 : vector<8xf32> to vector<8x1xf32>
    %27 = vector.broadcast %26 : vector<8x1xf32> to vector<8x8xf32>
    %28 = arith.subf %24, %27 : vector<8x8xf32>
    %29 = math.exp %28 : vector<8x8xf32>
    %cst_19 = arith.constant dense<0.000000e+00> : vector<8xf32>
    %30 = vector.multi_reduction <add>, %29, %cst_19 [1] : vector<8x8xf32> to vector<8xf32>
    %31 = vector.shape_cast %30 : vector<8xf32> to vector<8x1xf32>
    %32 = tpu.reciprocal %31 {approx = true} : vector<8x1xf32> -> vector<8x1xf32>
    %33 = vector.broadcast %32 : vector<8x1xf32> to vector<8x8xf32>
    %34 = arith.mulf %29, %33 : vector<8x8xf32>
    %35 = vector.shape_cast %34 : vector<8x8xf32> to vector<8x8x1xf32>
    %36 = vector.broadcast %35 : vector<8x8x1xf32> to vector<8x8x64xf32>
    %37 = arith.mulf %36, %0 : vector<8x8x64xf32>
    %cst_20 = arith.constant dense<0.000000e+00> : vector<8x64xf32>
    %38 = vector.multi_reduction <add>, %37, %cst_20 [1] : vector<8x8x64xf32> to vector<8x64xf32>
    %c0_21 = arith.constant 0 : index
    %c0_22 = arith.constant 0 : index
    %39 = vector.load %arg8[%c0_21, %c0_22] : memref<8x64xf32, #tpu.memory_space<vmem>>, vector<8x64xf32>
    tpu.vector_store %arg8[%c0_21, %c0_22], %38 {strides = array<i32>} : memref<8x64xf32, #tpu.memory_space<vmem>>, vector<8x64xf32>,
    return
  }
  func.func @transform_0(%arg0: i32) -> (i32, i32, i32) {
    %c0_i32 = arith.constant 0 : i32
    %c0_i32_0 = arith.constant 0 : i32
    %c0_i32_1 = arith.constant 0 : i32
    return %arg0, %c0_i32, %c0_i32_0 : i32, i32, i32
  }
  func.func @transform_1(%arg0: i32) -> (i32, i32) {
    %c0_i32 = arith.constant 0 : i32
    %c0_i32_0 = arith.constant 0 : i32
    return %arg0, %c0_i32 : i32, i32
  }
  func.func @transform_2(%arg0: i32) -> (i32, i32) {
    %c0_i32 = arith.constant 0 : i32
    %c0_i32_0 = arith.constant 0 : i32
    %c0_i32_1 = arith.constant 0 : i32
    return %c0_i32, %c0_i32_0 : i32, i32
  }
  func.func @transform_3(%arg0: i32) -> (i32, i32) {
    %c0_i32 = arith.constant 0 : i32
    %c0_i32_0 = arith.constant 0 : i32
    %c0_i32_1 = arith.constant 0 : i32
    return %c0_i32, %c0_i32_0 : i32, i32
  }
  func.func @transform_4(%arg0: i32) -> (i32, i32) {
    %c0_i32 = arith.constant 0 : i32
    %c0_i32_0 = arith.constant 0 : i32
    %c0_i32_1 = arith.constant 0 : i32
    return %c0_i32, %c0_i32_0 : i32, i32
  }
  func.func @transform_5(%arg0: i32) -> (i32, i32) {
    %c0_i32 = arith.constant 0 : i32
    %c0_i32_0 = arith.constant 0 : i32
    %c0_i32_1 = arith.constant 0 : i32
    return %c0_i32, %c0_i32_0 : i32, i32
  }
  func.func @transform_6(%arg0: i32) -> (i32, i32) {
    %c0_i32 = arith.constant 0 : i32
    %c0_i32_0 = arith.constant 0 : i32
    %c0_i32_1 = arith.constant 0 : i32
    return %c0_i32, %c0_i32_0 : i32, i32
  }
  func.func @transform_7(%arg0: i32) -> (i32, i32) {
    %c0_i32 = arith.constant 0 : i32
    %c0_i32_0 = arith.constant 0 : i32
    return %arg0, %c0_i32 : i32, i32
  }
}

module attributes {stable_mosaic.version = 11 : i64} {
  func.func @fact_context_kernel(%arg0: i32, %arg1: memref<8x8x64xf32, #tpu.memory_space<vmem>>, %arg2: memref<8x32xf32, #tpu.memory_space<vmem>>, %arg3: memref<64x1024xf32, #tpu.memory_space<vmem>>, %arg4: memref<1x1024xf32, #tpu.memory_space<vmem>>, %arg5: memref<32x1024xf32, #tpu.memory_space<vmem>>, %arg6: memref<1x1024xf32, #tpu.memory_space<vmem>>, %arg7: memref<1x1024xf32, #tpu.memory_space<vmem>>, %arg8: memref<8x64xf32, #tpu.memory_space<vmem>>) attributes {dimension_semantics = [#tpu.dimension_semantics<parallel>], iteration_bounds = array<i64: 2>, scalar_prefetch = 0 : i64, scratch_operands = 0 : i64, tpu.core_type = #tpu.core_type<tc>, window_params = [{transform_indices = @transform_0, window_bounds = array<i64: 8, 8, 64>}, {transform_indices = @transform_1, window_bounds = array<i64: 8, 32>}, {pipeline_mode = #tpu.pipeline_mode<synchronous>, transform_indices = @transform_2, window_bounds = array<i64: 64, 1024>}, {pipeline_mode = #tpu.pipeline_mode<synchronous>, transform_indices = @transform_3, window_bounds = array<i64: 1, 1024>}, {pipeline_mode = #tpu.pipeline_mode<synchronous>, transform_indices = @transform_4, window_bounds = array<i64: 32, 1024>}, {pipeline_mode = #tpu.pipeline_mode<synchronous>, transform_indices = @transform_5, window_bounds = array<i64: 1, 1024>}, {pipeline_mode = #tpu.pipeline_mode<synchronous>, transform_indices = @transform_6, window_bounds = array<i64: 1, 1024>}, {transform_indices = @transform_7, window_bounds = array<i64: 8, 64>}]} {
    %c0 = arith.constant 0 : index
    %c0_0 = arith.constant 0 : index
    %c0_1 = arith.constant 0 : index
    %0 = vector.load %arg1[%c0, %c0_0, %c0_1] : memref<8x8x64xf32, #tpu.memory_space<vmem>>, vector<8x8x64xf32>
    %1 = vector.shape_cast %0 : vector<8x8x64xf32> to vector<64x64xf32>
    %c0_2 = arith.constant 0 : index
    %c0_3 = arith.constant 0 : index
    %2 = vector.load %arg3[%c0_2, %c0_3] : memref<64x1024xf32, #tpu.memory_space<vmem>>, vector<64x1024xf32>
    %cst = arith.constant dense<0.000000e+00> : vector<64x1024xf32>
    %3 = tpu.matmul %1, %2, %cst {dimension_numbers = #tpu.dot_dimension_numbers<[1], [0], [0], [1], [0, 0, 1, 1], [], []>} : vector<64x64xf32>, vector<64x1024xf32>, vector<64x1024xf32> -> vector<64x1024xf32>
    %c0_4 = arith.constant 0 : index
    %c0_5 = arith.constant 0 : index
    %4 = vector.load %arg4[%c0_4, %c0_5] : memref<1x1024xf32, #tpu.memory_space<vmem>>, vector<1x1024xf32>
    %5 = vector.broadcast %4 : vector<1x1024xf32> to vector<64x1024xf32>
    %6 = arith.addf %3, %5 : vector<64x1024xf32>
    %cst_6 = arith.constant 0.000000e+00 : f32
    %7 = vector.broadcast %cst_6 : f32 to vector<64x1024xf32>
    %8 = arith.maximumf %6, %7 : vector<64x1024xf32>
    %c0_7 = arith.constant 0 : index
    %c0_8 = arith.constant 0 : index
    %9 = vector.load %arg2[%c0_7, %c0_8] : memref<8x32xf32, #tpu.memory_space<vmem>>, vector<8x32xf32>
    %c0_9 = arith.constant 0 : index
    %c0_10 = arith.constant 0 : index
    %10 = vector.load %arg5[%c0_9, %c0_10] : memref<32x1024xf32, #tpu.memory_space<vmem>>, vector<32x1024xf32>
    %cst_11 = arith.constant dense<0.000000e+00> : vector<8x1024xf32>
    %11 = tpu.matmul %9, %10, %cst_11 {dimension_numbers = #tpu.dot_dimension_numbers<[1], [0], [0], [1], [0, 0, 1, 1], [], []>} : vector<8x32xf32>, vector<32x1024xf32>, vector<8x1024xf32> -> vector<8x1024xf32>
    %c0_12 = arith.constant 0 : index
    %c0_13 = arith.constant 0 : index
    %12 = vector.load %arg6[%c0_12, %c0_13] : memref<1x1024xf32, #tpu.memory_space<vmem>>, vector<1x1024xf32>
    %13 = vector.broadcast %12 : vector<1x1024xf32> to vector<8x1024xf32>
    %14 = arith.addf %11, %13 : vector<8x1024xf32>
    %cst_14 = arith.constant 0.000000e+00 : f32
    %15 = vector.broadcast %cst_14 : f32 to vector<8x1024xf32>
    %16 = arith.maximumf %14, %15 : vector<8x1024xf32>
    %c0_15 = arith.constant 0 : index
    %c0_16 = arith.constant 0 : index
    %17 = vector.load %arg7[%c0_15, %c0_16] : memref<1x1024xf32, #tpu.memory_space<vmem>>, vector<1x1024xf32>
    %18 = vector.broadcast %17 : vector<1x1024xf32> to vector<8x1024xf32>
    %19 = arith.mulf %16, %18 : vector<8x1024xf32>
    %20 = vector.shape_cast %8 : vector<64x1024xf32> to vector<8x8x1024xf32>
    %21 = vector.shape_cast %19 : vector<8x1024xf32> to vector<8x1x1024xf32>
    %22 = vector.broadcast %21 : vector<8x1x1024xf32> to vector<8x8x1024xf32>
    %23 = arith.mulf %20, %22 : vector<8x8x1024xf32>
    %cst_17 = arith.constant dense<0.000000e+00> : vector<8x8xf32>
    %24 = vector.multi_reduction <add>, %23, %cst_17 [2] : vector<8x8x1024xf32> to vector<8x8xf32>
    %cst_18 = arith.constant dense<0xFF800000> : vector<8xf32>
    %25 = vector.multi_reduction <maximumf>, %24, %cst_18 [1] : vector<8x8xf32> to vector<8xf32>
    %26 = vector.shape_cast %25 : vector<8xf32> to vector<8x1xf32>
    %27 = vector.broadcast %26 : vector<8x1xf32> to vector<8x8xf32>
    %28 = arith.subf %24, %27 : vector<8x8xf32>
    %29 = math.exp %28 : vector<8x8xf32>
    %cst_19 = arith.constant dense<0.000000e+00> : vector<8xf32>
    %30 = vector.multi_reduction <add>, %29, %cst_19 [1] : vector<8x8xf32> to vector<8xf32>
    %31 = vector.shape_cast %30 : vector<8xf32> to vector<8x1xf32>
    %32 = tpu.reciprocal %31 {approx = true} : vector<8x1xf32> -> vector<8x1xf32>
    %33 = vector.broadcast %32 : vector<8x1xf32> to vector<8x8xf32>
    %34 = arith.mulf %29, %33 : vector<8x8xf32>
    %35 = vector.shape_cast %34 : vector<8x8xf32> to vector<8x8x1xf32>
    %36 = vector.broadcast %35 : vector<8x8x1xf32> to vector<8x8x64xf32>
    %37 = arith.mulf %36, %0 : vector<8x8x64xf32>
    %cst_20 = arith.constant dense<0.000000e+00> : vector<8x64xf32>
    %38 = vector.multi_reduction <add>, %37, %cst_20 [1] : vector<8x8x64xf32> to vector<8x64xf32>
    %c0_21 = arith.constant 0 : index
    %c0_22 = arith.constant 0 : index
    %39 = vector.load %arg8[%c0_21, %c0_22] : memref<8x64xf32, #tpu.memory_space<vmem>>, vector<8x64xf32>
    tpu.vector_store %arg8[%c0_21, %c0_22], %38 {strides = array<i32>} : memref<8x64xf32, #tpu.memory_space<vmem>>, vector<8x64xf32>,
    return
  }
  func.func @transform_0(%arg0: i32) -> (i32, i32, i32) {
    %c0_i32 = arith.constant 0 : i32
    %c0_i32_0 = arith.constant 0 : i32
    %c0_i32_1 = arith.constant 0 : i32
    return %arg0, %c0_i32, %c0_i32_0 : i32, i32, i32
  }
  func.func @transform_1(%arg0: i32) -> (i32, i32) {
    %c0_i32 = arith.constant 0 : i32
    %c0_i32_0 = arith.constant 0 : i32
    return %arg0, %c0_i32 : i32, i32
  }
  func.func @transform_2(%arg0: i32) -> (i32, i32) {
    %c0_i32 = arith.constant 0 : i32
    %c0_i32_0 = arith.constant 0 : i32
    %c0_i32_1 = arith.constant 0 : i32
    return %c0_i32, %c0_i32_0 : i32, i32
  }
  func.func @transform_3(%arg0: i32) -> (i32, i32) {
    %c0_i32 = arith.constant 0 : i32
    %c0_i32_0 = arith.constant 0 : i32
    %c0_i32_1 = arith.constant 0 : i32
    return %c0_i32, %c0_i32_0 : i32, i32
  }
  func.func @transform_4(%arg0: i32) -> (i32, i32) {
    %c0_i32 = arith.constant 0 : i32
    %c0_i32_0 = arith.constant 0 : i32
    %c0_i32_1 = arith.constant 0 : i32
    return %c0_i32, %c0_i32_0 : i32, i32
  }
  func.func @transform_5(%arg0: i32) -> (i32, i32) {
    %c0_i32 = arith.constant 0 : i32
    %c0_i32_0 = arith.constant 0 : i32
    %c0_i32_1 = arith.constant 0 : i32
    return %c0_i32, %c0_i32_0 : i32, i32
  }
  func.func @transform_6(%arg0: i32) -> (i32, i32) {
    %c0_i32 = arith.constant 0 : i32
    %c0_i32_0 = arith.constant 0 : i32
    %c0_i32_1 = arith.constant 0 : i32
    return %c0_i32, %c0_i32_0 : i32, i32
  }
  func.func @transform_7(%arg0: i32) -> (i32, i32) {
    %c0_i32 = arith.constant 0 : i32
    %c0_i32_0 = arith.constant 0 : i32
    return %arg0, %c0_i32 : i32, i32
  }
}

</mosaic_0001>

<llo_original>
// kernel: tpu_custom_call.1
$region0: #{tpu_custom_call.1}
  #allocation0 [shape = 'u32[]', space=smem, size = 0x4, offset = 0x4, fixed_abs, tag = 'smem constant byte address 0x4 - core index']
  #allocation1 [shape = 'u32[144,128]{1,0:T(1,128)}', space=vmem, size = 0x12000, scoped, tag = 'internal scratch']
  %s0 = inlined_call_operand.hbm [shape: f32[16,8,64], index: 0, kind: input, shape index: {}]
  %s1 = inlined_call_operand.hbm [shape: f32[16,32], index: 1, kind: input, shape index: {}]
  %s2 = inlined_call_operand.hbm [shape: f32[64,1024], index: 2, kind: input, shape index: {}]
  %s3 = inlined_call_operand.hbm [shape: f32[1,1024], index: 3, kind: input, shape index: {}]
  %s4 = inlined_call_operand.hbm [shape: f32[32,1024], index: 4, kind: input, shape index: {}]
  %s5 = inlined_call_operand.vmem [shape: f32[1,1024], index: 5, kind: input, shape index: {}]
  %s6 = inlined_call_operand.hbm [shape: f32[1,1024], index: 6, kind: input, shape index: {}]
  %s7 = inlined_call_operand.hbm [shape: f32[16,64], index: 7, kind: output, shape index: {}]
  %s8 = sld [smem:[#allocation0]]
  $region85: #{tpu_custom_call.1} parent=0
    _
  %s10 = ssub.s32 1, %s8
  %s11 = scalar_select 0, %s10, %s8
  $region1: #{tpu_custom_call.1} parent=0
    #allocation2 [shape = 'u8[65536]{0}', space=vmem, size = 0x10000, scoped, tag = 'input window, operand 0']
    #allocation3 [shape = 's32[2]{0}', space=sflag, size = 0x8, scoped, tag = 'scoped memory for tpu_custom_call.1']
    #allocation4 [shape = 's32[2]{0}', space=sflag, size = 0x8, scoped, tag = 'scoped memory for tpu_custom_call.1']
    #allocation5 [shape = 'u8[8192]{0}', space=vmem, size = 0x2000, scoped, tag = 'input window, operand 1']
    #allocation6 [shape = 's32[2]{0}', space=sflag, size = 0x8, scoped, tag = 'scoped memory for tpu_custom_call.1']
    #allocation7 [shape = 'u8[262144]{0}', space=vmem, size = 0x40000, scoped, tag = 'input window, operand 2, single buffered']
    #allocation8 [shape = 'u8[4096]{0}', space=vmem, size = 0x1000, scoped, tag = 'input window, operand 3, single buffered']
    #allocation9 [shape = 's32[1]{0}', space=sflag, size = 0x4, scoped, tag = 'scoped memory for tpu_custom_call.1']
    #allocation10 [shape = 'u8[131072]{0}', space=vmem, size = 0x20000, scoped, tag = 'input window, operand 4, single buffered']
    #allocation11 [shape = 'u8[4096]{0}', space=vmem, size = 0x1000, scoped, tag = 'input window, operand 6, single buffered']
    #allocation12 [shape = 's32[1]{0}', space=sflag, size = 0x4, scoped, tag = 'scoped memory for tpu_custom_call.1']
    #allocation13 [shape = 'u8[8192]{0}', space=vmem, size = 0x2000, scoped, tag = 'output window, operand 0']
    %12 = vsyncpa [#allocation3], 0
    %s13 = scalar_lea.sflag [#allocation3], 1
    %14 = vsyncpa %s13, 0
    %15 = vsyncpa [#allocation6], 0
    %s16 = scalar_lea.sflag [#allocation6], 1
    %17 = vsyncpa %s16, 0
    %18 = vsyncpa [#allocation9], 0
    %19 = vsyncpa [#allocation12], 0
    %20 = vsyncpa [#allocation4], 0
    %s21 = scalar_lea.sflag [#allocation4], 1
    %22 = vsyncpa %s21, 0
    loop: start=0, step=1, limit=4
    $region2: #{tpu_custom_call.1} parent=1 // loop_pre_header
      _
    $region3: #{tpu_custom_call.1} parent=1 // loop_header
      %s24 = sphi 0, %s28
      %p25 = scmp.ge.s32.totalorder %s24, 4
      %s34 = sphi 0, %s36
      %s37 = sphi 0, %s34
      %s38 = sphi 0, %s37
      %s54 = sphi 0, %s38
      %s60 = sphi 0, %s62
      %s63 = sphi 0, %s60
      %s64 = sphi 0, %s63
      %s80 = sphi 0, %s64
      %s84 = sphi 0, %s84
      %s86 = sphi 0, %s84
      %s87 = sphi 0, %s86
      %s101 = sphi 0, %s87
      %s105 = sphi 0, %s105
      %s107 = sphi 0, %s105
      %s108 = sphi 0, %s107
      %s122 = sphi 0, %s108
      %s126 = sphi 0, %s126
      %s128 = sphi 0, %s126
      %s129 = sphi 0, %s128
      %s143 = sphi 0, %s129
      %s147 = sphi 0, %s147
      %s149 = sphi 0, %s147
      %s150 = sphi 0, %s149
      %s164 = sphi 0, %s150
      %s168 = sphi 0, %s168
      %s170 = sphi 0, %s168
      %s171 = sphi 0, %s170
      %s185 = sphi 0, %s171
      %s191 = sphi 0, %s193
      %s194 = sphi 0, %s191
      %s195 = sphi 0, %s194
      %s211 = sphi 0, %s195
    $region4: #{tpu_custom_call.1} parent=1 // loop_header_branch
      %27 = sbr.rel (%p25) target = $region8
    $region5: #{tpu_custom_call.1} parent=1 // loop_body
      %s29 = ssub.s32 %s24, 1
      %s30 = ssub.s32 %s24, 2
      %s31 = sadd.s32 %s24, 1
      %s32 = ssub.s32 %s24, %s31
      %p33 = scmp.eq.s32.totalorder %s32, 0
      %s35 = sadd.s32 %s34, 1
      %s36 = scalar_select %p33, %s34, %s35
      %p39 = pneg %p33
      %p40 = scmp.eq.s32.totalorder %s24, 1
      %p41 = por %p39, %p40
      %p42 = scmp.ne.s32.totalorder %s34, %s37
      %p43 = scmp.eq.s32.totalorder %s24, 0
      %p44 = por %p42, %p43
      %p45 = scmp.ne.s32.totalorder %s34, %s37
      %p46 = scmp.eq.s32.totalorder %s29, 1
      %p47 = por %p45, %p46
      %p48 = scmp.ne.s32.totalorder %s37, %s38
      %p49 = scmp.eq.s32.totalorder %s29, 0
      %p50 = por %p48, %p49
      %p51 = scmp.ne.s32.totalorder %s37, %s38
      %p52 = scmp.eq.s32.totalorder %s30, 1
      %p53 = por %p51, %p52
      %p55 = scmp.ne.s32.totalorder %s38, %s54
      %p56 = scmp.eq.s32.totalorder %s30, 0
      %p57 = por %p55, %p56
      %s58 = ssub.s32 %s24, %s31
      %p59 = scmp.eq.s32.totalorder %s58, 0
      %s61 = sadd.s32 %s60, 1
      %s62 = scalar_select %p59, %s60, %s61
      %p65 = pneg %p59
      %p66 = scmp.eq.s32.totalorder %s24, 1
      %p67 = por %p65, %p66
      %p68 = scmp.ne.s32.totalorder %s60, %s63
      %p69 = scmp.eq.s32.totalorder %s24, 0
      %p70 = por %p68, %p69
      %p71 = scmp.ne.s32.totalorder %s60, %s63
      %p72 = scmp.eq.s32.totalorder %s29, 1
      %p73 = por %p71, %p72
      %p74 = scmp.ne.s32.totalorder %s63, %s64
      %p75 = scmp.eq.s32.totalorder %s29, 0
      %p76 = por %p74, %p75
      %p77 = scmp.ne.s32.totalorder %s63, %s64
      %p78 = scmp.eq.s32.totalorder %s30, 1
      %p79 = por %p77, %p78
      %p81 = scmp.ne.s32.totalorder %s64, %s80
      %p82 = scmp.eq.s32.totalorder %s30, 0
      %p83 = por %p81, %p82
      %s85 = sadd.s32 %s84, 1
      %p88 = scmp.eq.s32.totalorder %s24, 1
      %p89 = scmp.ne.s32.totalorder %s84, %s86
      %p90 = scmp.eq.s32.totalorder %s24, 0
      %p91 = por %p89, %p90
      %p92 = scmp.ne.s32.totalorder %s84, %s86
      %p93 = scmp.eq.s32.totalorder %s29, 1
      %p94 = por %p92, %p93
      %p95 = scmp.ne.s32.totalorder %s86, %s87
      %p96 = scmp.eq.s32.totalorder %s29, 0
      %p97 = por %p95, %p96
      %p98 = scmp.ne.s32.totalorder %s86, %s87
      %p99 = scmp.eq.s32.totalorder %s30, 1
      %p100 = por %p98, %p99
      %p102 = scmp.ne.s32.totalorder %s87, %s101
      %p103 = scmp.eq.s32.totalorder %s30, 0
      %p104 = por %p102, %p103
      %s106 = sadd.s32 %s105, 1
      %p109 = scmp.eq.s32.totalorder %s24, 1
      %p110 = scmp.ne.s32.totalorder %s105, %s107
      %p111 = scmp.eq.s32.totalorder %s24, 0
      %p112 = por %p110, %p111
      %p113 = scmp.ne.s32.totalorder %s105, %s107
      %p114 = scmp.eq.s32.totalorder %s29, 1
      %p115 = por %p113, %p114
      %p116 = scmp.ne.s32.totalorder %s107, %s108
      %p117 = scmp.eq.s32.totalorder %s29, 0
      %p118 = por %p116, %p117
      %p119 = scmp.ne.s32.totalorder %s107, %s108
      %p120 = scmp.eq.s32.totalorder %s30, 1
      %p121 = por %p119, %p120
      %p123 = scmp.ne.s32.totalorder %s108, %s122
      %p124 = scmp.eq.s32.totalorder %s30, 0
      %p125 = por %p123, %p124
      %s127 = sadd.s32 %s126, 1
      %p130 = scmp.eq.s32.totalorder %s24, 1
      %p131 = scmp.ne.s32.totalorder %s126, %s128
      %p132 = scmp.eq.s32.totalorder %s24, 0
      %p133 = por %p131, %p132
      %p134 = scmp.ne.s32.totalorder %s126, %s128
      %p135 = scmp.eq.s32.totalorder %s29, 1
      %p136 = por %p134, %p135
      %p137 = scmp.ne.s32.totalorder %s128, %s129
      %p138 = scmp.eq.s32.totalorder %s29, 0
      %p139 = por %p137, %p138
      %p140 = scmp.ne.s32.totalorder %s128, %s129
      %p141 = scmp.eq.s32.totalorder %s30, 1
      %p142 = por %p140, %p141
      %p144 = scmp.ne.s32.totalorder %s129, %s143
      %p145 = scmp.eq.s32.totalorder %s30, 0
      %p146 = por %p144, %p145
      %s148 = sadd.s32 %s147, 1
      %p151 = scmp.eq.s32.totalorder %s24, 1
      %p152 = scmp.ne.s32.totalorder %s147, %s149
      %p153 = scmp.eq.s32.totalorder %s24, 0
      %p154 = por %p152, %p153
      %p155 = scmp.ne.s32.totalorder %s147, %s149
      %p156 = scmp.eq.s32.totalorder %s29, 1
      %p157 = por %p155, %p156
      %p158 = scmp.ne.s32.totalorder %s149, %s150
      %p159 = scmp.eq.s32.totalorder %s29, 0
      %p160 = por %p158, %p159
      %p161 = scmp.ne.s32.totalorder %s149, %s150
      %p162 = scmp.eq.s32.totalorder %s30, 1
      %p163 = por %p161, %p162
      %p165 = scmp.ne.s32.totalorder %s150, %s164
      %p166 = scmp.eq.s32.totalorder %s30, 0
      %p167 = por %p165, %p166
      %s169 = sadd.s32 %s168, 1
      %p172 = scmp.eq.s32.totalorder %s24, 1
      %p173 = scmp.ne.s32.totalorder %s168, %s170
      %p174 = scmp.eq.s32.totalorder %s24, 0
      %p175 = por %p173, %p174
      %p176 = scmp.ne.s32.totalorder %s168, %s170
      %p177 = scmp.eq.s32.totalorder %s29, 1
      %p178 = por %p176, %p177
      %p179 = scmp.ne.s32.totalorder %s170, %s171
      %p180 = scmp.eq.s32.totalorder %s29, 0
      %p181 = por %p179, %p180
      %p182 = scmp.ne.s32.totalorder %s170, %s171
      %p183 = scmp.eq.s32.totalorder %s30, 1
      %p184 = por %p182, %p183
      %p186 = scmp.ne.s32.totalorder %s171, %s185
      %p187 = scmp.eq.s32.totalorder %s30, 0
      %p188 = por %p186, %p187
      %s189 = ssub.s32 %s24, %s31
      %p190 = scmp.eq.s32.totalorder %s189, 0
      %s192 = sadd.s32 %s191, 1
      %s193 = scalar_select %p190, %s191, %s192
      %p196 = pneg %p190
      %p197 = scmp.eq.s32.totalorder %s24, 1
      %p198 = por %p196, %p197
      %p199 = scmp.ne.s32.totalorder %s191, %s194
      %p200 = scmp.eq.s32.totalorder %s24, 0
      %p201 = por %p199, %p200
      %p202 = scmp.ne.s32.totalorder %s191, %s194
      %p203 = scmp.eq.s32.totalorder %s29, 1
      %p204 = por %p202, %p203
      %p205 = scmp.ne.s32.totalorder %s194, %s195
      %p206 = scmp.eq.s32.totalorder %s29, 0
      %p207 = por %p205, %p206
      %p208 = scmp.ne.s32.totalorder %s194, %s195
      %p209 = scmp.eq.s32.totalorder %s30, 1
      %p210 = por %p208, %p209
      %p212 = scmp.ne.s32.totalorder %s195, %s211
      %p213 = scmp.eq.s32.totalorder %s30, 0
      %p214 = por %p212, %p213
      %p215 = scmp.le.s32.totalorder 1, %s24
      %p216 = scmp.lt.s32.totalorder %s24, 3
      %p217 = pnand %p215, %p216
      %p218 = pneg %p217
      // Predicated region
      $region9: #{tpu_custom_call.1} parent=5 // pred_check
        _
      $region10: #{tpu_custom_call.1} parent=5 // pred_check_branch
        %220 = sbr.rel (%p217) target = $region12
      $region11: #{tpu_custom_call.1} parent=5 // pred_region
        %s221 = ssub.s32 %s24, 1
        // Predicated region
        $region13: #{tpu_custom_call.1} parent=11 // pred_check
          %p222 = pneg %p97
        $region14: #{tpu_custom_call.1} parent=11 // pred_check_branch
          %224 = sbr.rel (%p222) target = $region16
        $region15: #{tpu_custom_call.1} parent=11 // pred_region
          %s226 = ssub.s32 8192, 8192
          %227 = vsyncadd [#allocation6], %s226
          %s228 = sshll.u32 [#allocation7], 4
          %s229 = int_to_ptr.vmem [resolvable:$true] %s228
          %234 = dma.hbm_to_vmem [thread:$0]  %s2, 8192, %s229, [#allocation6], 1024, 1024, 64
        $region16: #{tpu_custom_call.1} parent=11 // pred_fallthru
          _
        // Predicated region
        $region17: #{tpu_custom_call.1} parent=11 // pred_check
          %p235 = pneg %p118
        $region18: #{tpu_custom_call.1} parent=11 // pred_check_branch
          %237 = sbr.rel (%p235) target = $region20
        $region19: #{tpu_custom_call.1} parent=11 // pred_region
          %s239 = ssub.s32 128, 128
          %240 = vsyncadd [#allocation9], %s239
          %s242 = sshll.u32 [#allocation8], 4
          %s243 = int_to_ptr.vmem [resolvable:$true] %s242
          %245 = dma.hbm_to_vmem [thread:$0]  %s3, 128, %s243, [#allocation9]
        $region20: #{tpu_custom_call.1} parent=11 // pred_fallthru
          _
        // Predicated region
        $region21: #{tpu_custom_call.1} parent=11 // pred_check
          %p246 = pneg %p139
        $region22: #{tpu_custom_call.1} parent=11 // pred_check_branch
          %248 = sbr.rel (%p246) target = $region24
        $region23: #{tpu_custom_call.1} parent=11 // pred_region
          %s250 = ssub.s32 4096, 4096
          %251 = vsyncadd [#allocation9], %s250
          %s252 = sshll.u32 [#allocation10], 4
          %s253 = int_to_ptr.vmem [resolvable:$true] %s252
          %258 = dma.hbm_to_vmem [thread:$0]  %s4, 4096, %s253, [#allocation9], 1024, 1024, 64
        $region24: #{tpu_custom_call.1} parent=11 // pred_fallthru
          _
        // Predicated region
        $region25: #{tpu_custom_call.1} parent=11 // pred_check
          %p259 = pneg %p160
        $region26: #{tpu_custom_call.1} parent=11 // pred_check_branch
          %261 = sbr.rel (%p259) target = $region28
        $region27: #{tpu_custom_call.1} parent=11 // pred_region
          _
        $region28: #{tpu_custom_call.1} parent=11 // pred_fallthru
          _
        // Predicated region
        $region29: #{tpu_custom_call.1} parent=11 // pred_check
          %p262 = pneg %p181
        $region30: #{tpu_custom_call.1} parent=11 // pred_check_branch
          %264 = sbr.rel (%p262) target = $region32
        $region31: #{tpu_custom_call.1} parent=11 // pred_region
          %s266 = ssub.s32 128, 128
          %267 = vsyncadd [#allocation12], %s266
          %s269 = sshll.u32 [#allocation11], 4
          %s270 = int_to_ptr.vmem [resolvable:$true] %s269
          %272 = dma.hbm_to_vmem [thread:$0]  %s6, 128, %s270, [#allocation12]
        $region32: #{tpu_custom_call.1} parent=11 // pred_fallthru
          _
      $region12: #{tpu_custom_call.1} parent=5 // pred_fallthru
        _
      %p273 = scmp.lt.s32.totalorder %s24, 2
      // Predicated region
      $region33: #{tpu_custom_call.1} parent=5 // pred_check
        %p274 = pneg %p273
      $region34: #{tpu_custom_call.1} parent=5 // pred_check_branch
        %276 = sbr.rel (%p274) target = $region36
      $region35: #{tpu_custom_call.1} parent=5 // pred_region
        // Predicated region
        $region37: #{tpu_custom_call.1} parent=35 // pred_check
          %p277 = pneg %p44
        $region38: #{tpu_custom_call.1} parent=35 // pred_check_branch
          %279 = sbr.rel (%p277) target = $region40
        $region39: #{tpu_custom_call.1} parent=35 // pred_region
          %s280 = sand.u32 %s34, 1
          %s281 = scalar_lea.sflag [#allocation3], %s280
          %s282 = sand.u32 %s34, 1
          %s283 = smul.addr %s282, 64
          %s284 = scalar_lea.vmem [#allocation2], %s283
          %s285 = smul.u32 8, %s24
          %s287 = ssub.s32 1024, 1024
          %288 = vsyncadd %s281, %s287
          %s289 = smul.addr %s285, 128
          %s290 = scalar_lea.hbm %s0, %s289
          %s291 = sshll.u32 %s284, 4
          %s292 = int_to_ptr.vmem [resolvable:$true] %s291
          %297 = dma.hbm_to_vmem [thread:$0]  %s290, 1024, %s292, %s281, 128, 128, 8
        $region40: #{tpu_custom_call.1} parent=35 // pred_fallthru
          _
        // Predicated region
        $region41: #{tpu_custom_call.1} parent=35 // pred_check
          %p298 = pneg %p70
        $region42: #{tpu_custom_call.1} parent=35 // pred_check_branch
          %300 = sbr.rel (%p298) target = $region44
        $region43: #{tpu_custom_call.1} parent=35 // pred_region
          %s301 = sand.u32 %s24, 1
          %s302 = scalar_lea.sflag [#allocation6], %s301
          %s303 = sand.u32 %s60, 1
          %s304 = smul.addr %s303, 8
          %s305 = scalar_lea.vmem [#allocation5], %s304
          %s307 = ssub.s32 128, 128
          %308 = vsyncadd %s302, %s307
          %s309 = smul.addr %s24, 128
          %s310 = scalar_lea.hbm %s1, %s309
          %s312 = sshll.u32 %s305, 4
          %s313 = int_to_ptr.vmem [resolvable:$true] %s312
          %315 = dma.hbm_to_vmem [thread:$0]  %s310, 128, %s313, %s302
        $region44: #{tpu_custom_call.1} parent=35 // pred_fallthru
          _
      $region36: #{tpu_custom_call.1} parent=5 // pred_fallthru
        _
      %p316 = scmp.le.s32.totalorder 1, %s24
      %p317 = scmp.lt.s32.totalorder %s24, 3
      %p318 = pnand %p316, %p317
      %p319 = pneg %p318
      // Predicated region
      $region45: #{tpu_custom_call.1} parent=5 // pred_check
        _
      $region46: #{tpu_custom_call.1} parent=5 // pred_check_branch
        %321 = sbr.rel (%p318) target = $region48
      $region47: #{tpu_custom_call.1} parent=5 // pred_region
        %s322 = ssub.s32 %s24, 1
        %s323 = sand.u32 %s37, 1
        %s324 = scalar_lea.sflag [#allocation3], %s323
        %s325 = sand.u32 %s37, 1
        %s326 = smul.addr %s325, 64
        %s327 = scalar_lea.vmem [#allocation2], %s326
        // Predicated region
        $region49: #{tpu_custom_call.1} parent=47 // pred_check
          %p328 = pneg %p50
        $region50: #{tpu_custom_call.1} parent=47 // pred_check_branch
          %330 = sbr.rel (%p328) target = $region52
        $region51: #{tpu_custom_call.1} parent=47 // pred_region
          %331 = dma.done %s324, 1024
        $region52: #{tpu_custom_call.1} parent=47 // pred_fallthru
          _
        %s332 = sand.u32 %s29, 1
        %s333 = scalar_lea.sflag [#allocation6], %s332
        %s334 = sand.u32 %s63, 1
        %s335 = smul.addr %s334, 8
        %s336 = scalar_lea.vmem [#allocation5], %s335
        // Predicated region
        $region53: #{tpu_custom_call.1} parent=47 // pred_check
          %p337 = pneg %p76
        $region54: #{tpu_custom_call.1} parent=47 // pred_check_branch
          %339 = sbr.rel (%p337) target = $region56
        $region55: #{tpu_custom_call.1} parent=47 // pred_region
          %340 = dma.done %s333, 128
        $region56: #{tpu_custom_call.1} parent=47 // pred_fallthru
          _
        // Predicated region
        $region57: #{tpu_custom_call.1} parent=47 // pred_check
          %p341 = pneg %p97
        $region58: #{tpu_custom_call.1} parent=47 // pred_check_branch
          %343 = sbr.rel (%p341) target = $region60
        $region59: #{tpu_custom_call.1} parent=47 // pred_region
          %344 = dma.done [#allocation6], 8192
        $region60: #{tpu_custom_call.1} parent=47 // pred_fallthru
          _
        // Predicated region
        $region61: #{tpu_custom_call.1} parent=47 // pred_check
          %p345 = pneg %p118
        $region62: #{tpu_custom_call.1} parent=47 // pred_check_branch
          %347 = sbr.rel (%p345) target = $region64
        $region63: #{tpu_custom_call.1} parent=47 // pred_region
          %348 = dma.done [#allocation9], 128
        $region64: #{tpu_custom_call.1} parent=47 // pred_fallthru
          _
        // Predicated region
        $region65: #{tpu_custom_call.1} parent=47 // pred_check
          %p349 = pneg %p139
        $region66: #{tpu_custom_call.1} parent=47 // pred_check_branch
          %351 = sbr.rel (%p349) target = $region68
        $region67: #{tpu_custom_call.1} parent=47 // pred_region
          %352 = dma.done [#allocation9], 4096
        $region68: #{tpu_custom_call.1} parent=47 // pred_fallthru
          _
        // Predicated region
        $region69: #{tpu_custom_call.1} parent=47 // pred_check
          %p353 = pneg %p181
        $region70: #{tpu_custom_call.1} parent=47 // pred_check_branch
          %355 = sbr.rel (%p353) target = $region72
        $region71: #{tpu_custom_call.1} parent=47 // pred_region
          %356 = dma.done [#allocation12], 128
        $region72: #{tpu_custom_call.1} parent=47 // pred_fallthru
          _
        %s357 = sand.u32 %s37, 1
        %s358 = scalar_lea.sflag [#allocation3], %s357
        %s359 = sand.u32 %s37, 1
        %s360 = smul.addr %s359, 64
        %s361 = scalar_lea.vmem [#allocation2], %s360
        %p362 = pneg %p50
        %p363 = pneg %p47
        %s364 = sand.u32 %s29, 1
        %s365 = scalar_lea.sflag [#allocation6], %s364
        %s366 = sand.u32 %s63, 1
        %s367 = smul.addr %s366, 8
        %s368 = scalar_lea.vmem [#allocation5], %s367
        %p369 = pneg %p76
        %p370 = pneg %p73
        %p371 = pneg %p97
        %p372 = pneg %p94
        %p373 = pneg %p118
        %p374 = pneg %p115
        %p375 = pneg %p139
        %p376 = pneg %p136
        %p377 = pneg %p160
        %p378 = pneg %p157
        %p379 = pneg %p181
        %p380 = pneg %p178
        %p381 = pneg %p207
        %p382 = pneg %p204
        %s383 = sand.u32 %s194, 1
        %s384 = scalar_lea.sflag [#allocation4], %s383
        %s385 = sand.u32 %s194, 1
        %s386 = smul.addr %s385, 8
        %s387 = scalar_lea.vmem [#allocation13], %s386
        %s388 = smul.u32 8, %s29
        %v389 = vld [vmem:[%s327] sm:$0xff]
        %v390 = vld [vmem:[%s327 + $0x8] sm:$0xff]
        %v391 = vld [vmem:[%s327 + $0x10] sm:$0xff]
        %v392 = vld [vmem:[%s327 + $0x18] sm:$0xff]
        %v393 = vld [vmem:[%s327 + $0x20] sm:$0xff]
        %v394 = vld [vmem:[%s327 + $0x28] sm:$0xff]
        %v395 = vld [vmem:[%s327 + $0x30] sm:$0xff]
        %v396 = vld [vmem:[%s327 + $0x38] sm:$0xff]
        %v397 = vld [vmem:[#allocation7] sm:$0xff]
        %v398 = vld [vmem:[#allocation7 + $0x8] sm:$0xff]
        %v399 = vld [vmem:[#allocation7 + $0x10] sm:$0xff]
        %v400 = vld [vmem:[#allocation7 + $0x18] sm:$0xff]
        %v401 = vld [vmem:[#allocation7 + $0x20] sm:$0xff]
        %v402 = vld [vmem:[#allocation7 + $0x28] sm:$0xff]
        %v403 = vld [vmem:[#allocation7 + $0x30] sm:$0xff]
        %v404 = vld [vmem:[#allocation7 + $0x38] sm:$0xff]
        %v405 = vld [vmem:[#allocation7 + $0x40] sm:$0xff]
        %v406 = vld [vmem:[#allocation7 + $0x48] sm:$0xff]
        %v407 = vld [vmem:[#allocation7 + $0x50] sm:$0xff]
        %v408 = vld [vmem:[#allocation7 + $0x58] sm:$0xff]
        %v409 = vld [vmem:[#allocation7 + $0x60] sm:$0xff]
        %v410 = vld [vmem:[#allocation7 + $0x68] sm:$0xff]
        %v411 = vld [vmem:[#allocation7 + $0x70] sm:$0xff]
        %v412 = vld [vmem:[#allocation7 + $0x78] sm:$0xff]
        %v413 = vld [vmem:[#allocation7 + $0x80] sm:$0xff]
        %v414 = vld [vmem:[#allocation7 + $0x88] sm:$0xff]
        %v415 = vld [vmem:[#allocation7 + $0x90] sm:$0xff]
        %v416 = vld [vmem:[#allocation7 + $0x98] sm:$0xff]
        %v417 = vld [vmem:[#allocation7 + $0xa0] sm:$0xff]
        %v418 = vld [vmem:[#allocation7 + $0xa8] sm:$0xff]
        %v419 = vld [vmem:[#allocation7 + $0xb0] sm:$0xff]
        %v420 = vld [vmem:[#allocation7 + $0xb8] sm:$0xff]
        %v421 = vld [vmem:[#allocation7 + $0xc0] sm:$0xff]
        %v422 = vld [vmem:[#allocation7 + $0xc8] sm:$0xff]
        %v423 = vld [vmem:[#allocation7 + $0xd0] sm:$0xff]
        %v424 = vld [vmem:[#allocation7 + $0xd8] sm:$0xff]
        %v425 = vld [vmem:[#allocation7 + $0xe0] sm:$0xff]
        %v426 = vld [vmem:[#allocation7 + $0xe8] sm:$0xff]
        %v427 = vld [vmem:[#allocation7 + $0xf0] sm:$0xff]
        %v428 = vld [vmem:[#allocation7 + $0xf8] sm:$0xff]
        %v429 = vld [vmem:[#allocation7 + $0x100] sm:$0xff]
        %v430 = vld [vmem:[#allocation7 + $0x108] sm:$0xff]
        %v431 = vld [vmem:[#allocation7 + $0x110] sm:$0xff]
        %v432 = vld [vmem:[#allocation7 + $0x118] sm:$0xff]
        %v433 = vld [vmem:[#allocation7 + $0x120] sm:$0xff]
        %v434 = vld [vmem:[#allocation7 + $0x128] sm:$0xff]
        %v435 = vld [vmem:[#allocation7 + $0x130] sm:$0xff]
        %v436 = vld [vmem:[#allocation7 + $0x138] sm:$0xff]
        %v437 = vld [vmem:[#allocation7 + $0x140] sm:$0xff]
        %v438 = vld [vmem:[#allocation7 + $0x148] sm:$0xff]
        %v439 = vld [vmem:[#allocation7 + $0x150] sm:$0xff]
        %v440 = vld [vmem:[#allocation7 + $0x158] sm:$0xff]
        %v441 = vld [vmem:[#allocation7 + $0x160] sm:$0xff]
        %v442 = vld [vmem:[#allocation7 + $0x168] sm:$0xff]
        %v443 = vld [vmem:[#allocation7 + $0x170] sm:$0xff]
        %v444 = vld [vmem:[#allocation7 + $0x178] sm:$0xff]
        %v445 = vld [vmem:[#allocation7 + $0x180] sm:$0xff]
        %v446 = vld [vmem:[#allocation7 + $0x188] sm:$0xff]
        %v447 = vld [vmem:[#allocation7 + $0x190] sm:$0xff]
        %v448 = vld [vmem:[#allocation7 + $0x198] sm:$0xff]
        %v449 = vld [vmem:[#allocation7 + $0x1a0] sm:$0xff]
        %v450 = vld [vmem:[#allocation7 + $0x1a8] sm:$0xff]
        %v451 = vld [vmem:[#allocation7 + $0x1b0] sm:$0xff]
        %v452 = vld [vmem:[#allocation7 + $0x1b8] sm:$0xff]
        %v453 = vld [vmem:[#allocation7 + $0x1c0] sm:$0xff]
        %v454 = vld [vmem:[#allocation7 + $0x1c8] sm:$0xff]
        %v455 = vld [vmem:[#allocation7 + $0x1d0] sm:$0xff]
        %v456 = vld [vmem:[#allocation7 + $0x1d8] sm:$0xff]
        %v457 = vld [vmem:[#allocation7 + $0x1e0] sm:$0xff]
        %v458 = vld [vmem:[#allocation7 + $0x1e8] sm:$0xff]
        %v459 = vld [vmem:[#allocation7 + $0x1f0] sm:$0xff]
        %v460 = vld [vmem:[#allocation7 + $0x1f8] sm:$0xff]
        %v461 = vld [vmem:[#allocation8] sm:$0xff]
        %v463 = vlaneseq
        %v464 = vshrl.u32 %v463, 7
        %v465 = vsub.s32 0, %v464
        %v466 = vrot.slane %v461, %v465
        %v467 = vlaneseq
        %v468 = vshrl.u32 %v467, 7
        %v469 = vsub.s32 1, %v468
        %v470 = vrot.slane %v461, %v469
        %v471 = vlaneseq
        %v472 = vshrl.u32 %v471, 7
        %v473 = vsub.s32 2, %v472
        %v474 = vrot.slane %v461, %v473
        %v475 = vlaneseq
        %v476 = vshrl.u32 %v475, 7
        %v477 = vsub.s32 3, %v476
        %v478 = vrot.slane %v461, %v477
        %v479 = vlaneseq
        %v480 = vshrl.u32 %v479, 7
        %v481 = vsub.s32 4, %v480
        %v482 = vrot.slane %v461, %v481
        %v483 = vlaneseq
        %v484 = vshrl.u32 %v483, 7
        %v485 = vsub.s32 5, %v484
        %v486 = vrot.slane %v461, %v485
        %v487 = vlaneseq
        %v488 = vshrl.u32 %v487, 7
        %v489 = vsub.s32 6, %v488
        %v490 = vrot.slane %v461, %v489
        %v491 = vlaneseq
        %v492 = vshrl.u32 %v491, 7
        %v493 = vsub.s32 7, %v492
        %v494 = vrot.slane %v461, %v493
        %vm503 = vcmask 523264
        %v505 = vsel %vm503, %v389, 0
        %v508 = vsel %vm503, %v390, 0
        %v511 = vsel %vm503, %v391, 0
        %v514 = vsel %vm503, %v392, 0
        %v517 = vsel %vm503, %v393, 0
        %v520 = vsel %vm503, %v394, 0
        %v523 = vsel %vm503, %v395, 0
        %v526 = vsel %vm503, %v396, 0
        %528 = vmatprep.subr.mxu0 0.0
        %529 = vmatpush1.msra.mxu0 0.0
        %530 = vmatprep.subr.mxu0 0.0
        %531 = vmatpush1.msra.mxu0 0.0
        %532 = vmatprep.subr.mxu0 0.0
        %533 = vmatpush1.msra.mxu0 0.0
        %534 = vmatprep.subr.mxu0 0.0
        %535 = vmatpush1.msra.mxu0 0.0
        %536 = vmatprep.subr.mxu0 0.0
        %537 = vmatpush1.msra.mxu0 0.0
        %538 = vmatprep.subr.mxu0 0.0
        %539 = vmatpush1.msra.mxu0 0.0
        %540 = vmatprep.subr.mxu0 0.0
        %541 = vmatpush1.msra.mxu0 0.0
        %542 = vmatprep.subr.mxu0 0.0
        %543 = vmatpush1.msra.mxu0 0.0
        %544 = vmatprep.subr.mxu0 %v454
        %545 = vmatpush1.msra.mxu0 %v453
        %546 = vmatprep.subr.mxu0 %v446
        %547 = vmatpush1.msra.mxu0 %v445
        %548 = vmatprep.subr.mxu0 %v438
        %549 = vmatpush1.msra.mxu0 %v437
        %550 = vmatprep.subr.mxu0 %v430
        %551 = vmatpush1.msra.mxu0 %v429
        %552 = vmatprep.subr.mxu0 %v422
        %553 = vmatpush1.msra.mxu0 %v421
        %554 = vmatprep.subr.mxu0 %v414
        %555 = vmatpush1.msra.mxu0 %v413
        %556 = vmatprep.subr.mxu0 %v406
        %557 = vmatpush1.msra.mxu0 %v405
        %558 = vmatprep.subr.mxu0 %v398
        %559 = vmatpush1.msra.mxu0 %v397
        %560 = vmatprep.subr.mxu0 0.0
        %561 = vmatpush2.msra.mxu0 0.0
        %562 = vmatprep.subr.mxu0 0.0
        %563 = vmatpush2.msra.mxu0 0.0
        %564 = vmatprep.subr.mxu0 0.0
        %565 = vmatpush2.msra.mxu0 0.0
        %566 = vmatprep.subr.mxu0 0.0
        %567 = vmatpush2.msra.mxu0 0.0
        %568 = vmatprep.subr.mxu0 0.0
        %569 = vmatpush2.msra.mxu0 0.0
        %570 = vmatprep.subr.mxu0 0.0
        %571 = vmatpush2.msra.mxu0 0.0
        %572 = vmatprep.subr.mxu0 0.0
        %573 = vmatpush2.msra.mxu0 0.0
        %574 = vmatprep.subr.mxu0 0.0
        %575 = vmatpush2.msra.mxu0 0.0
        %576 = vmatprep.subr.mxu0 0.0
        %577 = vmatpush2.msra.mxu0 0.0
        %578 = vmatprep.subr.mxu0 0.0
        %579 = vmatpush2.msra.mxu0 0.0
        %580 = vmatprep.subr.mxu0 0.0
        %581 = vmatpush2.msra.mxu0 0.0
        %582 = vmatprep.subr.mxu0 0.0
        %583 = vmatpush2.msra.mxu0 0.0
        %584 = vmatprep.subr.mxu0 0.0
        %585 = vmatpush2.msra.mxu0 0.0
        %586 = vmatprep.subr.mxu0 0.0
        %587 = vmatpush2.msra.mxu0 0.0
        %588 = vmatprep.subr.mxu0 0.0
        %589 = vmatpush2.msra.mxu0 0.0
        %590 = vmatprep.subr.mxu0 0.0
        %591 = vmatpush2.msra.mxu0 0.0
        %592 = vmatprep.mubr.f32.mxu0 0.0
        %593 = vmatmul.mubr.f32.gmra.mxu0 %v505
        %v594 = vpop.f32.mrf.mxu0
        %v595 = vadd.f32 %v466, %v594
        %v596 = vpop.f32.mrf.mxu0
        %v597 = vadd.f32 %v470, %v596
        %598 = vmatprep.mubr.f32.mxu0 0.0
        %599 = vmatmul.mubr.f32.gmra.mxu0 %v508
        %v600 = vpop.f32.mrf.mxu0
        %v601 = vadd.f32 %v466, %v600
        %v602 = vpop.f32.mrf.mxu0
        %v603 = vadd.f32 %v470, %v602
        %604 = vmatprep.mubr.f32.mxu0 0.0
        %605 = vmatmul.mubr.f32.gmra.mxu0 %v511
        %v606 = vpop.f32.mrf.mxu0
        %v607 = vadd.f32 %v466, %v606
        %v608 = vpop.f32.mrf.mxu0
        %v609 = vadd.f32 %v470, %v608
        %610 = vmatprep.mubr.f32.mxu0 0.0
        %611 = vmatmul.mubr.f32.gmra.mxu0 %v514
        %v612 = vpop.f32.mrf.mxu0
        %v613 = vadd.f32 %v466, %v612
        %v614 = vpop.f32.mrf.mxu0
        %v615 = vadd.f32 %v470, %v614
        %616 = vmatprep.mubr.f32.mxu0 0.0
        %617 = vmatmul.mubr.f32.gmra.mxu0 %v517
        %v618 = vpop.f32.mrf.mxu0
        %v619 = vadd.f32 %v466, %v618
        %v620 = vpop.f32.mrf.mxu0
        %v621 = vadd.f32 %v470, %v620
        %622 = vmatprep.mubr.f32.mxu0 0.0
        %623 = vmatmul.mubr.f32.gmra.mxu0 %v520
        %v624 = vpop.f32.mrf.mxu0
        %v625 = vadd.f32 %v466, %v624
        %v626 = vpop.f32.mrf.mxu0
        %v627 = vadd.f32 %v470, %v626
        %628 = vmatprep.mubr.f32.mxu0 0.0
        %629 = vmatmul.mubr.f32.gmra.mxu0 %v523
        %v630 = vpop.f32.mrf.mxu0
        %v631 = vadd.f32 %v466, %v630
        %v632 = vpop.f32.mrf.mxu0
        %v633 = vadd.f32 %v470, %v632
        %634 = vmatprep.mubr.f32.mxu0 0.0
        %635 = vmatmul.mubr.f32.gmra.mxu0 %v526
        %v636 = vpop.f32.mrf.mxu0
        %v637 = vadd.f32 %v466, %v636
        %v638 = vpop.f32.mrf.mxu0
        %v639 = vadd.f32 %v470, %v638
        %640 = vdwg.mxu0
        %641 = vmatprep.subr.mxu0 0.0
        %642 = vmatpush1.msra.mxu0 0.0
        %643 = vmatprep.subr.mxu0 0.0
        %644 = vmatpush1.msra.mxu0 0.0
        %645 = vmatprep.subr.mxu0 0.0
        %646 = vmatpush1.msra.mxu0 0.0
        %647 = vmatprep.subr.mxu0 0.0
        %648 = vmatpush1.msra.mxu0 0.0
        %649 = vmatprep.subr.mxu0 0.0
        %650 = vmatpush1.msra.mxu0 0.0
        %651 = vmatprep.subr.mxu0 0.0
        %652 = vmatpush1.msra.mxu0 0.0
        %653 = vmatprep.subr.mxu0 0.0
        %654 = vmatpush1.msra.mxu0 0.0
        %655 = vmatprep.subr.mxu0 0.0
        %656 = vmatpush1.msra.mxu0 0.0
        %657 = vmatprep.subr.mxu0 %v456
        %658 = vmatpush1.msra.mxu0 %v455
        %659 = vmatprep.subr.mxu0 %v448
        %660 = vmatpush1.msra.mxu0 %v447
        %661 = vmatprep.subr.mxu0 %v440
        %662 = vmatpush1.msra.mxu0 %v439
        %663 = vmatprep.subr.mxu0 %v432
        %664 = vmatpush1.msra.mxu0 %v431
        %665 = vmatprep.subr.mxu0 %v424
        %666 = vmatpush1.msra.mxu0 %v423
        %667 = vmatprep.subr.mxu0 %v416
        %668 = vmatpush1.msra.mxu0 %v415
        %669 = vmatprep.subr.mxu0 %v408
        %670 = vmatpush1.msra.mxu0 %v407
        %671 = vmatprep.subr.mxu0 %v400
        %672 = vmatpush1.msra.mxu0 %v399
        %673 = vmatprep.subr.mxu0 0.0
        %674 = vmatpush2.msra.mxu0 0.0
        %675 = vmatprep.subr.mxu0 0.0
        %676 = vmatpush2.msra.mxu0 0.0
        %677 = vmatprep.subr.mxu0 0.0
        %678 = vmatpush2.msra.mxu0 0.0
        %679 = vmatprep.subr.mxu0 0.0
        %680 = vmatpush2.msra.mxu0 0.0
        %681 = vmatprep.subr.mxu0 0.0
        %682 = vmatpush2.msra.mxu0 0.0
        %683 = vmatprep.subr.mxu0 0.0
        %684 = vmatpush2.msra.mxu0 0.0
        %685 = vmatprep.subr.mxu0 0.0
        %686 = vmatpush2.msra.mxu0 0.0
        %687 = vmatprep.subr.mxu0 0.0
        %688 = vmatpush2.msra.mxu0 0.0
        %689 = vmatprep.subr.mxu0 0.0
        %690 = vmatpush2.msra.mxu0 0.0
        %691 = vmatprep.subr.mxu0 0.0
        %692 = vmatpush2.msra.mxu0 0.0
        %693 = vmatprep.subr.mxu0 0.0
        %694 = vmatpush2.msra.mxu0 0.0
        %695 = vmatprep.subr.mxu0 0.0
        %696 = vmatpush2.msra.mxu0 0.0
        %697 = vmatprep.subr.mxu0 0.0
        %698 = vmatpush2.msra.mxu0 0.0
        %699 = vmatprep.subr.mxu0 0.0
        %700 = vmatpush2.msra.mxu0 0.0
        %701 = vmatprep.subr.mxu0 0.0
        %702 = vmatpush2.msra.mxu0 0.0
        %703 = vmatprep.subr.mxu0 0.0
        %704 = vmatpush2.msra.mxu0 0.0
        %705 = vmatprep.mubr.f32.mxu0 0.0
        %706 = vmatmul.mubr.f32.gmra.mxu0 %v505
        %v707 = vpop.f32.mrf.mxu0
        %v708 = vadd.f32 %v474, %v707
        %v709 = vpop.f32.mrf.mxu0
        %v710 = vadd.f32 %v478, %v709
        %711 = vmatprep.mubr.f32.mxu0 0.0
        %712 = vmatmul.mubr.f32.gmra.mxu0 %v508
        %v713 = vpop.f32.mrf.mxu0
        %v714 = vadd.f32 %v474, %v713
        %v715 = vpop.f32.mrf.mxu0
        %v716 = vadd.f32 %v478, %v715
        %717 = vmatprep.mubr.f32.mxu0 0.0
        %718 = vmatmul.mubr.f32.gmra.mxu0 %v511
        %v719 = vpop.f32.mrf.mxu0
        %v720 = vadd.f32 %v474, %v719
        %v721 = vpop.f32.mrf.mxu0
        %v722 = vadd.f32 %v478, %v721
        %723 = vmatprep.mubr.f32.mxu0 0.0
        %724 = vmatmul.mubr.f32.gmra.mxu0 %v514
        %v725 = vpop.f32.mrf.mxu0
        %v726 = vadd.f32 %v474, %v725
        %v727 = vpop.f32.mrf.mxu0
        %v728 = vadd.f32 %v478, %v727
        %729 = vmatprep.mubr.f32.mxu0 0.0
        %730 = vmatmul.mubr.f32.gmra.mxu0 %v517
        %v731 = vpop.f32.mrf.mxu0
        %v732 = vadd.f32 %v474, %v731
        %v733 = vpop.f32.mrf.mxu0
        %v734 = vadd.f32 %v478, %v733
        %735 = vmatprep.mubr.f32.mxu0 0.0
        %736 = vmatmul.mubr.f32.gmra.mxu0 %v520
        %v737 = vpop.f32.mrf.mxu0
        %v738 = vadd.f32 %v474, %v737
        %v739 = vpop.f32.mrf.mxu0
        %v740 = vadd.f32 %v478, %v739
        %741 = vmatprep.mubr.f32.mxu0 0.0
        %742 = vmatmul.mubr.f32.gmra.mxu0 %v523
        %v743 = vpop.f32.mrf.mxu0
        %v744 = vadd.f32 %v474, %v743
        %v745 = vpop.f32.mrf.mxu0
        %v746 = vadd.f32 %v478, %v745
        %747 = vmatprep.mubr.f32.mxu0 0.0
        %748 = vmatmul.mubr.f32.gmra.mxu0 %v526
        %v749 = vpop.f32.mrf.mxu0
        %v750 = vadd.f32 %v474, %v749
        %v751 = vpop.f32.mrf.mxu0
        %v752 = vadd.f32 %v478, %v751
        %753 = vdwg.mxu0
        %754 = vmatprep.subr.mxu0 0.0
        %755 = vmatpush1.msra.mxu0 0.0
        %756 = vmatprep.subr.mxu0 0.0
        %757 = vmatpush1.msra.mxu0 0.0
        %758 = vmatprep.subr.mxu0 0.0
        %759 = vmatpush1.msra.mxu0 0.0
        %760 = vmatprep.subr.mxu0 0.0
        %761 = vmatpush1.msra.mxu0 0.0
        %762 = vmatprep.subr.mxu0 0.0
        %763 = vmatpush1.msra.mxu0 0.0
        %764 = vmatprep.subr.mxu0 0.0
        %765 = vmatpush1.msra.mxu0 0.0
        %766 = vmatprep.subr.mxu0 0.0
        %767 = vmatpush1.msra.mxu0 0.0
        %768 = vmatprep.subr.mxu0 0.0
        %769 = vmatpush1.msra.mxu0 0.0
        %770 = vmatprep.subr.mxu0 %v458
        %771 = vmatpush1.msra.mxu0 %v457
        %772 = vmatprep.subr.mxu0 %v450
        %773 = vmatpush1.msra.mxu0 %v449
        %774 = vmatprep.subr.mxu0 %v442
        %775 = vmatpush1.msra.mxu0 %v441
        %776 = vmatprep.subr.mxu0 %v434
        %777 = vmatpush1.msra.mxu0 %v433
        %778 = vmatprep.subr.mxu0 %v426
        %779 = vmatpush1.msra.mxu0 %v425
        %780 = vmatprep.subr.mxu0 %v418
        %781 = vmatpush1.msra.mxu0 %v417
        %782 = vmatprep.subr.mxu0 %v410
        %783 = vmatpush1.msra.mxu0 %v409
        %784 = vmatprep.subr.mxu0 %v402
        %785 = vmatpush1.msra.mxu0 %v401
        %786 = vmatprep.subr.mxu0 0.0
        %787 = vmatpush2.msra.mxu0 0.0
        %788 = vmatprep.subr.mxu0 0.0
        %789 = vmatpush2.msra.mxu0 0.0
        %790 = vmatprep.subr.mxu0 0.0
        %791 = vmatpush2.msra.mxu0 0.0
        %792 = vmatprep.subr.mxu0 0.0
        %793 = vmatpush2.msra.mxu0 0.0
        %794 = vmatprep.subr.mxu0 0.0
        %795 = vmatpush2.msra.mxu0 0.0
        %796 = vmatprep.subr.mxu0 0.0
        %797 = vmatpush2.msra.mxu0 0.0
        %798 = vmatprep.subr.mxu0 0.0
        %799 = vmatpush2.msra.mxu0 0.0
        %800 = vmatprep.subr.mxu0 0.0
        %801 = vmatpush2.msra.mxu0 0.0
        %802 = vmatprep.subr.mxu0 0.0
        %803 = vmatpush2.msra.mxu0 0.0
        %804 = vmatprep.subr.mxu0 0.0
        %805 = vmatpush2.msra.mxu0 0.0
        %806 = vmatprep.subr.mxu0 0.0
        %807 = vmatpush2.msra.mxu0 0.0
        %808 = vmatprep.subr.mxu0 0.0
        %809 = vmatpush2.msra.mxu0 0.0
        %810 = vmatprep.subr.mxu0 0.0
        %811 = vmatpush2.msra.mxu0 0.0
        %812 = vmatprep.subr.mxu0 0.0
        %813 = vmatpush2.msra.mxu0 0.0
        %814 = vmatprep.subr.mxu0 0.0
        %815 = vmatpush2.msra.mxu0 0.0
        %816 = vmatprep.subr.mxu0 0.0
        %817 = vmatpush2.msra.mxu0 0.0
        %818 = vmatprep.mubr.f32.mxu0 0.0
        %819 = vmatmul.mubr.f32.gmra.mxu0 %v505
        %v820 = vpop.f32.mrf.mxu0
        %v821 = vadd.f32 %v482, %v820
        %v822 = vpop.f32.mrf.mxu0
        %v823 = vadd.f32 %v486, %v822
        %824 = vmatprep.mubr.f32.mxu0 0.0
        %825 = vmatmul.mubr.f32.gmra.mxu0 %v508
        %v826 = vpop.f32.mrf.mxu0
        %v827 = vadd.f32 %v482, %v826
        %v828 = vpop.f32.mrf.mxu0
        %v829 = vadd.f32 %v486, %v828
        %830 = vmatprep.mubr.f32.mxu0 0.0
        %831 = vmatmul.mubr.f32.gmra.mxu0 %v511
        %v832 = vpop.f32.mrf.mxu0
        %v833 = vadd.f32 %v482, %v832
        %v834 = vpop.f32.mrf.mxu0
        %v835 = vadd.f32 %v486, %v834
        %836 = vmatprep.mubr.f32.mxu0 0.0
        %837 = vmatmul.mubr.f32.gmra.mxu0 %v514
        %v838 = vpop.f32.mrf.mxu0
        %v839 = vadd.f32 %v482, %v838
        %v840 = vpop.f32.mrf.mxu0
        %v841 = vadd.f32 %v486, %v840
        %842 = vmatprep.mubr.f32.mxu0 0.0
        %843 = vmatmul.mubr.f32.gmra.mxu0 %v517
        %v844 = vpop.f32.mrf.mxu0
        %v845 = vadd.f32 %v482, %v844
        %v846 = vpop.f32.mrf.mxu0
        %v847 = vadd.f32 %v486, %v846
        %848 = vmatprep.mubr.f32.mxu0 0.0
        %849 = vmatmul.mubr.f32.gmra.mxu0 %v520
        %v850 = vpop.f32.mrf.mxu0
        %v851 = vadd.f32 %v482, %v850
        %v852 = vpop.f32.mrf.mxu0
        %v853 = vadd.f32 %v486, %v852
        %854 = vmatprep.mubr.f32.mxu0 0.0
        %855 = vmatmul.mubr.f32.gmra.mxu0 %v523
        %v856 = vpop.f32.mrf.mxu0
        %v857 = vadd.f32 %v482, %v856
        %v858 = vpop.f32.mrf.mxu0
        %v859 = vadd.f32 %v486, %v858
        %860 = vmatprep.mubr.f32.mxu0 0.0
        %861 = vmatmul.mubr.f32.gmra.mxu0 %v526
        %v862 = vpop.f32.mrf.mxu0
        %v863 = vadd.f32 %v482, %v862
        %v864 = vpop.f32.mrf.mxu0
        %v865 = vadd.f32 %v486, %v864
        %866 = vdwg.mxu0
        %867 = vmatprep.subr.mxu0 0.0
        %868 = vmatpush1.msra.mxu0 0.0
        %869 = vmatprep.subr.mxu0 0.0
        %870 = vmatpush1.msra.mxu0 0.0
        %871 = vmatprep.subr.mxu0 0.0
        %872 = vmatpush1.msra.mxu0 0.0
        %873 = vmatprep.subr.mxu0 0.0
        %874 = vmatpush1.msra.mxu0 0.0
        %875 = vmatprep.subr.mxu0 0.0
        %876 = vmatpush1.msra.mxu0 0.0
        %877 = vmatprep.subr.mxu0 0.0
        %878 = vmatpush1.msra.mxu0 0.0
        %879 = vmatprep.subr.mxu0 0.0
        %880 = vmatpush1.msra.mxu0 0.0
        %881 = vmatprep.subr.mxu0 0.0
        %882 = vmatpush1.msra.mxu0 0.0
        %883 = vmatprep.subr.mxu0 %v460
        %884 = vmatpush1.msra.mxu0 %v459
        %885 = vmatprep.subr.mxu0 %v452
        %886 = vmatpush1.msra.mxu0 %v451
        %887 = vmatprep.subr.mxu0 %v444
        %888 = vmatpush1.msra.mxu0 %v443
        %889 = vmatprep.subr.mxu0 %v436
        %890 = vmatpush1.msra.mxu0 %v435
        %891 = vmatprep.subr.mxu0 %v428
        %892 = vmatpush1.msra.mxu0 %v427
        %893 = vmatprep.subr.mxu0 %v420
        %894 = vmatpush1.msra.mxu0 %v419
        %895 = vmatprep.subr.mxu0 %v412
        %896 = vmatpush1.msra.mxu0 %v411
        %897 = vmatprep.subr.mxu0 %v404
        %898 = vmatpush1.msra.mxu0 %v403
        %899 = vmatprep.subr.mxu0 0.0
        %900 = vmatpush2.msra.mxu0 0.0
        %901 = vmatprep.subr.mxu0 0.0
        %902 = vmatpush2.msra.mxu0 0.0
        %903 = vmatprep.subr.mxu0 0.0
        %904 = vmatpush2.msra.mxu0 0.0
        %905 = vmatprep.subr.mxu0 0.0
        %906 = vmatpush2.msra.mxu0 0.0
        %907 = vmatprep.subr.mxu0 0.0
        %908 = vmatpush2.msra.mxu0 0.0
        %909 = vmatprep.subr.mxu0 0.0
        %910 = vmatpush2.msra.mxu0 0.0
        %911 = vmatprep.subr.mxu0 0.0
        %912 = vmatpush2.msra.mxu0 0.0
        %913 = vmatprep.subr.mxu0 0.0
        %914 = vmatpush2.msra.mxu0 0.0
        %915 = vmatprep.subr.mxu0 0.0
        %916 = vmatpush2.msra.mxu0 0.0
        %917 = vmatprep.subr.mxu0 0.0
        %918 = vmatpush2.msra.mxu0 0.0
        %919 = vmatprep.subr.mxu0 0.0
        %920 = vmatpush2.msra.mxu0 0.0
        %921 = vmatprep.subr.mxu0 0.0
        %922 = vmatpush2.msra.mxu0 0.0
        %923 = vmatprep.subr.mxu0 0.0
        %924 = vmatpush2.msra.mxu0 0.0
        %925 = vmatprep.subr.mxu0 0.0
        %926 = vmatpush2.msra.mxu0 0.0
        %927 = vmatprep.subr.mxu0 0.0
        %928 = vmatpush2.msra.mxu0 0.0
        %929 = vmatprep.subr.mxu0 0.0
        %930 = vmatpush2.msra.mxu0 0.0
        %931 = vmatprep.mubr.f32.mxu0 0.0
        %932 = vmatmul.mubr.f32.gmra.mxu0 %v505
        %v933 = vpop.f32.mrf.mxu0
        %v934 = vadd.f32 %v490, %v933
        %v935 = vpop.f32.mrf.mxu0
        %v936 = vadd.f32 %v494, %v935
        %937 = vmatprep.mubr.f32.mxu0 0.0
        %938 = vmatmul.mubr.f32.gmra.mxu0 %v508
        %v939 = vpop.f32.mrf.mxu0
        %v940 = vadd.f32 %v490, %v939
        %v941 = vpop.f32.mrf.mxu0
        %v942 = vadd.f32 %v494, %v941
        %943 = vmatprep.mubr.f32.mxu0 0.0
        %944 = vmatmul.mubr.f32.gmra.mxu0 %v511
        %v945 = vpop.f32.mrf.mxu0
        %v946 = vadd.f32 %v490, %v945
        %v947 = vpop.f32.mrf.mxu0
        %v948 = vadd.f32 %v494, %v947
        %949 = vmatprep.mubr.f32.mxu0 0.0
        %950 = vmatmul.mubr.f32.gmra.mxu0 %v514
        %v951 = vpop.f32.mrf.mxu0
        %v952 = vadd.f32 %v490, %v951
        %v953 = vpop.f32.mrf.mxu0
        %v954 = vadd.f32 %v494, %v953
        %955 = vmatprep.mubr.f32.mxu0 0.0
        %956 = vmatmul.mubr.f32.gmra.mxu0 %v517
        %v957 = vpop.f32.mrf.mxu0
        %v958 = vadd.f32 %v490, %v957
        %v959 = vpop.f32.mrf.mxu0
        %v960 = vadd.f32 %v494, %v959
        %961 = vmatprep.mubr.f32.mxu0 0.0
        %962 = vmatmul.mubr.f32.gmra.mxu0 %v520
        %v963 = vpop.f32.mrf.mxu0
        %v964 = vadd.f32 %v490, %v963
        %v965 = vpop.f32.mrf.mxu0
        %v966 = vadd.f32 %v494, %v965
        %967 = vmatprep.mubr.f32.mxu0 0.0
        %968 = vmatmul.mubr.f32.gmra.mxu0 %v523
        %v969 = vpop.f32.mrf.mxu0
        %v970 = vadd.f32 %v490, %v969
        %v971 = vpop.f32.mrf.mxu0
        %v972 = vadd.f32 %v494, %v971
        %973 = vmatprep.mubr.f32.mxu0 0.0
        %974 = vmatmul.mubr.f32.gmra.mxu0 %v526
        %v975 = vpop.f32.mrf.mxu0
        %v976 = vadd.f32 %v490, %v975
        %v977 = vpop.f32.mrf.mxu0
        %v978 = vadd.f32 %v494, %v977
        %979 = vdwg.mxu0
        %v980 = vmax.f32 %v595, 0.0
        %v981 = vmax.f32 %v597, 0.0
        %v982 = vmax.f32 %v708, 0.0
        %v983 = vmax.f32 %v710, 0.0
        %v984 = vmax.f32 %v821, 0.0
        %v985 = vmax.f32 %v823, 0.0
        %v986 = vmax.f32 %v934, 0.0
        %v987 = vmax.f32 %v936, 0.0
        %v988 = vmax.f32 %v601, 0.0
        %v989 = vmax.f32 %v603, 0.0
        %v990 = vmax.f32 %v714, 0.0
        %v991 = vmax.f32 %v716, 0.0
        %v992 = vmax.f32 %v827, 0.0
        %v993 = vmax.f32 %v829, 0.0
        %v994 = vmax.f32 %v940, 0.0
        %v995 = vmax.f32 %v942, 0.0
        %v996 = vmax.f32 %v607, 0.0
        %v997 = vmax.f32 %v609, 0.0
        %v998 = vmax.f32 %v720, 0.0
        %v999 = vmax.f32 %v722, 0.0
        %v1000 = vmax.f32 %v833, 0.0
        %v1001 = vmax.f32 %v835, 0.0
        %v1002 = vmax.f32 %v946, 0.0
        %v1003 = vmax.f32 %v948, 0.0
        %v1004 = vmax.f32 %v613, 0.0
        %v1005 = vmax.f32 %v615, 0.0
        %v1006 = vmax.f32 %v726, 0.0
        %v1007 = vmax.f32 %v728, 0.0
        %v1008 = vmax.f32 %v839, 0.0
        %v1009 = vmax.f32 %v841, 0.0
        %v1010 = vmax.f32 %v952, 0.0
        %v1011 = vmax.f32 %v954, 0.0
        %v1012 = vmax.f32 %v619, 0.0
        %v1013 = vmax.f32 %v621, 0.0
        %v1014 = vmax.f32 %v732, 0.0
        %v1015 = vmax.f32 %v734, 0.0
        %v1016 = vmax.f32 %v845, 0.0
        %v1017 = vmax.f32 %v847, 0.0
        %v1018 = vmax.f32 %v958, 0.0
        %v1019 = vmax.f32 %v960, 0.0
        %v1020 = vmax.f32 %v625, 0.0
        %v1021 = vmax.f32 %v627, 0.0
        %v1022 = vmax.f32 %v738, 0.0
        %v1023 = vmax.f32 %v740, 0.0
        %v1024 = vmax.f32 %v851, 0.0
        %v1025 = vmax.f32 %v853, 0.0
        %v1026 = vmax.f32 %v964, 0.0
        %v1027 = vmax.f32 %v966, 0.0
        %v1028 = vmax.f32 %v631, 0.0
        %v1029 = vmax.f32 %v633, 0.0
        %v1030 = vmax.f32 %v744, 0.0
        %v1031 = vmax.f32 %v746, 0.0
        %v1032 = vmax.f32 %v857, 0.0
        %v1033 = vmax.f32 %v859, 0.0
        %v1034 = vmax.f32 %v970, 0.0
        %v1035 = vmax.f32 %v972, 0.0
        %v1036 = vmax.f32 %v637, 0.0
        %v1037 = vmax.f32 %v639, 0.0
        %v1038 = vmax.f32 %v750, 0.0
        %v1039 = vmax.f32 %v752, 0.0
        %v1040 = vmax.f32 %v863, 0.0
        %v1041 = vmax.f32 %v865, 0.0
        %v1042 = vmax.f32 %v976, 0.0
        %v1043 = vmax.f32 %v978, 0.0
        %v1044 = vld [vmem:[%s336] sm:$0xff]
        %v1045 = vld [vmem:[#allocation10] sm:$0xff]
        %v1046 = vld [vmem:[#allocation10 + $0x8] sm:$0xff]
        %v1047 = vld [vmem:[#allocation10 + $0x10] sm:$0xff]
        %v1048 = vld [vmem:[#allocation10 + $0x18] sm:$0xff]
        %v1049 = vld [vmem:[#allocation10 + $0x20] sm:$0xff]
        %v1050 = vld [vmem:[#allocation10 + $0x28] sm:$0xff]
        %v1051 = vld [vmem:[#allocation10 + $0x30] sm:$0xff]
        %v1052 = vld [vmem:[#allocation10 + $0x38] sm:$0xff]
        %v1053 = vld [vmem:[#allocation10 + $0x40] sm:$0xff]
        %v1054 = vld [vmem:[#allocation10 + $0x48] sm:$0xff]
        %v1055 = vld [vmem:[#allocation10 + $0x50] sm:$0xff]
        %v1056 = vld [vmem:[#allocation10 + $0x58] sm:$0xff]
        %v1057 = vld [vmem:[#allocation10 + $0x60] sm:$0xff]
        %v1058 = vld [vmem:[#allocation10 + $0x68] sm:$0xff]
        %v1059 = vld [vmem:[#allocation10 + $0x70] sm:$0xff]
        %v1060 = vld [vmem:[#allocation10 + $0x78] sm:$0xff]
        %v1061 = vld [vmem:[#allocation10 + $0x80] sm:$0xff]
        %v1062 = vld [vmem:[#allocation10 + $0x88] sm:$0xff]
        %v1063 = vld [vmem:[#allocation10 + $0x90] sm:$0xff]
        %v1064 = vld [vmem:[#allocation10 + $0x98] sm:$0xff]
        %v1065 = vld [vmem:[#allocation10 + $0xa0] sm:$0xff]
        %v1066 = vld [vmem:[#allocation10 + $0xa8] sm:$0xff]
        %v1067 = vld [vmem:[#allocation10 + $0xb0] sm:$0xff]
        %v1068 = vld [vmem:[#allocation10 + $0xb8] sm:$0xff]
        %v1069 = vld [vmem:[#allocation10 + $0xc0] sm:$0xff]
        %v1070 = vld [vmem:[#allocation10 + $0xc8] sm:$0xff]
        %v1071 = vld [vmem:[#allocation10 + $0xd0] sm:$0xff]
        %v1072 = vld [vmem:[#allocation10 + $0xd8] sm:$0xff]
        %v1073 = vld [vmem:[#allocation10 + $0xe0] sm:$0xff]
        %v1074 = vld [vmem:[#allocation10 + $0xe8] sm:$0xff]
        %v1075 = vld [vmem:[#allocation10 + $0xf0] sm:$0xff]
        %v1076 = vld [vmem:[#allocation10 + $0xf8] sm:$0xff]
        %v1077 = vld [vmem:[%s5] sm:$0xff]
        %v1079 = vlaneseq
        %v1080 = vshrl.u32 %v1079, 7
        %v1081 = vsub.s32 0, %v1080
        %v1082 = vrot.slane %v1077, %v1081
        %v1083 = vlaneseq
        %v1084 = vshrl.u32 %v1083, 7
        %v1085 = vsub.s32 1, %v1084
        %v1086 = vrot.slane %v1077, %v1085
        %v1087 = vlaneseq
        %v1088 = vshrl.u32 %v1087, 7
        %v1089 = vsub.s32 2, %v1088
        %v1090 = vrot.slane %v1077, %v1089
        %v1091 = vlaneseq
        %v1092 = vshrl.u32 %v1091, 7
        %v1093 = vsub.s32 3, %v1092
        %v1094 = vrot.slane %v1077, %v1093
        %v1095 = vlaneseq
        %v1096 = vshrl.u32 %v1095, 7
        %v1097 = vsub.s32 4, %v1096
        %v1098 = vrot.slane %v1077, %v1097
        %v1099 = vlaneseq
        %v1100 = vshrl.u32 %v1099, 7
        %v1101 = vsub.s32 5, %v1100
        %v1102 = vrot.slane %v1077, %v1101
        %v1103 = vlaneseq
        %v1104 = vshrl.u32 %v1103, 7
        %v1105 = vsub.s32 6, %v1104
        %v1106 = vrot.slane %v1077, %v1105
        %v1107 = vlaneseq
        %v1108 = vshrl.u32 %v1107, 7
        %v1109 = vsub.s32 7, %v1108
        %v1110 = vrot.slane %v1077, %v1109
        %vm1119 = vcmask 261120
        %v1121 = vsel %vm1119, %v1044, 0
        %1123 = vmatprep.subr.mxu0 0.0
        %1124 = vmatpush1.msra.mxu0 0.0
        %1125 = vmatprep.subr.mxu0 0.0
        %1126 = vmatpush1.msra.mxu0 0.0
        %1127 = vmatprep.subr.mxu0 0.0
        %1128 = vmatpush1.msra.mxu0 0.0
        %1129 = vmatprep.subr.mxu0 0.0
        %1130 = vmatpush1.msra.mxu0 0.0
        %1131 = vmatprep.subr.mxu0 0.0
        %1132 = vmatpush1.msra.mxu0 0.0
        %1133 = vmatprep.subr.mxu0 0.0
        %1134 = vmatpush1.msra.mxu0 0.0
        %1135 = vmatprep.subr.mxu0 0.0
        %1136 = vmatpush1.msra.mxu0 0.0
        %1137 = vmatprep.subr.mxu0 0.0
        %1138 = vmatpush1.msra.mxu0 0.0
        %1139 = vmatprep.subr.mxu0 0.0
        %1140 = vmatpush1.msra.mxu0 0.0
        %1141 = vmatprep.subr.mxu0 0.0
        %1142 = vmatpush1.msra.mxu0 0.0
        %1143 = vmatprep.subr.mxu0 0.0
        %1144 = vmatpush1.msra.mxu0 0.0
        %1145 = vmatprep.subr.mxu0 0.0
        %1146 = vmatpush1.msra.mxu0 0.0
        %1147 = vmatprep.subr.mxu0 %v1070
        %1148 = vmatpush1.msra.mxu0 %v1069
        %1149 = vmatprep.subr.mxu0 %v1062
        %1150 = vmatpush1.msra.mxu0 %v1061
        %1151 = vmatprep.subr.mxu0 %v1054
        %1152 = vmatpush1.msra.mxu0 %v1053
        %1153 = vmatprep.subr.mxu0 %v1046
        %1154 = vmatpush1.msra.mxu0 %v1045
        %1155 = vmatprep.subr.mxu0 0.0
        %1156 = vmatpush2.msra.mxu0 0.0
        %1157 = vmatprep.subr.mxu0 0.0
        %1158 = vmatpush2.msra.mxu0 0.0
        %1159 = vmatprep.subr.mxu0 0.0
        %1160 = vmatpush2.msra.mxu0 0.0
        %1161 = vmatprep.subr.mxu0 0.0
        %1162 = vmatpush2.msra.mxu0 0.0
        %1163 = vmatprep.subr.mxu0 0.0
        %1164 = vmatpush2.msra.mxu0 0.0
        %1165 = vmatprep.subr.mxu0 0.0
        %1166 = vmatpush2.msra.mxu0 0.0
        %1167 = vmatprep.subr.mxu0 0.0
        %1168 = vmatpush2.msra.mxu0 0.0
        %1169 = vmatprep.subr.mxu0 0.0
        %1170 = vmatpush2.msra.mxu0 0.0
        %1171 = vmatprep.subr.mxu0 0.0
        %1172 = vmatpush2.msra.mxu0 0.0
        %1173 = vmatprep.subr.mxu0 0.0
        %1174 = vmatpush2.msra.mxu0 0.0
        %1175 = vmatprep.subr.mxu0 0.0
        %1176 = vmatpush2.msra.mxu0 0.0
        %1177 = vmatprep.subr.mxu0 0.0
        %1178 = vmatpush2.msra.mxu0 0.0
        %1179 = vmatprep.subr.mxu0 0.0
        %1180 = vmatpush2.msra.mxu0 0.0
        %1181 = vmatprep.subr.mxu0 0.0
        %1182 = vmatpush2.msra.mxu0 0.0
        %1183 = vmatprep.subr.mxu0 0.0
        %1184 = vmatpush2.msra.mxu0 0.0
        %1185 = vmatprep.subr.mxu0 0.0
        %1186 = vmatpush2.msra.mxu0 0.0
        %1187 = vmatprep.mubr.f32.mxu0 0.0
        %1188 = vmatmul.mubr.f32.gmra.mxu0 %v1121
        %v1189 = vpop.f32.mrf.mxu0
        %v1190 = vadd.f32 %v1082, %v1189
        %v1191 = vpop.f32.mrf.mxu0
        %v1192 = vadd.f32 %v1086, %v1191
        %1193 = vdwg.mxu0
        %1194 = vmatprep.subr.mxu0 0.0
        %1195 = vmatpush1.msra.mxu0 0.0
        %1196 = vmatprep.subr.mxu0 0.0
        %1197 = vmatpush1.msra.mxu0 0.0
        %1198 = vmatprep.subr.mxu0 0.0
        %1199 = vmatpush1.msra.mxu0 0.0
        %1200 = vmatprep.subr.mxu0 0.0
        %1201 = vmatpush1.msra.mxu0 0.0
        %1202 = vmatprep.subr.mxu0 0.0
        %1203 = vmatpush1.msra.mxu0 0.0
        %1204 = vmatprep.subr.mxu0 0.0
        %1205 = vmatpush1.msra.mxu0 0.0
        %1206 = vmatprep.subr.mxu0 0.0
        %1207 = vmatpush1.msra.mxu0 0.0
        %1208 = vmatprep.subr.mxu0 0.0
        %1209 = vmatpush1.msra.mxu0 0.0
        %1210 = vmatprep.subr.mxu0 0.0
        %1211 = vmatpush1.msra.mxu0 0.0
        %1212 = vmatprep.subr.mxu0 0.0
        %1213 = vmatpush1.msra.mxu0 0.0
        %1214 = vmatprep.subr.mxu0 0.0
        %1215 = vmatpush1.msra.mxu0 0.0
        %1216 = vmatprep.subr.mxu0 0.0
        %1217 = vmatpush1.msra.mxu0 0.0
        %1218 = vmatprep.subr.mxu0 %v1072
        %1219 = vmatpush1.msra.mxu0 %v1071
        %1220 = vmatprep.subr.mxu0 %v1064
        %1221 = vmatpush1.msra.mxu0 %v1063
        %1222 = vmatprep.subr.mxu0 %v1056
        %1223 = vmatpush1.msra.mxu0 %v1055
        %1224 = vmatprep.subr.mxu0 %v1048
        %1225 = vmatpush1.msra.mxu0 %v1047
        %1226 = vmatprep.subr.mxu0 0.0
        %1227 = vmatpush2.msra.mxu0 0.0
        %1228 = vmatprep.subr.mxu0 0.0
        %1229 = vmatpush2.msra.mxu0 0.0
        %1230 = vmatprep.subr.mxu0 0.0
        %1231 = vmatpush2.msra.mxu0 0.0
        %1232 = vmatprep.subr.mxu0 0.0
        %1233 = vmatpush2.msra.mxu0 0.0
        %1234 = vmatprep.subr.mxu0 0.0
        %1235 = vmatpush2.msra.mxu0 0.0
        %1236 = vmatprep.subr.mxu0 0.0
        %1237 = vmatpush2.msra.mxu0 0.0
        %1238 = vmatprep.subr.mxu0 0.0
        %1239 = vmatpush2.msra.mxu0 0.0
        %1240 = vmatprep.subr.mxu0 0.0
        %1241 = vmatpush2.msra.mxu0 0.0
        %1242 = vmatprep.subr.mxu0 0.0
        %1243 = vmatpush2.msra.mxu0 0.0
        %1244 = vmatprep.subr.mxu0 0.0
        %1245 = vmatpush2.msra.mxu0 0.0
        %1246 = vmatprep.subr.mxu0 0.0
        %1247 = vmatpush2.msra.mxu0 0.0
        %1248 = vmatprep.subr.mxu0 0.0
        %1249 = vmatpush2.msra.mxu0 0.0
        %1250 = vmatprep.subr.mxu0 0.0
        %1251 = vmatpush2.msra.mxu0 0.0
        %1252 = vmatprep.subr.mxu0 0.0
        %1253 = vmatpush2.msra.mxu0 0.0
        %1254 = vmatprep.subr.mxu0 0.0
        %1255 = vmatpush2.msra.mxu0 0.0
        %1256 = vmatprep.subr.mxu0 0.0
        %1257 = vmatpush2.msra.mxu0 0.0
        %1258 = vmatprep.mubr.f32.mxu0 0.0
        %1259 = vmatmul.mubr.f32.gmra.mxu0 %v1121
        %v1260 = vpop.f32.mrf.mxu0
        %v1261 = vadd.f32 %v1090, %v1260
        %v1262 = vpop.f32.mrf.mxu0
        %v1263 = vadd.f32 %v1094, %v1262
        %1264 = vdwg.mxu0
        %1265 = vmatprep.subr.mxu0 0.0
        %1266 = vmatpush1.msra.mxu0 0.0
        %1267 = vmatprep.subr.mxu0 0.0
        %1268 = vmatpush1.msra.mxu0 0.0
        %1269 = vmatprep.subr.mxu0 0.0
        %1270 = vmatpush1.msra.mxu0 0.0
        %1271 = vmatprep.subr.mxu0 0.0
        %1272 = vmatpush1.msra.mxu0 0.0
        %1273 = vmatprep.subr.mxu0 0.0
        %1274 = vmatpush1.msra.mxu0 0.0
        %1275 = vmatprep.subr.mxu0 0.0
        %1276 = vmatpush1.msra.mxu0 0.0
        %1277 = vmatprep.subr.mxu0 0.0
        %1278 = vmatpush1.msra.mxu0 0.0
        %1279 = vmatprep.subr.mxu0 0.0
        %1280 = vmatpush1.msra.mxu0 0.0
        %1281 = vmatprep.subr.mxu0 0.0
        %1282 = vmatpush1.msra.mxu0 0.0
        %1283 = vmatprep.subr.mxu0 0.0
        %1284 = vmatpush1.msra.mxu0 0.0
        %1285 = vmatprep.subr.mxu0 0.0
        %1286 = vmatpush1.msra.mxu0 0.0
        %1287 = vmatprep.subr.mxu0 0.0
        %1288 = vmatpush1.msra.mxu0 0.0
        %1289 = vmatprep.subr.mxu0 %v1074
        %1290 = vmatpush1.msra.mxu0 %v1073
        %1291 = vmatprep.subr.mxu0 %v1066
        %1292 = vmatpush1.msra.mxu0 %v1065
        %1293 = vmatprep.subr.mxu0 %v1058
        %1294 = vmatpush1.msra.mxu0 %v1057
        %1295 = vmatprep.subr.mxu0 %v1050
        %1296 = vmatpush1.msra.mxu0 %v1049
        %1297 = vmatprep.subr.mxu0 0.0
        %1298 = vmatpush2.msra.mxu0 0.0
        %1299 = vmatprep.subr.mxu0 0.0
        %1300 = vmatpush2.msra.mxu0 0.0
        %1301 = vmatprep.subr.mxu0 0.0
        %1302 = vmatpush2.msra.mxu0 0.0
        %1303 = vmatprep.subr.mxu0 0.0
        %1304 = vmatpush2.msra.mxu0 0.0
        %1305 = vmatprep.subr.mxu0 0.0
        %1306 = vmatpush2.msra.mxu0 0.0
        %1307 = vmatprep.subr.mxu0 0.0
        %1308 = vmatpush2.msra.mxu0 0.0
        %1309 = vmatprep.subr.mxu0 0.0
        %1310 = vmatpush2.msra.mxu0 0.0
        %1311 = vmatprep.subr.mxu0 0.0
        %1312 = vmatpush2.msra.mxu0 0.0
        %1313 = vmatprep.subr.mxu0 0.0
        %1314 = vmatpush2.msra.mxu0 0.0
        %1315 = vmatprep.subr.mxu0 0.0
        %1316 = vmatpush2.msra.mxu0 0.0
        %1317 = vmatprep.subr.mxu0 0.0
        %1318 = vmatpush2.msra.mxu0 0.0
        %1319 = vmatprep.subr.mxu0 0.0
        %1320 = vmatpush2.msra.mxu0 0.0
        %1321 = vmatprep.subr.mxu0 0.0
        %1322 = vmatpush2.msra.mxu0 0.0
        %1323 = vmatprep.subr.mxu0 0.0
        %1324 = vmatpush2.msra.mxu0 0.0
        %1325 = vmatprep.subr.mxu0 0.0
        %1326 = vmatpush2.msra.mxu0 0.0
        %1327 = vmatprep.subr.mxu0 0.0
        %1328 = vmatpush2.msra.mxu0 0.0
        %1329 = vmatprep.mubr.f32.mxu0 0.0
        %1330 = vmatmul.mubr.f32.gmra.mxu0 %v1121
        %v1331 = vpop.f32.mrf.mxu0
        %v1332 = vadd.f32 %v1098, %v1331
        %v1333 = vpop.f32.mrf.mxu0
        %v1334 = vadd.f32 %v1102, %v1333
        %1335 = vdwg.mxu0
        %1336 = vmatprep.subr.mxu0 0.0
        %1337 = vmatpush1.msra.mxu0 0.0
        %1338 = vmatprep.subr.mxu0 0.0
        %1339 = vmatpush1.msra.mxu0 0.0
        %1340 = vmatprep.subr.mxu0 0.0
        %1341 = vmatpush1.msra.mxu0 0.0
        %1342 = vmatprep.subr.mxu0 0.0
        %1343 = vmatpush1.msra.mxu0 0.0
        %1344 = vmatprep.subr.mxu0 0.0
        %1345 = vmatpush1.msra.mxu0 0.0
        %1346 = vmatprep.subr.mxu0 0.0
        %1347 = vmatpush1.msra.mxu0 0.0
        %1348 = vmatprep.subr.mxu0 0.0
        %1349 = vmatpush1.msra.mxu0 0.0
        %1350 = vmatprep.subr.mxu0 0.0
        %1351 = vmatpush1.msra.mxu0 0.0
        %1352 = vmatprep.subr.mxu0 0.0
        %1353 = vmatpush1.msra.mxu0 0.0
        %1354 = vmatprep.subr.mxu0 0.0
        %1355 = vmatpush1.msra.mxu0 0.0
        %1356 = vmatprep.subr.mxu0 0.0
        %1357 = vmatpush1.msra.mxu0 0.0
        %1358 = vmatprep.subr.mxu0 0.0
        %1359 = vmatpush1.msra.mxu0 0.0
        %1360 = vmatprep.subr.mxu0 %v1076
        %1361 = vmatpush1.msra.mxu0 %v1075
        %1362 = vmatprep.subr.mxu0 %v1068
        %1363 = vmatpush1.msra.mxu0 %v1067
        %1364 = vmatprep.subr.mxu0 %v1060
        %1365 = vmatpush1.msra.mxu0 %v1059
        %1366 = vmatprep.subr.mxu0 %v1052
        %1367 = vmatpush1.msra.mxu0 %v1051
        %1368 = vmatprep.subr.mxu0 0.0
        %1369 = vmatpush2.msra.mxu0 0.0
        %1370 = vmatprep.subr.mxu0 0.0
        %1371 = vmatpush2.msra.mxu0 0.0
        %1372 = vmatprep.subr.mxu0 0.0
        %1373 = vmatpush2.msra.mxu0 0.0
        %1374 = vmatprep.subr.mxu0 0.0
        %1375 = vmatpush2.msra.mxu0 0.0
        %1376 = vmatprep.subr.mxu0 0.0
        %1377 = vmatpush2.msra.mxu0 0.0
        %1378 = vmatprep.subr.mxu0 0.0
        %1379 = vmatpush2.msra.mxu0 0.0
        %1380 = vmatprep.subr.mxu0 0.0
        %1381 = vmatpush2.msra.mxu0 0.0
        %1382 = vmatprep.subr.mxu0 0.0
        %1383 = vmatpush2.msra.mxu0 0.0
        %1384 = vmatprep.subr.mxu0 0.0
        %1385 = vmatpush2.msra.mxu0 0.0
        %1386 = vmatprep.subr.mxu0 0.0
        %1387 = vmatpush2.msra.mxu0 0.0
        %1388 = vmatprep.subr.mxu0 0.0
        %1389 = vmatpush2.msra.mxu0 0.0
        %1390 = vmatprep.subr.mxu0 0.0
        %1391 = vmatpush2.msra.mxu0 0.0
        %1392 = vmatprep.subr.mxu0 0.0
        %1393 = vmatpush2.msra.mxu0 0.0
        %1394 = vmatprep.subr.mxu0 0.0
        %1395 = vmatpush2.msra.mxu0 0.0
        %1396 = vmatprep.subr.mxu0 0.0
        %1397 = vmatpush2.msra.mxu0 0.0
        %1398 = vmatprep.subr.mxu0 0.0
        %1399 = vmatpush2.msra.mxu0 0.0
        %1400 = vmatprep.mubr.f32.mxu0 0.0
        %1401 = vmatmul.mubr.f32.gmra.mxu0 %v1121
        %v1402 = vpop.f32.mrf.mxu0
        %v1403 = vadd.f32 %v1106, %v1402
        %v1404 = vpop.f32.mrf.mxu0
        %v1405 = vadd.f32 %v1110, %v1404
        %1406 = vdwg.mxu0
        %v1407 = vmax.f32 %v1190, 0.0
        %v1408 = vmax.f32 %v1192, 0.0
        %v1409 = vmax.f32 %v1261, 0.0
        %v1410 = vmax.f32 %v1263, 0.0
        %v1411 = vmax.f32 %v1332, 0.0
        %v1412 = vmax.f32 %v1334, 0.0
        %v1413 = vmax.f32 %v1403, 0.0
        %v1414 = vmax.f32 %v1405, 0.0
        %v1415 = vld [vmem:[#allocation11] sm:$0xff]
        %v1417 = vlaneseq
        %v1418 = vshrl.u32 %v1417, 7
        %v1419 = vsub.s32 0, %v1418
        %v1420 = vrot.slane %v1415, %v1419
        %v1421 = vlaneseq
        %v1422 = vshrl.u32 %v1421, 7
        %v1423 = vsub.s32 1, %v1422
        %v1424 = vrot.slane %v1415, %v1423
        %v1425 = vlaneseq
        %v1426 = vshrl.u32 %v1425, 7
        %v1427 = vsub.s32 2, %v1426
        %v1428 = vrot.slane %v1415, %v1427
        %v1429 = vlaneseq
        %v1430 = vshrl.u32 %v1429, 7
        %v1431 = vsub.s32 3, %v1430
        %v1432 = vrot.slane %v1415, %v1431
        %v1433 = vlaneseq
        %v1434 = vshrl.u32 %v1433, 7
        %v1435 = vsub.s32 4, %v1434
        %v1436 = vrot.slane %v1415, %v1435
        %v1437 = vlaneseq
        %v1438 = vshrl.u32 %v1437, 7
        %v1439 = vsub.s32 5, %v1438
        %v1440 = vrot.slane %v1415, %v1439
        %v1441 = vlaneseq
        %v1442 = vshrl.u32 %v1441, 7
        %v1443 = vsub.s32 6, %v1442
        %v1444 = vrot.slane %v1415, %v1443
        %v1445 = vlaneseq
        %v1446 = vshrl.u32 %v1445, 7
        %v1447 = vsub.s32 7, %v1446
        %v1448 = vrot.slane %v1415, %v1447
        %v1457 = vmul.f32 %v1407, %v1420
        %v1458 = vmul.f32 %v1408, %v1424
        %v1459 = vmul.f32 %v1409, %v1428
        %v1460 = vmul.f32 %v1410, %v1432
        %v1461 = vmul.f32 %v1411, %v1436
        %v1462 = vmul.f32 %v1412, %v1440
        %v1463 = vmul.f32 %v1413, %v1444
        %v1464 = vmul.f32 %v1414, %v1448
        %v1473 = vcombine.low %v1457, %v1458
        %v1474 = vcombine.high %v1457, %v1458
        %v1475 = vcombine.low %v1459, %v1460
        %v1476 = vcombine.high %v1459, %v1460
        %v1477 = vcombine.low %v1461, %v1462
        %v1478 = vcombine.high %v1461, %v1462
        %v1479 = vcombine.low %v1463, %v1464
        %v1480 = vcombine.high %v1463, %v1464
        %v1482 = vunpack.c.l.s4 1966171168
        %v1483 = vunpack.c.0.s8 %v1482
        %v1484 = vlaneseq
        %v1485 = vshrl.u32 %v1484, 7
        %v1486 = vsub.s32 %v1483, %v1485
        %v1487 = vrot.slane %v1473, %v1486
        %v1489 = vunpack.c.l.s4 1966171168
        %v1490 = vunpack.c.0.s8 %v1489
        %v1491 = vlaneseq
        %v1492 = vshrl.u32 %v1491, 7
        %v1493 = vsub.s32 %v1490, %v1492
        %v1494 = vrot.slane %v1474, %v1493
        %v1496 = vunpack.c.l.s4 1966171168
        %v1497 = vunpack.c.0.s8 %v1496
        %v1498 = vlaneseq
        %v1499 = vshrl.u32 %v1498, 7
        %v1500 = vsub.s32 %v1497, %v1499
        %v1501 = vrot.slane %v1475, %v1500
        %v1503 = vunpack.c.l.s4 1966171168
        %v1504 = vunpack.c.0.s8 %v1503
        %v1505 = vlaneseq
        %v1506 = vshrl.u32 %v1505, 7
        %v1507 = vsub.s32 %v1504, %v1506
        %v1508 = vrot.slane %v1476, %v1507
        %v1510 = vunpack.c.l.s4 1966171168
        %v1511 = vunpack.c.0.s8 %v1510
        %v1512 = vlaneseq
        %v1513 = vshrl.u32 %v1512, 7
        %v1514 = vsub.s32 %v1511, %v1513
        %v1515 = vrot.slane %v1477, %v1514
        %v1517 = vunpack.c.l.s4 1966171168
        %v1518 = vunpack.c.0.s8 %v1517
        %v1519 = vlaneseq
        %v1520 = vshrl.u32 %v1519, 7
        %v1521 = vsub.s32 %v1518, %v1520
        %v1522 = vrot.slane %v1478, %v1521
        %v1524 = vunpack.c.l.s4 1966171168
        %v1525 = vunpack.c.0.s8 %v1524
        %v1526 = vlaneseq
        %v1527 = vshrl.u32 %v1526, 7
        %v1528 = vsub.s32 %v1525, %v1527
        %v1529 = vrot.slane %v1479, %v1528
        %v1531 = vunpack.c.l.s4 1966171168
        %v1532 = vunpack.c.0.s8 %v1531
        %v1533 = vlaneseq
        %v1534 = vshrl.u32 %v1533, 7
        %v1535 = vsub.s32 %v1532, %v1534
        %v1536 = vrot.slane %v1480, %v1535
        %v1537 = vcombine.low %v1487, %v1501
        %v1538 = vcombine.high %v1487, %v1501
        %v1539 = vcombine.low %v1494, %v1508
        %v1540 = vcombine.high %v1494, %v1508
        %v1541 = vcombine.low %v1515, %v1529
        %v1542 = vcombine.high %v1515, %v1529
        %v1543 = vcombine.low %v1522, %v1536
        %v1544 = vcombine.high %v1522, %v1536
        %v1546 = vunpack.c.l.s4 1966171168
        %v1547 = vunpack.c.0.s8 %v1546
        %v1548 = vlaneseq
        %v1549 = vshrl.u32 %v1548, 7
        %v1550 = vsub.s32 %v1547, %v1549
        %v1551 = vrot.slane %v1537, %v1550
        %v1553 = vunpack.c.l.s4 1966171168
        %v1554 = vunpack.c.0.s8 %v1553
        %v1555 = vlaneseq
        %v1556 = vshrl.u32 %v1555, 7
        %v1557 = vsub.s32 %v1554, %v1556
        %v1558 = vrot.slane %v1539, %v1557
        %v1560 = vunpack.c.l.s4 1966171168
        %v1561 = vunpack.c.0.s8 %v1560
        %v1562 = vlaneseq
        %v1563 = vshrl.u32 %v1562, 7
        %v1564 = vsub.s32 %v1561, %v1563
        %v1565 = vrot.slane %v1538, %v1564
        %v1567 = vunpack.c.l.s4 1966171168
        %v1568 = vunpack.c.0.s8 %v1567
        %v1569 = vlaneseq
        %v1570 = vshrl.u32 %v1569, 7
        %v1571 = vsub.s32 %v1568, %v1570
        %v1572 = vrot.slane %v1540, %v1571
        %v1574 = vunpack.c.l.s4 1966171168
        %v1575 = vunpack.c.0.s8 %v1574
        %v1576 = vlaneseq
        %v1577 = vshrl.u32 %v1576, 7
        %v1578 = vsub.s32 %v1575, %v1577
        %v1579 = vrot.slane %v1541, %v1578
        %v1581 = vunpack.c.l.s4 1966171168
        %v1582 = vunpack.c.0.s8 %v1581
        %v1583 = vlaneseq
        %v1584 = vshrl.u32 %v1583, 7
        %v1585 = vsub.s32 %v1582, %v1584
        %v1586 = vrot.slane %v1543, %v1585
        %v1588 = vunpack.c.l.s4 1966171168
        %v1589 = vunpack.c.0.s8 %v1588
        %v1590 = vlaneseq
        %v1591 = vshrl.u32 %v1590, 7
        %v1592 = vsub.s32 %v1589, %v1591
        %v1593 = vrot.slane %v1542, %v1592
        %v1595 = vunpack.c.l.s4 1966171168
        %v1596 = vunpack.c.0.s8 %v1595
        %v1597 = vlaneseq
        %v1598 = vshrl.u32 %v1597, 7
        %v1599 = vsub.s32 %v1596, %v1598
        %v1600 = vrot.slane %v1544, %v1599
        %v1601 = vcombine.low %v1551, %v1579
        %v1602 = vcombine.high %v1551, %v1579
        %v1603 = vcombine.low %v1558, %v1586
        %v1604 = vcombine.high %v1558, %v1586
        %v1605 = vcombine.low %v1565, %v1593
        %v1606 = vcombine.high %v1565, %v1593
        %v1607 = vcombine.low %v1572, %v1600
        %v1608 = vcombine.high %v1572, %v1600
        %v1609 = vlaneseq
        %v1610 = vshrl.u32 %v1609, 7
        %v1611 = vsub.s32 0, %v1610
        %v1612 = vrot.slane %v1601, %v1611
        %v1613 = vlaneseq
        %v1614 = vshrl.u32 %v1613, 7
        %v1615 = vsub.s32 1, %v1614
        %v1616 = vrot.slane %v1601, %v1615
        %v1617 = vlaneseq
        %v1618 = vshrl.u32 %v1617, 7
        %v1619 = vsub.s32 2, %v1618
        %v1620 = vrot.slane %v1601, %v1619
        %v1621 = vlaneseq
        %v1622 = vshrl.u32 %v1621, 7
        %v1623 = vsub.s32 3, %v1622
        %v1624 = vrot.slane %v1601, %v1623
        %v1625 = vlaneseq
        %v1626 = vshrl.u32 %v1625, 7
        %v1627 = vsub.s32 4, %v1626
        %v1628 = vrot.slane %v1601, %v1627
        %v1629 = vlaneseq
        %v1630 = vshrl.u32 %v1629, 7
        %v1631 = vsub.s32 5, %v1630
        %v1632 = vrot.slane %v1601, %v1631
        %v1633 = vlaneseq
        %v1634 = vshrl.u32 %v1633, 7
        %v1635 = vsub.s32 6, %v1634
        %v1636 = vrot.slane %v1601, %v1635
        %v1637 = vlaneseq
        %v1638 = vshrl.u32 %v1637, 7
        %v1639 = vsub.s32 7, %v1638
        %v1640 = vrot.slane %v1601, %v1639
        %v1641 = vlaneseq
        %v1642 = vshrl.u32 %v1641, 7
        %v1643 = vsub.s32 0, %v1642
        %v1644 = vrot.slane %v1605, %v1643
        %v1645 = vlaneseq
        %v1646 = vshrl.u32 %v1645, 7
        %v1647 = vsub.s32 1, %v1646
        %v1648 = vrot.slane %v1605, %v1647
        %v1649 = vlaneseq
        %v1650 = vshrl.u32 %v1649, 7
        %v1651 = vsub.s32 2, %v1650
        %v1652 = vrot.slane %v1605, %v1651
        %v1653 = vlaneseq
        %v1654 = vshrl.u32 %v1653, 7
        %v1655 = vsub.s32 3, %v1654
        %v1656 = vrot.slane %v1605, %v1655
        %v1657 = vlaneseq
        %v1658 = vshrl.u32 %v1657, 7
        %v1659 = vsub.s32 4, %v1658
        %v1660 = vrot.slane %v1605, %v1659
        %v1661 = vlaneseq
        %v1662 = vshrl.u32 %v1661, 7
        %v1663 = vsub.s32 5, %v1662
        %v1664 = vrot.slane %v1605, %v1663
        %v1665 = vlaneseq
        %v1666 = vshrl.u32 %v1665, 7
        %v1667 = vsub.s32 6, %v1666
        %v1668 = vrot.slane %v1605, %v1667
        %v1669 = vlaneseq
        %v1670 = vshrl.u32 %v1669, 7
        %v1671 = vsub.s32 7, %v1670
        %v1672 = vrot.slane %v1605, %v1671
        %v1673 = vlaneseq
        %v1674 = vshrl.u32 %v1673, 7
        %v1675 = vsub.s32 0, %v1674
        %v1676 = vrot.slane %v1602, %v1675
        %v1677 = vlaneseq
        %v1678 = vshrl.u32 %v1677, 7
        %v1679 = vsub.s32 1, %v1678
        %v1680 = vrot.slane %v1602, %v1679
        %v1681 = vlaneseq
        %v1682 = vshrl.u32 %v1681, 7
        %v1683 = vsub.s32 2, %v1682
        %v1684 = vrot.slane %v1602, %v1683
        %v1685 = vlaneseq
        %v1686 = vshrl.u32 %v1685, 7
        %v1687 = vsub.s32 3, %v1686
        %v1688 = vrot.slane %v1602, %v1687
        %v1689 = vlaneseq
        %v1690 = vshrl.u32 %v1689, 7
        %v1691 = vsub.s32 4, %v1690
        %v1692 = vrot.slane %v1602, %v1691
        %v1693 = vlaneseq
        %v1694 = vshrl.u32 %v1693, 7
        %v1695 = vsub.s32 5, %v1694
        %v1696 = vrot.slane %v1602, %v1695
        %v1697 = vlaneseq
        %v1698 = vshrl.u32 %v1697, 7
        %v1699 = vsub.s32 6, %v1698
        %v1700 = vrot.slane %v1602, %v1699
        %v1701 = vlaneseq
        %v1702 = vshrl.u32 %v1701, 7
        %v1703 = vsub.s32 7, %v1702
        %v1704 = vrot.slane %v1602, %v1703
        %v1705 = vlaneseq
        %v1706 = vshrl.u32 %v1705, 7
        %v1707 = vsub.s32 0, %v1706
        %v1708 = vrot.slane %v1606, %v1707
        %v1709 = vlaneseq
        %v1710 = vshrl.u32 %v1709, 7
        %v1711 = vsub.s32 1, %v1710
        %v1712 = vrot.slane %v1606, %v1711
        %v1713 = vlaneseq
        %v1714 = vshrl.u32 %v1713, 7
        %v1715 = vsub.s32 2, %v1714
        %v1716 = vrot.slane %v1606, %v1715
        %v1717 = vlaneseq
        %v1718 = vshrl.u32 %v1717, 7
        %v1719 = vsub.s32 3, %v1718
        %v1720 = vrot.slane %v1606, %v1719
        %v1721 = vlaneseq
        %v1722 = vshrl.u32 %v1721, 7
        %v1723 = vsub.s32 4, %v1722
        %v1724 = vrot.slane %v1606, %v1723
        %v1725 = vlaneseq
        %v1726 = vshrl.u32 %v1725, 7
        %v1727 = vsub.s32 5, %v1726
        %v1728 = vrot.slane %v1606, %v1727
        %v1729 = vlaneseq
        %v1730 = vshrl.u32 %v1729, 7
        %v1731 = vsub.s32 6, %v1730
        %v1732 = vrot.slane %v1606, %v1731
        %v1733 = vlaneseq
        %v1734 = vshrl.u32 %v1733, 7
        %v1735 = vsub.s32 7, %v1734
        %v1736 = vrot.slane %v1606, %v1735
        %v1737 = vlaneseq
        %v1738 = vshrl.u32 %v1737, 7
        %v1739 = vsub.s32 0, %v1738
        %v1740 = vrot.slane %v1603, %v1739
        %v1741 = vlaneseq
        %v1742 = vshrl.u32 %v1741, 7
        %v1743 = vsub.s32 1, %v1742
        %v1744 = vrot.slane %v1603, %v1743
        %v1745 = vlaneseq
        %v1746 = vshrl.u32 %v1745, 7
        %v1747 = vsub.s32 2, %v1746
        %v1748 = vrot.slane %v1603, %v1747
        %v1749 = vlaneseq
        %v1750 = vshrl.u32 %v1749, 7
        %v1751 = vsub.s32 3, %v1750
        %v1752 = vrot.slane %v1603, %v1751
        %v1753 = vlaneseq
        %v1754 = vshrl.u32 %v1753, 7
        %v1755 = vsub.s32 4, %v1754
        %v1756 = vrot.slane %v1603, %v1755
        %v1757 = vlaneseq
        %v1758 = vshrl.u32 %v1757, 7
        %v1759 = vsub.s32 5, %v1758
        %v1760 = vrot.slane %v1603, %v1759
        %v1761 = vlaneseq
        %v1762 = vshrl.u32 %v1761, 7
        %v1763 = vsub.s32 6, %v1762
        %v1764 = vrot.slane %v1603, %v1763
        %v1765 = vlaneseq
        %v1766 = vshrl.u32 %v1765, 7
        %v1767 = vsub.s32 7, %v1766
        %v1768 = vrot.slane %v1603, %v1767
        %v1769 = vlaneseq
        %v1770 = vshrl.u32 %v1769, 7
        %v1771 = vsub.s32 0, %v1770
        %v1772 = vrot.slane %v1607, %v1771
        %v1773 = vlaneseq
        %v1774 = vshrl.u32 %v1773, 7
        %v1775 = vsub.s32 1, %v1774
        %v1776 = vrot.slane %v1607, %v1775
        %v1777 = vlaneseq
        %v1778 = vshrl.u32 %v1777, 7
        %v1779 = vsub.s32 2, %v1778
        %v1780 = vrot.slane %v1607, %v1779
        %v1781 = vlaneseq
        %v1782 = vshrl.u32 %v1781, 7
        %v1783 = vsub.s32 3, %v1782
        %v1784 = vrot.slane %v1607, %v1783
        %v1785 = vlaneseq
        %v1786 = vshrl.u32 %v1785, 7
        %v1787 = vsub.s32 4, %v1786
        %v1788 = vrot.slane %v1607, %v1787
        %v1789 = vlaneseq
        %v1790 = vshrl.u32 %v1789, 7
        %v1791 = vsub.s32 5, %v1790
        %v1792 = vrot.slane %v1607, %v1791
        %v1793 = vlaneseq
        %v1794 = vshrl.u32 %v1793, 7
        %v1795 = vsub.s32 6, %v1794
        %v1796 = vrot.slane %v1607, %v1795
        %v1797 = vlaneseq
        %v1798 = vshrl.u32 %v1797, 7
        %v1799 = vsub.s32 7, %v1798
        %v1800 = vrot.slane %v1607, %v1799
        %v1801 = vlaneseq
        %v1802 = vshrl.u32 %v1801, 7
        %v1803 = vsub.s32 0, %v1802
        %v1804 = vrot.slane %v1604, %v1803
        %v1805 = vlaneseq
        %v1806 = vshrl.u32 %v1805, 7
        %v1807 = vsub.s32 1, %v1806
        %v1808 = vrot.slane %v1604, %v1807
        %v1809 = vlaneseq
        %v1810 = vshrl.u32 %v1809, 7
        %v1811 = vsub.s32 2, %v1810
        %v1812 = vrot.slane %v1604, %v1811
        %v1813 = vlaneseq
        %v1814 = vshrl.u32 %v1813, 7
        %v1815 = vsub.s32 3, %v1814
        %v1816 = vrot.slane %v1604, %v1815
        %v1817 = vlaneseq
        %v1818 = vshrl.u32 %v1817, 7
        %v1819 = vsub.s32 4, %v1818
        %v1820 = vrot.slane %v1604, %v1819
        %v1821 = vlaneseq
        %v1822 = vshrl.u32 %v1821, 7
        %v1823 = vsub.s32 5, %v1822
        %v1824 = vrot.slane %v1604, %v1823
        %v1825 = vlaneseq
        %v1826 = vshrl.u32 %v1825, 7
        %v1827 = vsub.s32 6, %v1826
        %v1828 = vrot.slane %v1604, %v1827
        %v1829 = vlaneseq
        %v1830 = vshrl.u32 %v1829, 7
        %v1831 = vsub.s32 7, %v1830
        %v1832 = vrot.slane %v1604, %v1831
        %v1833 = vlaneseq
        %v1834 = vshrl.u32 %v1833, 7
        %v1835 = vsub.s32 0, %v1834
        %v1836 = vrot.slane %v1608, %v1835
        %v1837 = vlaneseq
        %v1838 = vshrl.u32 %v1837, 7
        %v1839 = vsub.s32 1, %v1838
        %v1840 = vrot.slane %v1608, %v1839
        %v1841 = vlaneseq
        %v1842 = vshrl.u32 %v1841, 7
        %v1843 = vsub.s32 2, %v1842
        %v1844 = vrot.slane %v1608, %v1843
        %v1845 = vlaneseq
        %v1846 = vshrl.u32 %v1845, 7
        %v1847 = vsub.s32 3, %v1846
        %v1848 = vrot.slane %v1608, %v1847
        %v1849 = vlaneseq
        %v1850 = vshrl.u32 %v1849, 7
        %v1851 = vsub.s32 4, %v1850
        %v1852 = vrot.slane %v1608, %v1851
        %v1853 = vlaneseq
        %v1854 = vshrl.u32 %v1853, 7
        %v1855 = vsub.s32 5, %v1854
        %v1856 = vrot.slane %v1608, %v1855
        %v1857 = vlaneseq
        %v1858 = vshrl.u32 %v1857, 7
        %v1859 = vsub.s32 6, %v1858
        %v1860 = vrot.slane %v1608, %v1859
        %v1861 = vlaneseq
        %v1862 = vshrl.u32 %v1861, 7
        %v1863 = vsub.s32 7, %v1862
        %v1864 = vrot.slane %v1608, %v1863
        %v1929 = vmul.f32 %v980, %v1612
        %v1930 = vmul.f32 %v981, %v1616
        %v1931 = vmul.f32 %v982, %v1620
        %v1932 = vmul.f32 %v983, %v1624
        %v1933 = vmul.f32 %v984, %v1628
        %v1934 = vmul.f32 %v985, %v1632
        %v1935 = vmul.f32 %v986, %v1636
        %v1936 = vmul.f32 %v987, %v1640
        %v1937 = vmul.f32 %v988, %v1644
        %v1938 = vmul.f32 %v989, %v1648
        %v1939 = vmul.f32 %v990, %v1652
        %v1940 = vmul.f32 %v991, %v1656
        %v1941 = vmul.f32 %v992, %v1660
        %v1942 = vmul.f32 %v993, %v1664
        %v1943 = vmul.f32 %v994, %v1668
        %v1944 = vmul.f32 %v995, %v1672
        %v1945 = vmul.f32 %v996, %v1676
        %v1946 = vmul.f32 %v997, %v1680
        %v1947 = vmul.f32 %v998, %v1684
        %v1948 = vmul.f32 %v999, %v1688
        %v1949 = vmul.f32 %v1000, %v1692
        %v1950 = vmul.f32 %v1001, %v1696
        %v1951 = vmul.f32 %v1002, %v1700
        %v1952 = vmul.f32 %v1003, %v1704
        %v1953 = vmul.f32 %v1004, %v1708
        %v1954 = vmul.f32 %v1005, %v1712
        %v1955 = vmul.f32 %v1006, %v1716
        %v1956 = vmul.f32 %v1007, %v1720
        %v1957 = vmul.f32 %v1008, %v1724
        %v1958 = vmul.f32 %v1009, %v1728
        %v1959 = vmul.f32 %v1010, %v1732
        %v1960 = vmul.f32 %v1011, %v1736
        %v1961 = vmul.f32 %v1012, %v1740
        %v1962 = vmul.f32 %v1013, %v1744
        %v1963 = vmul.f32 %v1014, %v1748
        %v1964 = vmul.f32 %v1015, %v1752
        %v1965 = vmul.f32 %v1016, %v1756
        %v1966 = vmul.f32 %v1017, %v1760
        %v1967 = vmul.f32 %v1018, %v1764
        %v1968 = vmul.f32 %v1019, %v1768
        %v1969 = vmul.f32 %v1020, %v1772
        %v1970 = vmul.f32 %v1021, %v1776
        %v1971 = vmul.f32 %v1022, %v1780
        %v1972 = vmul.f32 %v1023, %v1784
        %v1973 = vmul.f32 %v1024, %v1788
        %v1974 = vmul.f32 %v1025, %v1792
        %v1975 = vmul.f32 %v1026, %v1796
        %v1976 = vmul.f32 %v1027, %v1800
        %v1977 = vmul.f32 %v1028, %v1804
        %v1978 = vmul.f32 %v1029, %v1808
        %v1979 = vmul.f32 %v1030, %v1812
        %v1980 = vmul.f32 %v1031, %v1816
        %v1981 = vmul.f32 %v1032, %v1820
        %v1982 = vmul.f32 %v1033, %v1824
        %v1983 = vmul.f32 %v1034, %v1828
        %v1984 = vmul.f32 %v1035, %v1832
        %v1985 = vmul.f32 %v1036, %v1836
        %v1986 = vmul.f32 %v1037, %v1840
        %v1987 = vmul.f32 %v1038, %v1844
        %v1988 = vmul.f32 %v1039, %v1848
        %v1989 = vmul.f32 %v1040, %v1852
        %v1990 = vmul.f32 %v1041, %v1856
        %v1991 = vmul.f32 %v1042, %v1860
        %v1992 = vmul.f32 %v1043, %v1864
        %v1993 = vadd.f32 %v1929, %v1930
        %v1994 = vadd.f32 %v1993, %v1931
        %v1995 = vadd.f32 %v1994, %v1932
        %v1996 = vadd.f32 %v1995, %v1933
        %v1997 = vadd.f32 %v1996, %v1934
        %v1998 = vadd.f32 %v1997, %v1935
        %v1999 = vadd.f32 %v1998, %v1936
        %2000 = vadd.xlane.f32.xlu0 %v1999
        %v2001 = vpop.xlane.xlu0 %2000
        %v2002 = vadd.f32 %v1937, %v1938
        %v2003 = vadd.f32 %v2002, %v1939
        %v2004 = vadd.f32 %v2003, %v1940
        %v2005 = vadd.f32 %v2004, %v1941
        %v2006 = vadd.f32 %v2005, %v1942
        %v2007 = vadd.f32 %v2006, %v1943
        %v2008 = vadd.f32 %v2007, %v1944
        %2009 = vadd.xlane.f32.xlu0 %v2008
        %v2010 = vpop.xlane.xlu0 %2009
        %v2011 = vadd.f32 %v1945, %v1946
        %v2012 = vadd.f32 %v2011, %v1947
        %v2013 = vadd.f32 %v2012, %v1948
        %v2014 = vadd.f32 %v2013, %v1949
        %v2015 = vadd.f32 %v2014, %v1950
        %v2016 = vadd.f32 %v2015, %v1951
        %v2017 = vadd.f32 %v2016, %v1952
        %2018 = vadd.xlane.f32.xlu0 %v2017
        %v2019 = vpop.xlane.xlu0 %2018
        %v2020 = vadd.f32 %v1953, %v1954
        %v2021 = vadd.f32 %v2020, %v1955
        %v2022 = vadd.f32 %v2021, %v1956
        %v2023 = vadd.f32 %v2022, %v1957
        %v2024 = vadd.f32 %v2023, %v1958
        %v2025 = vadd.f32 %v2024, %v1959
        %v2026 = vadd.f32 %v2025, %v1960
        %2027 = vadd.xlane.f32.xlu0 %v2026
        %v2028 = vpop.xlane.xlu0 %2027
        %v2029 = vadd.f32 %v1961, %v1962
        %v2030 = vadd.f32 %v2029, %v1963
        %v2031 = vadd.f32 %v2030, %v1964
        %v2032 = vadd.f32 %v2031, %v1965
        %v2033 = vadd.f32 %v2032, %v1966
        %v2034 = vadd.f32 %v2033, %v1967
        %v2035 = vadd.f32 %v2034, %v1968
        %2036 = vadd.xlane.f32.xlu0 %v2035
        %v2037 = vpop.xlane.xlu0 %2036
        %v2038 = vadd.f32 %v1969, %v1970
        %v2039 = vadd.f32 %v2038, %v1971
        %v2040 = vadd.f32 %v2039, %v1972
        %v2041 = vadd.f32 %v2040, %v1973
        %v2042 = vadd.f32 %v2041, %v1974
        %v2043 = vadd.f32 %v2042, %v1975
        %v2044 = vadd.f32 %v2043, %v1976
        %2045 = vadd.xlane.f32.xlu0 %v2044
        %v2046 = vpop.xlane.xlu0 %2045
        %v2047 = vadd.f32 %v1977, %v1978
        %v2048 = vadd.f32 %v2047, %v1979
        %v2049 = vadd.f32 %v2048, %v1980
        %v2050 = vadd.f32 %v2049, %v1981
        %v2051 = vadd.f32 %v2050, %v1982
        %v2052 = vadd.f32 %v2051, %v1983
        %v2053 = vadd.f32 %v2052, %v1984
        %2054 = vadd.xlane.f32.xlu0 %v2053
        %v2055 = vpop.xlane.xlu0 %2054
        %v2056 = vadd.f32 %v1985, %v1986
        %v2057 = vadd.f32 %v2056, %v1987
        %v2058 = vadd.f32 %v2057, %v1988
        %v2059 = vadd.f32 %v2058, %v1989
        %v2060 = vadd.f32 %v2059, %v1990
        %v2061 = vadd.f32 %v2060, %v1991
        %v2062 = vadd.f32 %v2061, %v1992
        %2063 = vadd.xlane.f32.xlu0 %v2062
        %v2064 = vpop.xlane.xlu0 %2063
        %v2073 = vlaneseq
        %v2074 = vand.u32 %v2073, 127
        %v2075 = vlaneseq
        %v2076 = vshrl.u32 %v2075, 7
        %v2077 = vsub.s32 %v2074, %v2076
        %v2078 = vrot.slane %v2001, %v2077
        %v2079 = vlaneseq
        %v2080 = vshrl.u32 %v2079, 7
        %v2081 = vsub.s32 %v2074, %v2080
        %v2082 = vrot.slane %v2010, %v2081
        %v2083 = vlaneseq
        %v2084 = vshrl.u32 %v2083, 7
        %v2085 = vsub.s32 %v2074, %v2084
        %v2086 = vrot.slane %v2019, %v2085
        %v2087 = vlaneseq
        %v2088 = vshrl.u32 %v2087, 7
        %v2089 = vsub.s32 %v2074, %v2088
        %v2090 = vrot.slane %v2028, %v2089
        %v2091 = vlaneseq
        %v2092 = vshrl.u32 %v2091, 7
        %v2093 = vsub.s32 %v2074, %v2092
        %v2094 = vrot.slane %v2037, %v2093
        %v2095 = vlaneseq
        %v2096 = vshrl.u32 %v2095, 7
        %v2097 = vsub.s32 %v2074, %v2096
        %v2098 = vrot.slane %v2046, %v2097
        %v2099 = vlaneseq
        %v2100 = vshrl.u32 %v2099, 7
        %v2101 = vsub.s32 %v2074, %v2100
        %v2102 = vrot.slane %v2055, %v2101
        %v2103 = vlaneseq
        %v2104 = vshrl.u32 %v2103, 7
        %v2105 = vsub.s32 %v2074, %v2104
        %v2106 = vrot.slane %v2064, %v2105
        %vm2107 = vcmask 1041409
        %v2108 = vsel %vm2107, %v2082, %v2078
        %vm2109 = vcmask 1042434
        %v2110 = vsel %vm2109, %v2086, %v2108
        %vm2111 = vcmask 1043459
        %v2112 = vsel %vm2111, %v2090, %v2110
        %vm2113 = vcmask 1044484
        %v2114 = vsel %vm2113, %v2094, %v2112
        %vm2115 = vcmask 1045509
        %v2116 = vsel %vm2115, %v2098, %v2114
        %vm2117 = vcmask 1046534
        %v2118 = vsel %vm2117, %v2102, %v2116
        %vm2119 = vcmask 1047559
        %v2120 = vsel %vm2119, %v2106, %v2118
        %vm2122 = vcmask 64512
        %v2123 = vsel %vm2122, %v2120, -inf
        %2124 = vmax.xlane.f32.xlu0 %v2123
        %v2125 = vpop.xlane.xlu0 %2124
        %v2127 = vlaneseq
        %v2128 = vshrl.u32 %v2127, 7
        %v2129 = vsub.s32 0, %v2128
        %v2130 = vrot.slane %v2125, %v2129
        %v2131 = vlaneseq
        %v2132 = vshrl.u32 %v2131, 7
        %v2133 = vsub.s32 1, %v2132
        %v2134 = vrot.slane %v2125, %v2133
        %v2135 = vlaneseq
        %v2136 = vshrl.u32 %v2135, 7
        %v2137 = vsub.s32 2, %v2136
        %v2138 = vrot.slane %v2125, %v2137
        %v2139 = vlaneseq
        %v2140 = vshrl.u32 %v2139, 7
        %v2141 = vsub.s32 3, %v2140
        %v2142 = vrot.slane %v2125, %v2141
        %v2143 = vlaneseq
        %v2144 = vshrl.u32 %v2143, 7
        %v2145 = vsub.s32 4, %v2144
        %v2146 = vrot.slane %v2125, %v2145
        %v2147 = vlaneseq
        %v2148 = vshrl.u32 %v2147, 7
        %v2149 = vsub.s32 5, %v2148
        %v2150 = vrot.slane %v2125, %v2149
        %v2151 = vlaneseq
        %v2152 = vshrl.u32 %v2151, 7
        %v2153 = vsub.s32 6, %v2152
        %v2154 = vrot.slane %v2125, %v2153
        %v2155 = vlaneseq
        %v2156 = vshrl.u32 %v2155, 7
        %v2157 = vsub.s32 7, %v2156
        %v2158 = vrot.slane %v2125, %v2157
        %v2167 = vsub.f32 %v2001, %v2130
        %v2168 = vsub.f32 %v2010, %v2134
        %v2169 = vsub.f32 %v2019, %v2138
        %v2170 = vsub.f32 %v2028, %v2142
        %v2171 = vsub.f32 %v2037, %v2146
        %v2172 = vsub.f32 %v2046, %v2150
        %v2173 = vsub.f32 %v2055, %v2154
        %v2174 = vsub.f32 %v2064, %v2158
        %v2175 = vmul.f32 %v2167, 1.442695
        %v2176 = vpow.pop %v2175
        %v2177 = vmul.f32 %v2168, 1.442695
        %v2178 = vpow.pop %v2177
        %v2179 = vmul.f32 %v2169, 1.442695
        %v2180 = vpow.pop %v2179
        %v2181 = vmul.f32 %v2170, 1.442695
        %v2182 = vpow.pop %v2181
        %v2183 = vmul.f32 %v2171, 1.442695
        %v2184 = vpow.pop %v2183
        %v2185 = vmul.f32 %v2172, 1.442695
        %v2186 = vpow.pop %v2185
        %v2187 = vmul.f32 %v2173, 1.442695
        %v2188 = vpow.pop %v2187
        %v2189 = vmul.f32 %v2174, 1.442695
        %v2190 = vpow.pop %v2189
        %2199 = vset.pattern.permute.xlu0 0
        %2200 = vperm.xlu0 %2199, %v2176
        %v2201 = vpop.permute.xlu0 %2200
        %2202 = vset.pattern.permute.xlu0 0
        %2203 = vperm.xlu0 %2202, %v2178
        %v2204 = vpop.permute.xlu0 %2203
        %2205 = vset.pattern.permute.xlu0 0
        %2206 = vperm.xlu0 %2205, %v2180
        %v2207 = vpop.permute.xlu0 %2206
        %2208 = vset.pattern.permute.xlu0 0
        %2209 = vperm.xlu0 %2208, %v2182
        %v2210 = vpop.permute.xlu0 %2209
        %2211 = vset.pattern.permute.xlu0 0
        %2212 = vperm.xlu0 %2211, %v2184
        %v2213 = vpop.permute.xlu0 %2212
        %2214 = vset.pattern.permute.xlu0 0
        %2215 = vperm.xlu0 %2214, %v2186
        %v2216 = vpop.permute.xlu0 %2215
        %2217 = vset.pattern.permute.xlu0 0
        %2218 = vperm.xlu0 %2217, %v2188
        %v2219 = vpop.permute.xlu0 %2218
        %2220 = vset.pattern.permute.xlu0 0
        %2221 = vperm.xlu0 %2220, %v2190
        %v2222 = vpop.permute.xlu0 %2221
        %v2223 = vlaneseq
        %v2224 = vshrl.u32 %v2223, 7
        %v2225 = vsub.s32 %v2074, %v2224
        %v2226 = vrot.slane %v2201, %v2225
        %v2227 = vlaneseq
        %v2228 = vshrl.u32 %v2227, 7
        %v2229 = vsub.s32 %v2074, %v2228
        %v2230 = vrot.slane %v2204, %v2229
        %v2231 = vlaneseq
        %v2232 = vshrl.u32 %v2231, 7
        %v2233 = vsub.s32 %v2074, %v2232
        %v2234 = vrot.slane %v2207, %v2233
        %v2235 = vlaneseq
        %v2236 = vshrl.u32 %v2235, 7
        %v2237 = vsub.s32 %v2074, %v2236
        %v2238 = vrot.slane %v2210, %v2237
        %v2239 = vlaneseq
        %v2240 = vshrl.u32 %v2239, 7
        %v2241 = vsub.s32 %v2074, %v2240
        %v2242 = vrot.slane %v2213, %v2241
        %v2243 = vlaneseq
        %v2244 = vshrl.u32 %v2243, 7
        %v2245 = vsub.s32 %v2074, %v2244
        %v2246 = vrot.slane %v2216, %v2245
        %v2247 = vlaneseq
        %v2248 = vshrl.u32 %v2247, 7
        %v2249 = vsub.s32 %v2074, %v2248
        %v2250 = vrot.slane %v2219, %v2249
        %v2251 = vlaneseq
        %v2252 = vshrl.u32 %v2251, 7
        %v2253 = vsub.s32 %v2074, %v2252
        %v2254 = vrot.slane %v2222, %v2253
        %v2255 = vsel %vm2107, %v2230, %v2226
        %v2256 = vsel %vm2109, %v2234, %v2255
        %v2257 = vsel %vm2111, %v2238, %v2256
        %v2258 = vsel %vm2113, %v2242, %v2257
        %v2259 = vsel %vm2115, %v2246, %v2258
        %v2260 = vsel %vm2117, %v2250, %v2259
        %v2261 = vsel %vm2119, %v2254, %v2260
        %v2263 = vsel %vm2122, %v2261, 0.0
        %2264 = vadd.xlane.f32.xlu0 %v2263
        %v2265 = vpop.xlane.xlu0 %2264
        %v2266 = vrcp.pop %v2265
        %v2268 = vlaneseq
        %v2269 = vshrl.u32 %v2268, 7
        %v2270 = vsub.s32 0, %v2269
        %v2271 = vrot.slane %v2266, %v2270
        %v2272 = vlaneseq
        %v2273 = vshrl.u32 %v2272, 7
        %v2274 = vsub.s32 1, %v2273
        %v2275 = vrot.slane %v2266, %v2274
        %v2276 = vlaneseq
        %v2277 = vshrl.u32 %v2276, 7
        %v2278 = vsub.s32 2, %v2277
        %v2279 = vrot.slane %v2266, %v2278
        %v2280 = vlaneseq
        %v2281 = vshrl.u32 %v2280, 7
        %v2282 = vsub.s32 3, %v2281
        %v2283 = vrot.slane %v2266, %v2282
        %v2284 = vlaneseq
        %v2285 = vshrl.u32 %v2284, 7
        %v2286 = vsub.s32 4, %v2285
        %v2287 = vrot.slane %v2266, %v2286
        %v2288 = vlaneseq
        %v2289 = vshrl.u32 %v2288, 7
        %v2290 = vsub.s32 5, %v2289
        %v2291 = vrot.slane %v2266, %v2290
        %v2292 = vlaneseq
        %v2293 = vshrl.u32 %v2292, 7
        %v2294 = vsub.s32 6, %v2293
        %v2295 = vrot.slane %v2266, %v2294
        %v2296 = vlaneseq
        %v2297 = vshrl.u32 %v2296, 7
        %v2298 = vsub.s32 7, %v2297
        %v2299 = vrot.slane %v2266, %v2298
        %v2308 = vmul.f32 %v2176, %v2271
        %v2309 = vmul.f32 %v2178, %v2275
        %v2310 = vmul.f32 %v2180, %v2279
        %v2311 = vmul.f32 %v2182, %v2283
        %v2312 = vmul.f32 %v2184, %v2287
        %v2313 = vmul.f32 %v2186, %v2291
        %v2314 = vmul.f32 %v2188, %v2295
        %v2315 = vmul.f32 %v2190, %v2299
        %2317 = vset.pattern.permute.xlu0 0
        %2318 = vperm.xlu0 %2317, %v2308
        %v2319 = vpop.permute.xlu0 %2318
        %2322 = vset.pattern.permute.xlu0 0
        %2323 = vperm.xlu0 %2322, %v2309
        %v2324 = vpop.permute.xlu0 %2323
        %2327 = vset.pattern.permute.xlu0 0
        %2328 = vperm.xlu0 %2327, %v2310
        %v2329 = vpop.permute.xlu0 %2328
        %2332 = vset.pattern.permute.xlu0 0
        %2333 = vperm.xlu0 %2332, %v2311
        %v2334 = vpop.permute.xlu0 %2333
        %2337 = vset.pattern.permute.xlu0 0
        %2338 = vperm.xlu0 %2337, %v2312
        %v2339 = vpop.permute.xlu0 %2338
        %2342 = vset.pattern.permute.xlu0 0
        %2343 = vperm.xlu0 %2342, %v2313
        %v2344 = vpop.permute.xlu0 %2343
        %2347 = vset.pattern.permute.xlu0 0
        %2348 = vperm.xlu0 %2347, %v2314
        %v2349 = vpop.permute.xlu0 %2348
        %2352 = vset.pattern.permute.xlu0 0
        %2353 = vperm.xlu0 %2352, %v2315
        %v2354 = vpop.permute.xlu0 %2353
        %v2356 = vmul.f32 %v2319, %v389
        %v2357 = vmul.f32 %v2324, %v390
        %v2358 = vmul.f32 %v2329, %v391
        %v2359 = vmul.f32 %v2334, %v392
        %v2360 = vmul.f32 %v2339, %v393
        %v2361 = vmul.f32 %v2344, %v394
        %v2362 = vmul.f32 %v2349, %v395
        %v2363 = vmul.f32 %v2354, %v396
        %v2364 = vsel %vm503, %v2356, 0.0
        %v2365 = vrot.slane %v2364, 4
        %v2366 = vadd.f32 %v2364, %v2365
        %v2367 = vrot.slane %v2366, 2
        %v2368 = vadd.f32 %v2366, %v2367
        %v2369 = vrot.slane %v2368, 1
        %v2370 = vadd.f32 %v2368, %v2369
        %v2371 = vsel %vm503, %v2357, 0.0
        %v2372 = vrot.slane %v2371, 4
        %v2373 = vadd.f32 %v2371, %v2372
        %v2374 = vrot.slane %v2373, 2
        %v2375 = vadd.f32 %v2373, %v2374
        %v2376 = vrot.slane %v2375, 1
        %v2377 = vadd.f32 %v2375, %v2376
        %v2378 = vsel %vm503, %v2358, 0.0
        %v2379 = vrot.slane %v2378, 4
        %v2380 = vadd.f32 %v2378, %v2379
        %v2381 = vrot.slane %v2380, 2
        %v2382 = vadd.f32 %v2380, %v2381
        %v2383 = vrot.slane %v2382, 1
        %v2384 = vadd.f32 %v2382, %v2383
        %v2385 = vsel %vm503, %v2359, 0.0
        %v2386 = vrot.slane %v2385, 4
        %v2387 = vadd.f32 %v2385, %v2386
        %v2388 = vrot.slane %v2387, 2
        %v2389 = vadd.f32 %v2387, %v2388
        %v2390 = vrot.slane %v2389, 1
        %v2391 = vadd.f32 %v2389, %v2390
        %v2392 = vsel %vm503, %v2360, 0.0
        %v2393 = vrot.slane %v2392, 4
        %v2394 = vadd.f32 %v2392, %v2393
        %v2395 = vrot.slane %v2394, 2
        %v2396 = vadd.f32 %v2394, %v2395
        %v2397 = vrot.slane %v2396, 1
        %v2398 = vadd.f32 %v2396, %v2397
        %v2399 = vsel %vm503, %v2361, 0.0
        %v2400 = vrot.slane %v2399, 4
        %v2401 = vadd.f32 %v2399, %v2400
        %v2402 = vrot.slane %v2401, 2
        %v2403 = vadd.f32 %v2401, %v2402
        %v2404 = vrot.slane %v2403, 1
        %v2405 = vadd.f32 %v2403, %v2404
        %v2406 = vsel %vm503, %v2362, 0.0
        %v2407 = vrot.slane %v2406, 4
        %v2408 = vadd.f32 %v2406, %v2407
        %v2409 = vrot.slane %v2408, 2
        %v2410 = vadd.f32 %v2408, %v2409
        %v2411 = vrot.slane %v2410, 1
        %v2412 = vadd.f32 %v2410, %v2411
        %v2413 = vsel %vm503, %v2363, 0.0
        %v2414 = vrot.slane %v2413, 4
        %v2415 = vadd.f32 %v2413, %v2414
        %v2416 = vrot.slane %v2415, 2
        %v2417 = vadd.f32 %v2415, %v2416
        %v2418 = vrot.slane %v2417, 1
        %v2419 = vadd.f32 %v2417, %v2418
        %v2428 = vsel %vm2107, %v2377, %v2370
        %v2429 = vsel %vm2109, %v2384, %v2428
        %v2430 = vsel %vm2111, %v2391, %v2429
        %v2431 = vsel %vm2113, %v2398, %v2430
        %v2432 = vsel %vm2115, %v2405, %v2431
        %v2433 = vsel %vm2117, %v2412, %v2432
        %v2434 = vsel %vm2119, %v2419, %v2433
        %2436 = vst.msk [vmem:[%s387] sm:$0xff] %vm503, %v2434
        %s2437 = sand.u32 %s194, 1
        %s2438 = scalar_lea.sflag [#allocation4], %s2437
        %s2439 = sand.u32 %s194, 1
        %s2440 = smul.addr %s2439, 8
        %s2441 = scalar_lea.vmem [#allocation13], %s2440
        // Predicated region
        $region73: #{tpu_custom_call.1} parent=47 // pred_check
          %p2442 = pneg %p204
        $region74: #{tpu_custom_call.1} parent=47 // pred_check_branch
          %2444 = sbr.rel (%p2442) target = $region76
        $region75: #{tpu_custom_call.1} parent=47 // pred_region
          %s2446 = ssub.s32 128, 128
          %2447 = vsyncadd %s2438, %s2446
          %s2448 = smul.addr %s29, 128
          %s2449 = scalar_lea.hbm %s7, %s2448
          %s2451 = sshll.u32 %s2441, 4
          %s2452 = int_to_ptr.vmem [resolvable:$true] %s2451
          %2454 = dma.vmem_to_hbm [thread:$0]  %s2452, 128, %s2449, %s2438
        $region76: #{tpu_custom_call.1} parent=47 // pred_fallthru
          _
      $region48: #{tpu_custom_call.1} parent=5 // pred_fallthru
        _
      %p2455 = scmp.le.s32.totalorder 2, %s24
      // Predicated region
      $region77: #{tpu_custom_call.1} parent=5 // pred_check
        %p2456 = pneg %p2455
      $region78: #{tpu_custom_call.1} parent=5 // pred_check_branch
        %2458 = sbr.rel (%p2456) target = $region80
      $region79: #{tpu_custom_call.1} parent=5 // pred_region
        %s2459 = ssub.s32 %s24, 2
        // Predicated region
        $region81: #{tpu_custom_call.1} parent=79 // pred_check
          %p2460 = pneg %p210
        $region82: #{tpu_custom_call.1} parent=79 // pred_check_branch
          %2462 = sbr.rel (%p2460) target = $region84
        $region83: #{tpu_custom_call.1} parent=79 // pred_region
          %s2463 = sand.u32 %s195, 1
          %s2464 = scalar_lea.sflag [#allocation4], %s2463
          %s2465 = sand.u32 %s195, 1
          %s2466 = smul.addr %s2465, 8
          %s2467 = scalar_lea.vmem [#allocation13], %s2466
          %2468 = dma.done %s2464, 128
        $region84: #{tpu_custom_call.1} parent=79 // pred_fallthru
          _
      $region80: #{tpu_custom_call.1} parent=5 // pred_fallthru
        _
    $region6: #{tpu_custom_call.1} parent=1 // loop_footer
      %s28 = sadd.s32 1, %s24
    $region7: #{tpu_custom_call.1} parent=1 // loop_footer_branch
      %23 = sbr.rel target = $region3
    $region8: #{tpu_custom_call.1} parent=1 // loop_exit
      _
    %2469 = vsyncpa [#allocation3], 1
    %s2470 = scalar_lea.sflag [#allocation3], 1
    %2471 = vsyncpa %s2470, 1
    %2472 = vsyncpa [#allocation6], 1
    %s2473 = scalar_lea.sflag [#allocation6], 1
    %2474 = vsyncpa %s2473, 1
    %2475 = vsyncpa [#allocation9], 1
    %2476 = vsyncpa [#allocation12], 1
    %2477 = vsyncpa [#allocation4], 1
    %s2478 = scalar_lea.sflag [#allocation4], 1
    %2479 = vsyncpa %s2478, 1

// kernel: tpu_custom_call.1
$region0: #{tpu_custom_call.1}
  #allocation0 [shape = 'u32[]', space=smem, size = 0x4, offset = 0x4, fixed_abs, tag = 'smem constant byte address 0x4 - core index']
  #allocation1 [shape = 'u32[144,128]{1,0:T(1,128)}', space=vmem, size = 0x12000, scoped, tag = 'internal scratch']
  %s0 = inlined_call_operand.hbm [shape: f32[16,8,64], index: 0, kind: input, shape index: {}]
  %s1 = inlined_call_operand.hbm [shape: f32[16,32], index: 1, kind: input, shape index: {}]
  %s2 = inlined_call_operand.hbm [shape: f32[64,1024], index: 2, kind: input, shape index: {}]
  %s3 = inlined_call_operand.hbm [shape: f32[1,1024], index: 3, kind: input, shape index: {}]
  %s4 = inlined_call_operand.hbm [shape: f32[32,1024], index: 4, kind: input, shape index: {}]
  %s5 = inlined_call_operand.vmem [shape: f32[1,1024], index: 5, kind: input, shape index: {}]
  %s6 = inlined_call_operand.hbm [shape: f32[1,1024], index: 6, kind: input, shape index: {}]
  %s7 = inlined_call_operand.hbm [shape: f32[16,64], index: 7, kind: output, shape index: {}]
  %s8 = sld [smem:[#allocation0]]
  $region85: #{tpu_custom_call.1} parent=0
    _
  %s10 = ssub.s32 1, %s8
  %s11 = scalar_select 0, %s10, %s8
  $region1: #{tpu_custom_call.1} parent=0
    #allocation2 [shape = 'u8[65536]{0}', space=vmem, size = 0x10000, scoped, tag = 'input window, operand 0']
    #allocation3 [shape = 's32[2]{0}', space=sflag, size = 0x8, scoped, tag = 'scoped memory for tpu_custom_call.1']
    #allocation4 [shape = 's32[2]{0}', space=sflag, size = 0x8, scoped, tag = 'scoped memory for tpu_custom_call.1']
    #allocation5 [shape = 'u8[8192]{0}', space=vmem, size = 0x2000, scoped, tag = 'input window, operand 1']
    #allocation6 [shape = 's32[2]{0}', space=sflag, size = 0x8, scoped, tag = 'scoped memory for tpu_custom_call.1']
    #allocation7 [shape = 'u8[262144]{0}', space=vmem, size = 0x40000, scoped, tag = 'input window, operand 2, single buffered']
    #allocation8 [shape = 'u8[4096]{0}', space=vmem, size = 0x1000, scoped, tag = 'input window, operand 3, single buffered']
    #allocation9 [shape = 's32[1]{0}', space=sflag, size = 0x4, scoped, tag = 'scoped memory for tpu_custom_call.1']
    #allocation10 [shape = 'u8[131072]{0}', space=vmem, size = 0x20000, scoped, tag = 'input window, operand 4, single buffered']
    #allocation11 [shape = 'u8[4096]{0}', space=vmem, size = 0x1000, scoped, tag = 'input window, operand 6, single buffered']
    #allocation12 [shape = 's32[1]{0}', space=sflag, size = 0x4, scoped, tag = 'scoped memory for tpu_custom_call.1']
    #allocation13 [shape = 'u8[8192]{0}', space=vmem, size = 0x2000, scoped, tag = 'output window, operand 0']
    %12 = vsyncpa [#allocation3], 0
    %s13 = scalar_lea.sflag [#allocation3], 1
    %14 = vsyncpa %s13, 0
    %15 = vsyncpa [#allocation6], 0
    %s16 = scalar_lea.sflag [#allocation6], 1
    %17 = vsyncpa %s16, 0
    %18 = vsyncpa [#allocation9], 0
    %19 = vsyncpa [#allocation12], 0
    %20 = vsyncpa [#allocation4], 0
    %s21 = scalar_lea.sflag [#allocation4], 1
    %22 = vsyncpa %s21, 0
    loop: start=0, step=1, limit=4
    $region2: #{tpu_custom_call.1} parent=1 // loop_pre_header
      _
    $region3: #{tpu_custom_call.1} parent=1 // loop_header
      %s24 = sphi 0, %s28
      %p25 = scmp.ge.s32.totalorder %s24, 4
      %s34 = sphi 0, %s36
      %s37 = sphi 0, %s34
      %s38 = sphi 0, %s37
      %s54 = sphi 0, %s38
      %s60 = sphi 0, %s62
      %s63 = sphi 0, %s60
      %s64 = sphi 0, %s63
      %s80 = sphi 0, %s64
      %s84 = sphi 0, %s84
      %s86 = sphi 0, %s84
      %s87 = sphi 0, %s86
      %s101 = sphi 0, %s87
      %s105 = sphi 0, %s105
      %s107 = sphi 0, %s105
      %s108 = sphi 0, %s107
      %s122 = sphi 0, %s108
      %s126 = sphi 0, %s126
      %s128 = sphi 0, %s126
      %s129 = sphi 0, %s128
      %s143 = sphi 0, %s129
      %s147 = sphi 0, %s147
      %s149 = sphi 0, %s147
      %s150 = sphi 0, %s149
      %s164 = sphi 0, %s150
      %s168 = sphi 0, %s168
      %s170 = sphi 0, %s168
      %s171 = sphi 0, %s170
      %s185 = sphi 0, %s171
      %s191 = sphi 0, %s193
      %s194 = sphi 0, %s191
      %s195 = sphi 0, %s194
      %s211 = sphi 0, %s195
    $region4: #{tpu_custom_call.1} parent=1 // loop_header_branch
      %27 = sbr.rel (%p25) target = $region8
    $region5: #{tpu_custom_call.1} parent=1 // loop_body
      %s29 = ssub.s32 %s24, 1
      %s30 = ssub.s32 %s24, 2
      %s31 = sadd.s32 %s24, 1
      %s32 = ssub.s32 %s24, %s31
      %p33 = scmp.eq.s32.totalorder %s32, 0
      %s35 = sadd.s32 %s34, 1
      %s36 = scalar_select %p33, %s34, %s35
      %p39 = pneg %p33
      %p40 = scmp.eq.s32.totalorder %s24, 1
      %p41 = por %p39, %p40
      %p42 = scmp.ne.s32.totalorder %s34, %s37
      %p43 = scmp.eq.s32.totalorder %s24, 0
      %p44 = por %p42, %p43
      %p45 = scmp.ne.s32.totalorder %s34, %s37
      %p46 = scmp.eq.s32.totalorder %s29, 1
      %p47 = por %p45, %p46
      %p48 = scmp.ne.s32.totalorder %s37, %s38
      %p49 = scmp.eq.s32.totalorder %s29, 0
      %p50 = por %p48, %p49
      %p51 = scmp.ne.s32.totalorder %s37, %s38
      %p52 = scmp.eq.s32.totalorder %s30, 1
      %p53 = por %p51, %p52
      %p55 = scmp.ne.s32.totalorder %s38, %s54
      %p56 = scmp.eq.s32.totalorder %s30, 0
      %p57 = por %p55, %p56
      %s58 = ssub.s32 %s24, %s31
      %p59 = scmp.eq.s32.totalorder %s58, 0
      %s61 = sadd.s32 %s60, 1
      %s62 = scalar_select %p59, %s60, %s61
      %p65 = pneg %p59
      %p66 = scmp.eq.s32.totalorder %s24, 1
      %p67 = por %p65, %p66
      %p68 = scmp.ne.s32.totalorder %s60, %s63
      %p69 = scmp.eq.s32.totalorder %s24, 0
      %p70 = por %p68, %p69
      %p71 = scmp.ne.s32.totalorder %s60, %s63
      %p72 = scmp.eq.s32.totalorder %s29, 1
      %p73 = por %p71, %p72
      %p74 = scmp.ne.s32.totalorder %s63, %s64
      %p75 = scmp.eq.s32.totalorder %s29, 0
      %p76 = por %p74, %p75
      %p77 = scmp.ne.s32.totalorder %s63, %s64
      %p78 = scmp.eq.s32.totalorder %s30, 1
      %p79 = por %p77, %p78
      %p81 = scmp.ne.s32.totalorder %s64, %s80
      %p82 = scmp.eq.s32.totalorder %s30, 0
      %p83 = por %p81, %p82
      %s85 = sadd.s32 %s84, 1
      %p88 = scmp.eq.s32.totalorder %s24, 1
      %p89 = scmp.ne.s32.totalorder %s84, %s86
      %p90 = scmp.eq.s32.totalorder %s24, 0
      %p91 = por %p89, %p90
      %p92 = scmp.ne.s32.totalorder %s84, %s86
      %p93 = scmp.eq.s32.totalorder %s29, 1
      %p94 = por %p92, %p93
      %p95 = scmp.ne.s32.totalorder %s86, %s87
      %p96 = scmp.eq.s32.totalorder %s29, 0
      %p97 = por %p95, %p96
      %p98 = scmp.ne.s32.totalorder %s86, %s87
      %p99 = scmp.eq.s32.totalorder %s30, 1
      %p100 = por %p98, %p99
      %p102 = scmp.ne.s32.totalorder %s87, %s101
      %p103 = scmp.eq.s32.totalorder %s30, 0
      %p104 = por %p102, %p103
      %s106 = sadd.s32 %s105, 1
      %p109 = scmp.eq.s32.totalorder %s24, 1
      %p110 = scmp.ne.s32.totalorder %s105, %s107
      %p111 = scmp.eq.s32.totalorder %s24, 0
      %p112 = por %p110, %p111
      %p113 = scmp.ne.s32.totalorder %s105, %s107
      %p114 = scmp.eq.s32.totalorder %s29, 1
      %p115 = por %p113, %p114
      %p116 = scmp.ne.s32.totalorder %s107, %s108
      %p117 = scmp.eq.s32.totalorder %s29, 0
      %p118 = por %p116, %p117
      %p119 = scmp.ne.s32.totalorder %s107, %s108
      %p120 = scmp.eq.s32.totalorder %s30, 1
      %p121 = por %p119, %p120
      %p123 = scmp.ne.s32.totalorder %s108, %s122
      %p124 = scmp.eq.s32.totalorder %s30, 0
      %p125 = por %p123, %p124
      %s127 = sadd.s32 %s126, 1
      %p130 = scmp.eq.s32.totalorder %s24, 1
      %p131 = scmp.ne.s32.totalorder %s126, %s128
      %p132 = scmp.eq.s32.totalorder %s24, 0
      %p133 = por %p131, %p132
      %p134 = scmp.ne.s32.totalorder %s126, %s128
      %p135 = scmp.eq.s32.totalorder %s29, 1
      %p136 = por %p134, %p135
      %p137 = scmp.ne.s32.totalorder %s128, %s129
      %p138 = scmp.eq.s32.totalorder %s29, 0
      %p139 = por %p137, %p138
      %p140 = scmp.ne.s32.totalorder %s128, %s129
      %p141 = scmp.eq.s32.totalorder %s30, 1
      %p142 = por %p140, %p141
      %p144 = scmp.ne.s32.totalorder %s129, %s143
      %p145 = scmp.eq.s32.totalorder %s30, 0
      %p146 = por %p144, %p145
      %s148 = sadd.s32 %s147, 1
      %p151 = scmp.eq.s32.totalorder %s24, 1
      %p152 = scmp.ne.s32.totalorder %s147, %s149
      %p153 = scmp.eq.s32.totalorder %s24, 0
      %p154 = por %p152, %p153
      %p155 = scmp.ne.s32.totalorder %s147, %s149
      %p156 = scmp.eq.s32.totalorder %s29, 1
      %p157 = por %p155, %p156
      %p158 = scmp.ne.s32.totalorder %s149, %s150
      %p159 = scmp.eq.s32.totalorder %s29, 0
      %p160 = por %p158, %p159
      %p161 = scmp.ne.s32.totalorder %s149, %s150
      %p162 = scmp.eq.s32.totalorder %s30, 1
      %p163 = por %p161, %p162
      %p165 = scmp.ne.s32.totalorder %s150, %s164
      %p166 = scmp.eq.s32.totalorder %s30, 0
      %p167 = por %p165, %p166
      %s169 = sadd.s32 %s168, 1
      %p172 = scmp.eq.s32.totalorder %s24, 1
      %p173 = scmp.ne.s32.totalorder %s168, %s170
      %p174 = scmp.eq.s32.totalorder %s24, 0
      %p175 = por %p173, %p174
      %p176 = scmp.ne.s32.totalorder %s168, %s170
      %p177 = scmp.eq.s32.totalorder %s29, 1
      %p178 = por %p176, %p177
      %p179 = scmp.ne.s32.totalorder %s170, %s171
      %p180 = scmp.eq.s32.totalorder %s29, 0
      %p181 = por %p179, %p180
      %p182 = scmp.ne.s32.totalorder %s170, %s171
      %p183 = scmp.eq.s32.totalorder %s30, 1
      %p184 = por %p182, %p183
      %p186 = scmp.ne.s32.totalorder %s171, %s185
      %p187 = scmp.eq.s32.totalorder %s30, 0
      %p188 = por %p186, %p187
      %s189 = ssub.s32 %s24, %s31
      %p190 = scmp.eq.s32.totalorder %s189, 0
      %s192 = sadd.s32 %s191, 1
      %s193 = scalar_select %p190, %s191, %s192
      %p196 = pneg %p190
      %p197 = scmp.eq.s32.totalorder %s24, 1
      %p198 = por %p196, %p197
      %p199 = scmp.ne.s32.totalorder %s191, %s194
      %p200 = scmp.eq.s32.totalorder %s24, 0
      %p201 = por %p199, %p200
      %p202 = scmp.ne.s32.totalorder %s191, %s194
      %p203 = scmp.eq.s32.totalorder %s29, 1
      %p204 = por %p202, %p203
      %p205 = scmp.ne.s32.totalorder %s194, %s195
      %p206 = scmp.eq.s32.totalorder %s29, 0
      %p207 = por %p205, %p206
      %p208 = scmp.ne.s32.totalorder %s194, %s195
      %p209 = scmp.eq.s32.totalorder %s30, 1
      %p210 = por %p208, %p209
      %p212 = scmp.ne.s32.totalorder %s195, %s211
      %p213 = scmp.eq.s32.totalorder %s30, 0
      %p214 = por %p212, %p213
      %p215 = scmp.le.s32.totalorder 1, %s24
      %p216 = scmp.lt.s32.totalorder %s24, 3
      %p217 = pnand %p215, %p216
      %p218 = pneg %p217
      // Predicated region
      $region9: #{tpu_custom_call.1} parent=5 // pred_check
        _
      $region10: #{tpu_custom_call.1} parent=5 // pred_check_branch
        %220 = sbr.rel (%p217) target = $region12
      $region11: #{tpu_custom_call.1} parent=5 // pred_region
        %s221 = ssub.s32 %s24, 1
        // Predicated region
        $region13: #{tpu_custom_call.1} parent=11 // pred_check
          %p222 = pneg %p97
        $region14: #{tpu_custom_call.1} parent=11 // pred_check_branch
          %224 = sbr.rel (%p222) target = $region16
        $region15: #{tpu_custom_call.1} parent=11 // pred_region
          %s226 = ssub.s32 8192, 8192
          %227 = vsyncadd [#allocation6], %s226
          %s228 = sshll.u32 [#allocation7], 4
          %s229 = int_to_ptr.vmem [resolvable:$true] %s228
          %234 = dma.hbm_to_vmem [thread:$0]  %s2, 8192, %s229, [#allocation6], 1024, 1024, 64
        $region16: #{tpu_custom_call.1} parent=11 // pred_fallthru
          _
        // Predicated region
        $region17: #{tpu_custom_call.1} parent=11 // pred_check
          %p235 = pneg %p118
        $region18: #{tpu_custom_call.1} parent=11 // pred_check_branch
          %237 = sbr.rel (%p235) target = $region20
        $region19: #{tpu_custom_call.1} parent=11 // pred_region
          %s239 = ssub.s32 128, 128
          %240 = vsyncadd [#allocation9], %s239
          %s242 = sshll.u32 [#allocation8], 4
          %s243 = int_to_ptr.vmem [resolvable:$true] %s242
          %245 = dma.hbm_to_vmem [thread:$0]  %s3, 128, %s243, [#allocation9]
        $region20: #{tpu_custom_call.1} parent=11 // pred_fallthru
          _
        // Predicated region
        $region21: #{tpu_custom_call.1} parent=11 // pred_check
          %p246 = pneg %p139
        $region22: #{tpu_custom_call.1} parent=11 // pred_check_branch
          %248 = sbr.rel (%p246) target = $region24
        $region23: #{tpu_custom_call.1} parent=11 // pred_region
          %s250 = ssub.s32 4096, 4096
          %251 = vsyncadd [#allocation9], %s250
          %s252 = sshll.u32 [#allocation10], 4
          %s253 = int_to_ptr.vmem [resolvable:$true] %s252
          %258 = dma.hbm_to_vmem [thread:$0]  %s4, 4096, %s253, [#allocation9], 1024, 1024, 64
        $region24: #{tpu_custom_call.1} parent=11 // pred_fallthru
          _
        // Predicated region
        $region25: #{tpu_custom_call.1} parent=11 // pred_check
          %p259 = pneg %p160
        $region26: #{tpu_custom_call.1} parent=11 // pred_check_branch
          %261 = sbr.rel (%p259) target = $region28
        $region27: #{tpu_custom_call.1} parent=11 // pred_region
          _
        $region28: #{tpu_custom_call.1} parent=11 // pred_fallthru
          _
        // Predicated region
        $region29: #{tpu_custom_call.1} parent=11 // pred_check
          %p262 = pneg %p181
        $region30: #{tpu_custom_call.1} parent=11 // pred_check_branch
          %264 = sbr.rel (%p262) target = $region32
        $region31: #{tpu_custom_call.1} parent=11 // pred_region
          %s266 = ssub.s32 128, 128
          %267 = vsyncadd [#allocation12], %s266
          %s269 = sshll.u32 [#allocation11], 4
          %s270 = int_to_ptr.vmem [resolvable:$true] %s269
          %272 = dma.hbm_to_vmem [thread:$0]  %s6, 128, %s270, [#allocation12]
        $region32: #{tpu_custom_call.1} parent=11 // pred_fallthru
          _
      $region12: #{tpu_custom_call.1} parent=5 // pred_fallthru
        _
      %p273 = scmp.lt.s32.totalorder %s24, 2
      // Predicated region
      $region33: #{tpu_custom_call.1} parent=5 // pred_check
        %p274 = pneg %p273
      $region34: #{tpu_custom_call.1} parent=5 // pred_check_branch
        %276 = sbr.rel (%p274) target = $region36
      $region35: #{tpu_custom_call.1} parent=5 // pred_region
        // Predicated region
        $region37: #{tpu_custom_call.1} parent=35 // pred_check
          %p277 = pneg %p44
        $region38: #{tpu_custom_call.1} parent=35 // pred_check_branch
          %279 = sbr.rel (%p277) target = $region40
        $region39: #{tpu_custom_call.1} parent=35 // pred_region
          %s280 = sand.u32 %s34, 1
          %s281 = scalar_lea.sflag [#allocation3], %s280
          %s282 = sand.u32 %s34, 1
          %s283 = smul.addr %s282, 64
          %s284 = scalar_lea.vmem [#allocation2], %s283
          %s285 = smul.u32 8, %s24
          %s287 = ssub.s32 1024, 1024
          %288 = vsyncadd %s281, %s287
          %s289 = smul.addr %s285, 128
          %s290 = scalar_lea.hbm %s0, %s289
          %s291 = sshll.u32 %s284, 4
          %s292 = int_to_ptr.vmem [resolvable:$true] %s291
          %297 = dma.hbm_to_vmem [thread:$0]  %s290, 1024, %s292, %s281, 128, 128, 8
        $region40: #{tpu_custom_call.1} parent=35 // pred_fallthru
          _
        // Predicated region
        $region41: #{tpu_custom_call.1} parent=35 // pred_check
          %p298 = pneg %p70
        $region42: #{tpu_custom_call.1} parent=35 // pred_check_branch
          %300 = sbr.rel (%p298) target = $region44
        $region43: #{tpu_custom_call.1} parent=35 // pred_region
          %s301 = sand.u32 %s24, 1
          %s302 = scalar_lea.sflag [#allocation6], %s301
          %s303 = sand.u32 %s60, 1
          %s304 = smul.addr %s303, 8
          %s305 = scalar_lea.vmem [#allocation5], %s304
          %s307 = ssub.s32 128, 128
          %308 = vsyncadd %s302, %s307
          %s309 = smul.addr %s24, 128
          %s310 = scalar_lea.hbm %s1, %s309
          %s312 = sshll.u32 %s305, 4
          %s313 = int_to_ptr.vmem [resolvable:$true] %s312
          %315 = dma.hbm_to_vmem [thread:$0]  %s310, 128, %s313, %s302
        $region44: #{tpu_custom_call.1} parent=35 // pred_fallthru
          _
      $region36: #{tpu_custom_call.1} parent=5 // pred_fallthru
        _
      %p316 = scmp.le.s32.totalorder 1, %s24
      %p317 = scmp.lt.s32.totalorder %s24, 3
      %p318 = pnand %p316, %p317
      %p319 = pneg %p318
      // Predicated region
      $region45: #{tpu_custom_call.1} parent=5 // pred_check
        _
      $region46: #{tpu_custom_call.1} parent=5 // pred_check_branch
        %321 = sbr.rel (%p318) target = $region48
      $region47: #{tpu_custom_call.1} parent=5 // pred_region
        %s322 = ssub.s32 %s24, 1
        %s323 = sand.u32 %s37, 1
        %s324 = scalar_lea.sflag [#allocation3], %s323
        %s325 = sand.u32 %s37, 1
        %s326 = smul.addr %s325, 64
        %s327 = scalar_lea.vmem [#allocation2], %s326
        // Predicated region
        $region49: #{tpu_custom_call.1} parent=47 // pred_check
          %p328 = pneg %p50
        $region50: #{tpu_custom_call.1} parent=47 // pred_check_branch
          %330 = sbr.rel (%p328) target = $region52
        $region51: #{tpu_custom_call.1} parent=47 // pred_region
          %331 = dma.done %s324, 1024
        $region52: #{tpu_custom_call.1} parent=47 // pred_fallthru
          _
        %s332 = sand.u32 %s29, 1
        %s333 = scalar_lea.sflag [#allocation6], %s332
        %s334 = sand.u32 %s63, 1
        %s335 = smul.addr %s334, 8
        %s336 = scalar_lea.vmem [#allocation5], %s335
        // Predicated region
        $region53: #{tpu_custom_call.1} parent=47 // pred_check
          %p337 = pneg %p76
        $region54: #{tpu_custom_call.1} parent=47 // pred_check_branch
          %339 = sbr.rel (%p337) target = $region56
        $region55: #{tpu_custom_call.1} parent=47 // pred_region
          %340 = dma.done %s333, 128
        $region56: #{tpu_custom_call.1} parent=47 // pred_fallthru
          _
        // Predicated region
        $region57: #{tpu_custom_call.1} parent=47 // pred_check
          %p341 = pneg %p97
        $region58: #{tpu_custom_call.1} parent=47 // pred_check_branch
          %343 = sbr.rel (%p341) target = $region60
        $region59: #{tpu_custom_call.1} parent=47 // pred_region
          %344 = dma.done [#allocation6], 8192
        $region60: #{tpu_custom_call.1} parent=47 // pred_fallthru
          _
        // Predicated region
        $region61: #{tpu_custom_call.1} parent=47 // pred_check
          %p345 = pneg %p118
        $region62: #{tpu_custom_call.1} parent=47 // pred_check_branch
          %347 = sbr.rel (%p345) target = $region64
        $region63: #{tpu_custom_call.1} parent=47 // pred_region
          %348 = dma.done [#allocation9], 128
        $region64: #{tpu_custom_call.1} parent=47 // pred_fallthru
          _
        // Predicated region
        $region65: #{tpu_custom_call.1} parent=47 // pred_check
          %p349 = pneg %p139
        $region66: #{tpu_custom_call.1} parent=47 // pred_check_branch
          %351 = sbr.rel (%p349) target = $region68
        $region67: #{tpu_custom_call.1} parent=47 // pred_region
          %352 = dma.done [#allocation9], 4096
        $region68: #{tpu_custom_call.1} parent=47 // pred_fallthru
          _
        // Predicated region
        $region69: #{tpu_custom_call.1} parent=47 // pred_check
          %p353 = pneg %p181
        $region70: #{tpu_custom_call.1} parent=47 // pred_check_branch
          %355 = sbr.rel (%p353) target = $region72
        $region71: #{tpu_custom_call.1} parent=47 // pred_region
          %356 = dma.done [#allocation12], 128
        $region72: #{tpu_custom_call.1} parent=47 // pred_fallthru
          _
        %s357 = sand.u32 %s37, 1
        %s358 = scalar_lea.sflag [#allocation3], %s357
        %s359 = sand.u32 %s37, 1
        %s360 = smul.addr %s359, 64
        %s361 = scalar_lea.vmem [#allocation2], %s360
        %p362 = pneg %p50
        %p363 = pneg %p47
        %s364 = sand.u32 %s29, 1
        %s365 = scalar_lea.sflag [#allocation6], %s364
        %s366 = sand.u32 %s63, 1
        %s367 = smul.addr %s366, 8
        %s368 = scalar_lea.vmem [#allocation5], %s367
        %p369 = pneg %p76
        %p370 = pneg %p73
        %p371 = pneg %p97
        %p372 = pneg %p94
        %p373 = pneg %p118
        %p374 = pneg %p115
        %p375 = pneg %p139
        %p376 = pneg %p136
        %p377 = pneg %p160
        %p378 = pneg %p157
        %p379 = pneg %p181
        %p380 = pneg %p178
        %p381 = pneg %p207
        %p382 = pneg %p204
        %s383 = sand.u32 %s194, 1
        %s384 = scalar_lea.sflag [#allocation4], %s383
        %s385 = sand.u32 %s194, 1
        %s386 = smul.addr %s385, 8
        %s387 = scalar_lea.vmem [#allocation13], %s386
        %s388 = smul.u32 8, %s29
        %v389 = vld [vmem:[%s327] sm:$0xff]
        %v390 = vld [vmem:[%s327 + $0x8] sm:$0xff]
        %v391 = vld [vmem:[%s327 + $0x10] sm:$0xff]
        %v392 = vld [vmem:[%s327 + $0x18] sm:$0xff]
        %v393 = vld [vmem:[%s327 + $0x20] sm:$0xff]
        %v394 = vld [vmem:[%s327 + $0x28] sm:$0xff]
        %v395 = vld [vmem:[%s327 + $0x30] sm:$0xff]
        %v396 = vld [vmem:[%s327 + $0x38] sm:$0xff]
        %v397 = vld [vmem:[#allocation7] sm:$0xff]
        %v398 = vld [vmem:[#allocation7 + $0x8] sm:$0xff]
        %v399 = vld [vmem:[#allocation7 + $0x10] sm:$0xff]
        %v400 = vld [vmem:[#allocation7 + $0x18] sm:$0xff]
        %v401 = vld [vmem:[#allocation7 + $0x20] sm:$0xff]
        %v402 = vld [vmem:[#allocation7 + $0x28] sm:$0xff]
        %v403 = vld [vmem:[#allocation7 + $0x30] sm:$0xff]
        %v404 = vld [vmem:[#allocation7 + $0x38] sm:$0xff]
        %v405 = vld [vmem:[#allocation7 + $0x40] sm:$0xff]
        %v406 = vld [vmem:[#allocation7 + $0x48] sm:$0xff]
        %v407 = vld [vmem:[#allocation7 + $0x50] sm:$0xff]
        %v408 = vld [vmem:[#allocation7 + $0x58] sm:$0xff]
        %v409 = vld [vmem:[#allocation7 + $0x60] sm:$0xff]
        %v410 = vld [vmem:[#allocation7 + $0x68] sm:$0xff]
        %v411 = vld [vmem:[#allocation7 + $0x70] sm:$0xff]
        %v412 = vld [vmem:[#allocation7 + $0x78] sm:$0xff]
        %v413 = vld [vmem:[#allocation7 + $0x80] sm:$0xff]
        %v414 = vld [vmem:[#allocation7 + $0x88] sm:$0xff]
        %v415 = vld [vmem:[#allocation7 + $0x90] sm:$0xff]
        %v416 = vld [vmem:[#allocation7 + $0x98] sm:$0xff]
        %v417 = vld [vmem:[#allocation7 + $0xa0] sm:$0xff]
        %v418 = vld [vmem:[#allocation7 + $0xa8] sm:$0xff]
        %v419 = vld [vmem:[#allocation7 + $0xb0] sm:$0xff]
        %v420 = vld [vmem:[#allocation7 + $0xb8] sm:$0xff]
        %v421 = vld [vmem:[#allocation7 + $0xc0] sm:$0xff]
        %v422 = vld [vmem:[#allocation7 + $0xc8] sm:$0xff]
        %v423 = vld [vmem:[#allocation7 + $0xd0] sm:$0xff]
        %v424 = vld [vmem:[#allocation7 + $0xd8] sm:$0xff]
        %v425 = vld [vmem:[#allocation7 + $0xe0] sm:$0xff]
        %v426 = vld [vmem:[#allocation7 + $0xe8] sm:$0xff]
        %v427 = vld [vmem:[#allocation7 + $0xf0] sm:$0xff]
        %v428 = vld [vmem:[#allocation7 + $0xf8] sm:$0xff]
        %v429 = vld [vmem:[#allocation7 + $0x100] sm:$0xff]
        %v430 = vld [vmem:[#allocation7 + $0x108] sm:$0xff]
        %v431 = vld [vmem:[#allocation7 + $0x110] sm:$0xff]
        %v432 = vld [vmem:[#allocation7 + $0x118] sm:$0xff]
        %v433 = vld [vmem:[#allocation7 + $0x120] sm:$0xff]
        %v434 = vld [vmem:[#allocation7 + $0x128] sm:$0xff]
        %v435 = vld [vmem:[#allocation7 + $0x130] sm:$0xff]
        %v436 = vld [vmem:[#allocation7 + $0x138] sm:$0xff]
        %v437 = vld [vmem:[#allocation7 + $0x140] sm:$0xff]
        %v438 = vld [vmem:[#allocation7 + $0x148] sm:$0xff]
        %v439 = vld [vmem:[#allocation7 + $0x150] sm:$0xff]
        %v440 = vld [vmem:[#allocation7 + $0x158] sm:$0xff]
        %v441 = vld [vmem:[#allocation7 + $0x160] sm:$0xff]
        %v442 = vld [vmem:[#allocation7 + $0x168] sm:$0xff]
        %v443 = vld [vmem:[#allocation7 + $0x170] sm:$0xff]
        %v444 = vld [vmem:[#allocation7 + $0x178] sm:$0xff]
        %v445 = vld [vmem:[#allocation7 + $0x180] sm:$0xff]
        %v446 = vld [vmem:[#allocation7 + $0x188] sm:$0xff]
        %v447 = vld [vmem:[#allocation7 + $0x190] sm:$0xff]
        %v448 = vld [vmem:[#allocation7 + $0x198] sm:$0xff]
        %v449 = vld [vmem:[#allocation7 + $0x1a0] sm:$0xff]
        %v450 = vld [vmem:[#allocation7 + $0x1a8] sm:$0xff]
        %v451 = vld [vmem:[#allocation7 + $0x1b0] sm:$0xff]
        %v452 = vld [vmem:[#allocation7 + $0x1b8] sm:$0xff]
        %v453 = vld [vmem:[#allocation7 + $0x1c0] sm:$0xff]
        %v454 = vld [vmem:[#allocation7 + $0x1c8] sm:$0xff]
        %v455 = vld [vmem:[#allocation7 + $0x1d0] sm:$0xff]
        %v456 = vld [vmem:[#allocation7 + $0x1d8] sm:$0xff]
        %v457 = vld [vmem:[#allocation7 + $0x1e0] sm:$0xff]
        %v458 = vld [vmem:[#allocation7 + $0x1e8] sm:$0xff]
        %v459 = vld [vmem:[#allocation7 + $0x1f0] sm:$0xff]
        %v460 = vld [vmem:[#allocation7 + $0x1f8] sm:$0xff]
        %v461 = vld [vmem:[#allocation8] sm:$0xff]
        %v463 = vlaneseq
        %v464 = vshrl.u32 %v463, 7
        %v465 = vsub.s32 0, %v464
        %v466 = vrot.slane %v461, %v465
        %v467 = vlaneseq
        %v468 = vshrl.u32 %v467, 7
        %v469 = vsub.s32 1, %v468
        %v470 = vrot.slane %v461, %v469
        %v471 = vlaneseq
        %v472 = vshrl.u32 %v471, 7
        %v473 = vsub.s32 2, %v472
        %v474 = vrot.slane %v461, %v473
        %v475 = vlaneseq
        %v476 = vshrl.u32 %v475, 7
        %v477 = vsub.s32 3, %v476
        %v478 = vrot.slane %v461, %v477
        %v479 = vlaneseq
        %v480 = vshrl.u32 %v479, 7
        %v481 = vsub.s32 4, %v480
        %v482 = vrot.slane %v461, %v481
        %v483 = vlaneseq
        %v484 = vshrl.u32 %v483, 7
        %v485 = vsub.s32 5, %v484
        %v486 = vrot.slane %v461, %v485
        %v487 = vlaneseq
        %v488 = vshrl.u32 %v487, 7
        %v489 = vsub.s32 6, %v488
        %v490 = vrot.slane %v461, %v489
        %v491 = vlaneseq
        %v492 = vshrl.u32 %v491, 7
        %v493 = vsub.s32 7, %v492
        %v494 = vrot.slane %v461, %v493
        %vm503 = vcmask 523264
        %v505 = vsel %vm503, %v389, 0
        %v508 = vsel %vm503, %v390, 0
        %v511 = vsel %vm503, %v391, 0
        %v514 = vsel %vm503, %v392, 0
        %v517 = vsel %vm503, %v393, 0
        %v520 = vsel %vm503, %v394, 0
        %v523 = vsel %vm503, %v395, 0
        %v526 = vsel %vm503, %v396, 0
        %528 = vmatprep.subr.mxu0 0.0
        %529 = vmatpush1.msra.mxu0 0.0
        %530 = vmatprep.subr.mxu0 0.0
        %531 = vmatpush1.msra.mxu0 0.0
        %532 = vmatprep.subr.mxu0 0.0
        %533 = vmatpush1.msra.mxu0 0.0
        %534 = vmatprep.subr.mxu0 0.0
        %535 = vmatpush1.msra.mxu0 0.0
        %536 = vmatprep.subr.mxu0 0.0
        %537 = vmatpush1.msra.mxu0 0.0
        %538 = vmatprep.subr.mxu0 0.0
        %539 = vmatpush1.msra.mxu0 0.0
        %540 = vmatprep.subr.mxu0 0.0
        %541 = vmatpush1.msra.mxu0 0.0
        %542 = vmatprep.subr.mxu0 0.0
        %543 = vmatpush1.msra.mxu0 0.0
        %544 = vmatprep.subr.mxu0 %v454
        %545 = vmatpush1.msra.mxu0 %v453
        %546 = vmatprep.subr.mxu0 %v446
        %547 = vmatpush1.msra.mxu0 %v445
        %548 = vmatprep.subr.mxu0 %v438
        %549 = vmatpush1.msra.mxu0 %v437
        %550 = vmatprep.subr.mxu0 %v430
        %551 = vmatpush1.msra.mxu0 %v429
        %552 = vmatprep.subr.mxu0 %v422
        %553 = vmatpush1.msra.mxu0 %v421
        %554 = vmatprep.subr.mxu0 %v414
        %555 = vmatpush1.msra.mxu0 %v413
        %556 = vmatprep.subr.mxu0 %v406
        %557 = vmatpush1.msra.mxu0 %v405
        %558 = vmatprep.subr.mxu0 %v398
        %559 = vmatpush1.msra.mxu0 %v397
        %560 = vmatprep.subr.mxu0 0.0
        %561 = vmatpush2.msra.mxu0 0.0
        %562 = vmatprep.subr.mxu0 0.0
        %563 = vmatpush2.msra.mxu0 0.0
        %564 = vmatprep.subr.mxu0 0.0
        %565 = vmatpush2.msra.mxu0 0.0
        %566 = vmatprep.subr.mxu0 0.0
        %567 = vmatpush2.msra.mxu0 0.0
        %568 = vmatprep.subr.mxu0 0.0
        %569 = vmatpush2.msra.mxu0 0.0
        %570 = vmatprep.subr.mxu0 0.0
        %571 = vmatpush2.msra.mxu0 0.0
        %572 = vmatprep.subr.mxu0 0.0
        %573 = vmatpush2.msra.mxu0 0.0
        %574 = vmatprep.subr.mxu0 0.0
        %575 = vmatpush2.msra.mxu0 0.0
        %576 = vmatprep.subr.mxu0 0.0
        %577 = vmatpush2.msra.mxu0 0.0
        %578 = vmatprep.subr.mxu0 0.0
        %579 = vmatpush2.msra.mxu0 0.0
        %580 = vmatprep.subr.mxu0 0.0
        %581 = vmatpush2.msra.mxu0 0.0
        %582 = vmatprep.subr.mxu0 0.0
        %583 = vmatpush2.msra.mxu0 0.0
        %584 = vmatprep.subr.mxu0 0.0
        %585 = vmatpush2.msra.mxu0 0.0
        %586 = vmatprep.subr.mxu0 0.0
        %587 = vmatpush2.msra.mxu0 0.0
        %588 = vmatprep.subr.mxu0 0.0
        %589 = vmatpush2.msra.mxu0 0.0
        %590 = vmatprep.subr.mxu0 0.0
        %591 = vmatpush2.msra.mxu0 0.0
        %592 = vmatprep.mubr.f32.mxu0 0.0
        %593 = vmatmul.mubr.f32.gmra.mxu0 %v505
        %v594 = vpop.f32.mrf.mxu0
        %v595 = vadd.f32 %v466, %v594
        %v596 = vpop.f32.mrf.mxu0
        %v597 = vadd.f32 %v470, %v596
        %598 = vmatprep.mubr.f32.mxu0 0.0
        %599 = vmatmul.mubr.f32.gmra.mxu0 %v508
        %v600 = vpop.f32.mrf.mxu0
        %v601 = vadd.f32 %v466, %v600
        %v602 = vpop.f32.mrf.mxu0
        %v603 = vadd.f32 %v470, %v602
        %604 = vmatprep.mubr.f32.mxu0 0.0
        %605 = vmatmul.mubr.f32.gmra.mxu0 %v511
        %v606 = vpop.f32.mrf.mxu0
        %v607 = vadd.f32 %v466, %v606
        %v608 = vpop.f32.mrf.mxu0
        %v609 = vadd.f32 %v470, %v608
        %610 = vmatprep.mubr.f32.mxu0 0.0
        %611 = vmatmul.mubr.f32.gmra.mxu0 %v514
        %v612 = vpop.f32.mrf.mxu0
        %v613 = vadd.f32 %v466, %v612
        %v614 = vpop.f32.mrf.mxu0
        %v615 = vadd.f32 %v470, %v614
        %616 = vmatprep.mubr.f32.mxu0 0.0
        %617 = vmatmul.mubr.f32.gmra.mxu0 %v517
        %v618 = vpop.f32.mrf.mxu0
        %v619 = vadd.f32 %v466, %v618
        %v620 = vpop.f32.mrf.mxu0
        %v621 = vadd.f32 %v470, %v620
        %622 = vmatprep.mubr.f32.mxu0 0.0
        %623 = vmatmul.mubr.f32.gmra.mxu0 %v520
        %v624 = vpop.f32.mrf.mxu0
        %v625 = vadd.f32 %v466, %v624
        %v626 = vpop.f32.mrf.mxu0
        %v627 = vadd.f32 %v470, %v626
        %628 = vmatprep.mubr.f32.mxu0 0.0
        %629 = vmatmul.mubr.f32.gmra.mxu0 %v523
        %v630 = vpop.f32.mrf.mxu0
        %v631 = vadd.f32 %v466, %v630
        %v632 = vpop.f32.mrf.mxu0
        %v633 = vadd.f32 %v470, %v632
        %634 = vmatprep.mubr.f32.mxu0 0.0
        %635 = vmatmul.mubr.f32.gmra.mxu0 %v526
        %v636 = vpop.f32.mrf.mxu0
        %v637 = vadd.f32 %v466, %v636
        %v638 = vpop.f32.mrf.mxu0
        %v639 = vadd.f32 %v470, %v638
        %640 = vdwg.mxu0
        %641 = vmatprep.subr.mxu0 0.0
        %642 = vmatpush1.msra.mxu0 0.0
        %643 = vmatprep.subr.mxu0 0.0
        %644 = vmatpush1.msra.mxu0 0.0
        %645 = vmatprep.subr.mxu0 0.0
        %646 = vmatpush1.msra.mxu0 0.0
        %647 = vmatprep.subr.mxu0 0.0
        %648 = vmatpush1.msra.mxu0 0.0
        %649 = vmatprep.subr.mxu0 0.0
        %650 = vmatpush1.msra.mxu0 0.0
        %651 = vmatprep.subr.mxu0 0.0
        %652 = vmatpush1.msra.mxu0 0.0
        %653 = vmatprep.subr.mxu0 0.0
        %654 = vmatpush1.msra.mxu0 0.0
        %655 = vmatprep.subr.mxu0 0.0
        %656 = vmatpush1.msra.mxu0 0.0
        %657 = vmatprep.subr.mxu0 %v456
        %658 = vmatpush1.msra.mxu0 %v455
        %659 = vmatprep.subr.mxu0 %v448
        %660 = vmatpush1.msra.mxu0 %v447
        %661 = vmatprep.subr.mxu0 %v440
        %662 = vmatpush1.msra.mxu0 %v439
        %663 = vmatprep.subr.mxu0 %v432
        %664 = vmatpush1.msra.mxu0 %v431
        %665 = vmatprep.subr.mxu0 %v424
        %666 = vmatpush1.msra.mxu0 %v423
        %667 = vmatprep.subr.mxu0 %v416
        %668 = vmatpush1.msra.mxu0 %v415
        %669 = vmatprep.subr.mxu0 %v408
        %670 = vmatpush1.msra.mxu0 %v407
        %671 = vmatprep.subr.mxu0 %v400
        %672 = vmatpush1.msra.mxu0 %v399
        %673 = vmatprep.subr.mxu0 0.0
        %674 = vmatpush2.msra.mxu0 0.0
        %675 = vmatprep.subr.mxu0 0.0
        %676 = vmatpush2.msra.mxu0 0.0
        %677 = vmatprep.subr.mxu0 0.0
        %678 = vmatpush2.msra.mxu0 0.0
        %679 = vmatprep.subr.mxu0 0.0
        %680 = vmatpush2.msra.mxu0 0.0
        %681 = vmatprep.subr.mxu0 0.0
        %682 = vmatpush2.msra.mxu0 0.0
        %683 = vmatprep.subr.mxu0 0.0
        %684 = vmatpush2.msra.mxu0 0.0
        %685 = vmatprep.subr.mxu0 0.0
        %686 = vmatpush2.msra.mxu0 0.0
        %687 = vmatprep.subr.mxu0 0.0
        %688 = vmatpush2.msra.mxu0 0.0
        %689 = vmatprep.subr.mxu0 0.0
        %690 = vmatpush2.msra.mxu0 0.0
        %691 = vmatprep.subr.mxu0 0.0
        %692 = vmatpush2.msra.mxu0 0.0
        %693 = vmatprep.subr.mxu0 0.0
        %694 = vmatpush2.msra.mxu0 0.0
        %695 = vmatprep.subr.mxu0 0.0
        %696 = vmatpush2.msra.mxu0 0.0
        %697 = vmatprep.subr.mxu0 0.0
        %698 = vmatpush2.msra.mxu0 0.0
        %699 = vmatprep.subr.mxu0 0.0
        %700 = vmatpush2.msra.mxu0 0.0
        %701 = vmatprep.subr.mxu0 0.0
        %702 = vmatpush2.msra.mxu0 0.0
        %703 = vmatprep.subr.mxu0 0.0
        %704 = vmatpush2.msra.mxu0 0.0
        %705 = vmatprep.mubr.f32.mxu0 0.0
        %706 = vmatmul.mubr.f32.gmra.mxu0 %v505
        %v707 = vpop.f32.mrf.mxu0
        %v708 = vadd.f32 %v474, %v707
        %v709 = vpop.f32.mrf.mxu0
        %v710 = vadd.f32 %v478, %v709
        %711 = vmatprep.mubr.f32.mxu0 0.0
        %712 = vmatmul.mubr.f32.gmra.mxu0 %v508
        %v713 = vpop.f32.mrf.mxu0
        %v714 = vadd.f32 %v474, %v713
        %v715 = vpop.f32.mrf.mxu0
        %v716 = vadd.f32 %v478, %v715
        %717 = vmatprep.mubr.f32.mxu0 0.0
        %718 = vmatmul.mubr.f32.gmra.mxu0 %v511
        %v719 = vpop.f32.mrf.mxu0
        %v720 = vadd.f32 %v474, %v719
        %v721 = vpop.f32.mrf.mxu0
        %v722 = vadd.f32 %v478, %v721
        %723 = vmatprep.mubr.f32.mxu0 0.0
        %724 = vmatmul.mubr.f32.gmra.mxu0 %v514
        %v725 = vpop.f32.mrf.mxu0
        %v726 = vadd.f32 %v474, %v725
        %v727 = vpop.f32.mrf.mxu0
        %v728 = vadd.f32 %v478, %v727
        %729 = vmatprep.mubr.f32.mxu0 0.0
        %730 = vmatmul.mubr.f32.gmra.mxu0 %v517
        %v731 = vpop.f32.mrf.mxu0
        %v732 = vadd.f32 %v474, %v731
        %v733 = vpop.f32.mrf.mxu0
        %v734 = vadd.f32 %v478, %v733
        %735 = vmatprep.mubr.f32.mxu0 0.0
        %736 = vmatmul.mubr.f32.gmra.mxu0 %v520
        %v737 = vpop.f32.mrf.mxu0
        %v738 = vadd.f32 %v474, %v737
        %v739 = vpop.f32.mrf.mxu0
        %v740 = vadd.f32 %v478, %v739
        %741 = vmatprep.mubr.f32.mxu0 0.0
        %742 = vmatmul.mubr.f32.gmra.mxu0 %v523
        %v743 = vpop.f32.mrf.mxu0
        %v744 = vadd.f32 %v474, %v743
        %v745 = vpop.f32.mrf.mxu0
        %v746 = vadd.f32 %v478, %v745
        %747 = vmatprep.mubr.f32.mxu0 0.0
        %748 = vmatmul.mubr.f32.gmra.mxu0 %v526
        %v749 = vpop.f32.mrf.mxu0
        %v750 = vadd.f32 %v474, %v749
        %v751 = vpop.f32.mrf.mxu0
        %v752 = vadd.f32 %v478, %v751
        %753 = vdwg.mxu0
        %754 = vmatprep.subr.mxu0 0.0
        %755 = vmatpush1.msra.mxu0 0.0
        %756 = vmatprep.subr.mxu0 0.0
        %757 = vmatpush1.msra.mxu0 0.0
        %758 = vmatprep.subr.mxu0 0.0
        %759 = vmatpush1.msra.mxu0 0.0
        %760 = vmatprep.subr.mxu0 0.0
        %761 = vmatpush1.msra.mxu0 0.0
        %762 = vmatprep.subr.mxu0 0.0
        %763 = vmatpush1.msra.mxu0 0.0
        %764 = vmatprep.subr.mxu0 0.0
        %765 = vmatpush1.msra.mxu0 0.0
        %766 = vmatprep.subr.mxu0 0.0
        %767 = vmatpush1.msra.mxu0 0.0
        %768 = vmatprep.subr.mxu0 0.0
        %769 = vmatpush1.msra.mxu0 0.0
        %770 = vmatprep.subr.mxu0 %v458
        %771 = vmatpush1.msra.mxu0 %v457
        %772 = vmatprep.subr.mxu0 %v450
        %773 = vmatpush1.msra.mxu0 %v449
        %774 = vmatprep.subr.mxu0 %v442
        %775 = vmatpush1.msra.mxu0 %v441
        %776 = vmatprep.subr.mxu0 %v434
        %777 = vmatpush1.msra.mxu0 %v433
        %778 = vmatprep.subr.mxu0 %v426
        %779 = vmatpush1.msra.mxu0 %v425
        %780 = vmatprep.subr.mxu0 %v418
        %781 = vmatpush1.msra.mxu0 %v417
        %782 = vmatprep.subr.mxu0 %v410
        %783 = vmatpush1.msra.mxu0 %v409
        %784 = vmatprep.subr.mxu0 %v402
        %785 = vmatpush1.msra.mxu0 %v401
        %786 = vmatprep.subr.mxu0 0.0
        %787 = vmatpush2.msra.mxu0 0.0
        %788 = vmatprep.subr.mxu0 0.0
        %789 = vmatpush2.msra.mxu0 0.0
        %790 = vmatprep.subr.mxu0 0.0
        %791 = vmatpush2.msra.mxu0 0.0
        %792 = vmatprep.subr.mxu0 0.0
        %793 = vmatpush2.msra.mxu0 0.0
        %794 = vmatprep.subr.mxu0 0.0
        %795 = vmatpush2.msra.mxu0 0.0
        %796 = vmatprep.subr.mxu0 0.0
        %797 = vmatpush2.msra.mxu0 0.0
        %798 = vmatprep.subr.mxu0 0.0
        %799 = vmatpush2.msra.mxu0 0.0
        %800 = vmatprep.subr.mxu0 0.0
        %801 = vmatpush2.msra.mxu0 0.0
        %802 = vmatprep.subr.mxu0 0.0
        %803 = vmatpush2.msra.mxu0 0.0
        %804 = vmatprep.subr.mxu0 0.0
        %805 = vmatpush2.msra.mxu0 0.0
        %806 = vmatprep.subr.mxu0 0.0
        %807 = vmatpush2.msra.mxu0 0.0
        %808 = vmatprep.subr.mxu0 0.0
        %809 = vmatpush2.msra.mxu0 0.0
        %810 = vmatprep.subr.mxu0 0.0
        %811 = vmatpush2.msra.mxu0 0.0
        %812 = vmatprep.subr.mxu0 0.0
        %813 = vmatpush2.msra.mxu0 0.0
        %814 = vmatprep.subr.mxu0 0.0
        %815 = vmatpush2.msra.mxu0 0.0
        %816 = vmatprep.subr.mxu0 0.0
        %817 = vmatpush2.msra.mxu0 0.0
        %818 = vmatprep.mubr.f32.mxu0 0.0
        %819 = vmatmul.mubr.f32.gmra.mxu0 %v505
        %v820 = vpop.f32.mrf.mxu0
        %v821 = vadd.f32 %v482, %v820
        %v822 = vpop.f32.mrf.mxu0
        %v823 = vadd.f32 %v486, %v822
        %824 = vmatprep.mubr.f32.mxu0 0.0
        %825 = vmatmul.mubr.f32.gmra.mxu0 %v508
        %v826 = vpop.f32.mrf.mxu0
        %v827 = vadd.f32 %v482, %v826
        %v828 = vpop.f32.mrf.mxu0
        %v829 = vadd.f32 %v486, %v828
        %830 = vmatprep.mubr.f32.mxu0 0.0
        %831 = vmatmul.mubr.f32.gmra.mxu0 %v511
        %v832 = vpop.f32.mrf.mxu0
        %v833 = vadd.f32 %v482, %v832
        %v834 = vpop.f32.mrf.mxu0
        %v835 = vadd.f32 %v486, %v834
        %836 = vmatprep.mubr.f32.mxu0 0.0
        %837 = vmatmul.mubr.f32.gmra.mxu0 %v514
        %v838 = vpop.f32.mrf.mxu0
        %v839 = vadd.f32 %v482, %v838
        %v840 = vpop.f32.mrf.mxu0
        %v841 = vadd.f32 %v486, %v840
        %842 = vmatprep.mubr.f32.mxu0 0.0
        %843 = vmatmul.mubr.f32.gmra.mxu0 %v517
        %v844 = vpop.f32.mrf.mxu0
        %v845 = vadd.f32 %v482, %v844
        %v846 = vpop.f32.mrf.mxu0
        %v847 = vadd.f32 %v486, %v846
        %848 = vmatprep.mubr.f32.mxu0 0.0
        %849 = vmatmul.mubr.f32.gmra.mxu0 %v520
        %v850 = vpop.f32.mrf.mxu0
        %v851 = vadd.f32 %v482, %v850
        %v852 = vpop.f32.mrf.mxu0
        %v853 = vadd.f32 %v486, %v852
        %854 = vmatprep.mubr.f32.mxu0 0.0
        %855 = vmatmul.mubr.f32.gmra.mxu0 %v523
        %v856 = vpop.f32.mrf.mxu0
        %v857 = vadd.f32 %v482, %v856
        %v858 = vpop.f32.mrf.mxu0
        %v859 = vadd.f32 %v486, %v858
        %860 = vmatprep.mubr.f32.mxu0 0.0
        %861 = vmatmul.mubr.f32.gmra.mxu0 %v526
        %v862 = vpop.f32.mrf.mxu0
        %v863 = vadd.f32 %v482, %v862
        %v864 = vpop.f32.mrf.mxu0
        %v865 = vadd.f32 %v486, %v864
        %866 = vdwg.mxu0
        %867 = vmatprep.subr.mxu0 0.0
        %868 = vmatpush1.msra.mxu0 0.0
        %869 = vmatprep.subr.mxu0 0.0
        %870 = vmatpush1.msra.mxu0 0.0
        %871 = vmatprep.subr.mxu0 0.0
        %872 = vmatpush1.msra.mxu0 0.0
        %873 = vmatprep.subr.mxu0 0.0
        %874 = vmatpush1.msra.mxu0 0.0
        %875 = vmatprep.subr.mxu0 0.0
        %876 = vmatpush1.msra.mxu0 0.0
        %877 = vmatprep.subr.mxu0 0.0
        %878 = vmatpush1.msra.mxu0 0.0
        %879 = vmatprep.subr.mxu0 0.0
        %880 = vmatpush1.msra.mxu0 0.0
        %881 = vmatprep.subr.mxu0 0.0
        %882 = vmatpush1.msra.mxu0 0.0
        %883 = vmatprep.subr.mxu0 %v460
        %884 = vmatpush1.msra.mxu0 %v459
        %885 = vmatprep.subr.mxu0 %v452
        %886 = vmatpush1.msra.mxu0 %v451
        %887 = vmatprep.subr.mxu0 %v444
        %888 = vmatpush1.msra.mxu0 %v443
        %889 = vmatprep.subr.mxu0 %v436
        %890 = vmatpush1.msra.mxu0 %v435
        %891 = vmatprep.subr.mxu0 %v428
        %892 = vmatpush1.msra.mxu0 %v427
        %893 = vmatprep.subr.mxu0 %v420
        %894 = vmatpush1.msra.mxu0 %v419
        %895 = vmatprep.subr.mxu0 %v412
        %896 = vmatpush1.msra.mxu0 %v411
        %897 = vmatprep.subr.mxu0 %v404
        %898 = vmatpush1.msra.mxu0 %v403
        %899 = vmatprep.subr.mxu0 0.0
        %900 = vmatpush2.msra.mxu0 0.0
        %901 = vmatprep.subr.mxu0 0.0
        %902 = vmatpush2.msra.mxu0 0.0
        %903 = vmatprep.subr.mxu0 0.0
        %904 = vmatpush2.msra.mxu0 0.0
        %905 = vmatprep.subr.mxu0 0.0
        %906 = vmatpush2.msra.mxu0 0.0
        %907 = vmatprep.subr.mxu0 0.0
        %908 = vmatpush2.msra.mxu0 0.0
        %909 = vmatprep.subr.mxu0 0.0
        %910 = vmatpush2.msra.mxu0 0.0
        %911 = vmatprep.subr.mxu0 0.0
        %912 = vmatpush2.msra.mxu0 0.0
        %913 = vmatprep.subr.mxu0 0.0
        %914 = vmatpush2.msra.mxu0 0.0
        %915 = vmatprep.subr.mxu0 0.0
        %916 = vmatpush2.msra.mxu0 0.0
        %917 = vmatprep.subr.mxu0 0.0
        %918 = vmatpush2.msra.mxu0 0.0
        %919 = vmatprep.subr.mxu0 0.0
        %920 = vmatpush2.msra.mxu0 0.0
        %921 = vmatprep.subr.mxu0 0.0
        %922 = vmatpush2.msra.mxu0 0.0
        %923 = vmatprep.subr.mxu0 0.0
        %924 = vmatpush2.msra.mxu0 0.0
        %925 = vmatprep.subr.mxu0 0.0
        %926 = vmatpush2.msra.mxu0 0.0
        %927 = vmatprep.subr.mxu0 0.0
        %928 = vmatpush2.msra.mxu0 0.0
        %929 = vmatprep.subr.mxu0 0.0
        %930 = vmatpush2.msra.mxu0 0.0
        %931 = vmatprep.mubr.f32.mxu0 0.0
        %932 = vmatmul.mubr.f32.gmra.mxu0 %v505
        %v933 = vpop.f32.mrf.mxu0
        %v934 = vadd.f32 %v490, %v933
        %v935 = vpop.f32.mrf.mxu0
        %v936 = vadd.f32 %v494, %v935
        %937 = vmatprep.mubr.f32.mxu0 0.0
        %938 = vmatmul.mubr.f32.gmra.mxu0 %v508
        %v939 = vpop.f32.mrf.mxu0
        %v940 = vadd.f32 %v490, %v939
        %v941 = vpop.f32.mrf.mxu0
        %v942 = vadd.f32 %v494, %v941
        %943 = vmatprep.mubr.f32.mxu0 0.0
        %944 = vmatmul.mubr.f32.gmra.mxu0 %v511
        %v945 = vpop.f32.mrf.mxu0
        %v946 = vadd.f32 %v490, %v945
        %v947 = vpop.f32.mrf.mxu0
        %v948 = vadd.f32 %v494, %v947
        %949 = vmatprep.mubr.f32.mxu0 0.0
        %950 = vmatmul.mubr.f32.gmra.mxu0 %v514
        %v951 = vpop.f32.mrf.mxu0
        %v952 = vadd.f32 %v490, %v951
        %v953 = vpop.f32.mrf.mxu0
        %v954 = vadd.f32 %v494, %v953
        %955 = vmatprep.mubr.f32.mxu0 0.0
        %956 = vmatmul.mubr.f32.gmra.mxu0 %v517
        %v957 = vpop.f32.mrf.mxu0
        %v958 = vadd.f32 %v490, %v957
        %v959 = vpop.f32.mrf.mxu0
        %v960 = vadd.f32 %v494, %v959
        %961 = vmatprep.mubr.f32.mxu0 0.0
        %962 = vmatmul.mubr.f32.gmra.mxu0 %v520
        %v963 = vpop.f32.mrf.mxu0
        %v964 = vadd.f32 %v490, %v963
        %v965 = vpop.f32.mrf.mxu0
        %v966 = vadd.f32 %v494, %v965
        %967 = vmatprep.mubr.f32.mxu0 0.0
        %968 = vmatmul.mubr.f32.gmra.mxu0 %v523
        %v969 = vpop.f32.mrf.mxu0
        %v970 = vadd.f32 %v490, %v969
        %v971 = vpop.f32.mrf.mxu0
        %v972 = vadd.f32 %v494, %v971
        %973 = vmatprep.mubr.f32.mxu0 0.0
        %974 = vmatmul.mubr.f32.gmra.mxu0 %v526
        %v975 = vpop.f32.mrf.mxu0
        %v976 = vadd.f32 %v490, %v975
        %v977 = vpop.f32.mrf.mxu0
        %v978 = vadd.f32 %v494, %v977
        %979 = vdwg.mxu0
        %v980 = vmax.f32 %v595, 0.0
        %v981 = vmax.f32 %v597, 0.0
        %v982 = vmax.f32 %v708, 0.0
        %v983 = vmax.f32 %v710, 0.0
        %v984 = vmax.f32 %v821, 0.0
        %v985 = vmax.f32 %v823, 0.0
        %v986 = vmax.f32 %v934, 0.0
        %v987 = vmax.f32 %v936, 0.0
        %v988 = vmax.f32 %v601, 0.0
        %v989 = vmax.f32 %v603, 0.0
        %v990 = vmax.f32 %v714, 0.0
        %v991 = vmax.f32 %v716, 0.0
        %v992 = vmax.f32 %v827, 0.0
        %v993 = vmax.f32 %v829, 0.0
        %v994 = vmax.f32 %v940, 0.0
        %v995 = vmax.f32 %v942, 0.0
        %v996 = vmax.f32 %v607, 0.0
        %v997 = vmax.f32 %v609, 0.0
        %v998 = vmax.f32 %v720, 0.0
        %v999 = vmax.f32 %v722, 0.0
        %v1000 = vmax.f32 %v833, 0.0
        %v1001 = vmax.f32 %v835, 0.0
        %v1002 = vmax.f32 %v946, 0.0
        %v1003 = vmax.f32 %v948, 0.0
        %v1004 = vmax.f32 %v613, 0.0
        %v1005 = vmax.f32 %v615, 0.0
        %v1006 = vmax.f32 %v726, 0.0
        %v1007 = vmax.f32 %v728, 0.0
        %v1008 = vmax.f32 %v839, 0.0
        %v1009 = vmax.f32 %v841, 0.0
        %v1010 = vmax.f32 %v952, 0.0
        %v1011 = vmax.f32 %v954, 0.0
        %v1012 = vmax.f32 %v619, 0.0
        %v1013 = vmax.f32 %v621, 0.0
        %v1014 = vmax.f32 %v732, 0.0
        %v1015 = vmax.f32 %v734, 0.0
        %v1016 = vmax.f32 %v845, 0.0
        %v1017 = vmax.f32 %v847, 0.0
        %v1018 = vmax.f32 %v958, 0.0
        %v1019 = vmax.f32 %v960, 0.0
        %v1020 = vmax.f32 %v625, 0.0
        %v1021 = vmax.f32 %v627, 0.0
        %v1022 = vmax.f32 %v738, 0.0
        %v1023 = vmax.f32 %v740, 0.0
        %v1024 = vmax.f32 %v851, 0.0
        %v1025 = vmax.f32 %v853, 0.0
        %v1026 = vmax.f32 %v964, 0.0
        %v1027 = vmax.f32 %v966, 0.0
        %v1028 = vmax.f32 %v631, 0.0
        %v1029 = vmax.f32 %v633, 0.0
        %v1030 = vmax.f32 %v744, 0.0
        %v1031 = vmax.f32 %v746, 0.0
        %v1032 = vmax.f32 %v857, 0.0
        %v1033 = vmax.f32 %v859, 0.0
        %v1034 = vmax.f32 %v970, 0.0
        %v1035 = vmax.f32 %v972, 0.0
        %v1036 = vmax.f32 %v637, 0.0
        %v1037 = vmax.f32 %v639, 0.0
        %v1038 = vmax.f32 %v750, 0.0
        %v1039 = vmax.f32 %v752, 0.0
        %v1040 = vmax.f32 %v863, 0.0
        %v1041 = vmax.f32 %v865, 0.0
        %v1042 = vmax.f32 %v976, 0.0
        %v1043 = vmax.f32 %v978, 0.0
        %v1044 = vld [vmem:[%s336] sm:$0xff]
        %v1045 = vld [vmem:[#allocation10] sm:$0xff]
        %v1046 = vld [vmem:[#allocation10 + $0x8] sm:$0xff]
        %v1047 = vld [vmem:[#allocation10 + $0x10] sm:$0xff]
        %v1048 = vld [vmem:[#allocation10 + $0x18] sm:$0xff]
        %v1049 = vld [vmem:[#allocation10 + $0x20] sm:$0xff]
        %v1050 = vld [vmem:[#allocation10 + $0x28] sm:$0xff]
        %v1051 = vld [vmem:[#allocation10 + $0x30] sm:$0xff]
        %v1052 = vld [vmem:[#allocation10 + $0x38] sm:$0xff]
        %v1053 = vld [vmem:[#allocation10 + $0x40] sm:$0xff]
        %v1054 = vld [vmem:[#allocation10 + $0x48] sm:$0xff]
        %v1055 = vld [vmem:[#allocation10 + $0x50] sm:$0xff]
        %v1056 = vld [vmem:[#allocation10 + $0x58] sm:$0xff]
        %v1057 = vld [vmem:[#allocation10 + $0x60] sm:$0xff]
        %v1058 = vld [vmem:[#allocation10 + $0x68] sm:$0xff]
        %v1059 = vld [vmem:[#allocation10 + $0x70] sm:$0xff]
        %v1060 = vld [vmem:[#allocation10 + $0x78] sm:$0xff]
        %v1061 = vld [vmem:[#allocation10 + $0x80] sm:$0xff]
        %v1062 = vld [vmem:[#allocation10 + $0x88] sm:$0xff]
        %v1063 = vld [vmem:[#allocation10 + $0x90] sm:$0xff]
        %v1064 = vld [vmem:[#allocation10 + $0x98] sm:$0xff]
        %v1065 = vld [vmem:[#allocation10 + $0xa0] sm:$0xff]
        %v1066 = vld [vmem:[#allocation10 + $0xa8] sm:$0xff]
        %v1067 = vld [vmem:[#allocation10 + $0xb0] sm:$0xff]
        %v1068 = vld [vmem:[#allocation10 + $0xb8] sm:$0xff]
        %v1069 = vld [vmem:[#allocation10 + $0xc0] sm:$0xff]
        %v1070 = vld [vmem:[#allocation10 + $0xc8] sm:$0xff]
        %v1071 = vld [vmem:[#allocation10 + $0xd0] sm:$0xff]
        %v1072 = vld [vmem:[#allocation10 + $0xd8] sm:$0xff]
        %v1073 = vld [vmem:[#allocation10 + $0xe0] sm:$0xff]
        %v1074 = vld [vmem:[#allocation10 + $0xe8] sm:$0xff]
        %v1075 = vld [vmem:[#allocation10 + $0xf0] sm:$0xff]
        %v1076 = vld [vmem:[#allocation10 + $0xf8] sm:$0xff]
        %v1077 = vld [vmem:[%s5] sm:$0xff]
        %v1079 = vlaneseq
        %v1080 = vshrl.u32 %v1079, 7
        %v1081 = vsub.s32 0, %v1080
        %v1082 = vrot.slane %v1077, %v1081
        %v1083 = vlaneseq
        %v1084 = vshrl.u32 %v1083, 7
        %v1085 = vsub.s32 1, %v1084
        %v1086 = vrot.slane %v1077, %v1085
        %v1087 = vlaneseq
        %v1088 = vshrl.u32 %v1087, 7
        %v1089 = vsub.s32 2, %v1088
        %v1090 = vrot.slane %v1077, %v1089
        %v1091 = vlaneseq
        %v1092 = vshrl.u32 %v1091, 7
        %v1093 = vsub.s32 3, %v1092
        %v1094 = vrot.slane %v1077, %v1093
        %v1095 = vlaneseq
        %v1096 = vshrl.u32 %v1095, 7
        %v1097 = vsub.s32 4, %v1096
        %v1098 = vrot.slane %v1077, %v1097
        %v1099 = vlaneseq
        %v1100 = vshrl.u32 %v1099, 7
        %v1101 = vsub.s32 5, %v1100
        %v1102 = vrot.slane %v1077, %v1101
        %v1103 = vlaneseq
        %v1104 = vshrl.u32 %v1103, 7
        %v1105 = vsub.s32 6, %v1104
        %v1106 = vrot.slane %v1077, %v1105
        %v1107 = vlaneseq
        %v1108 = vshrl.u32 %v1107, 7
        %v1109 = vsub.s32 7, %v1108
        %v1110 = vrot.slane %v1077, %v1109
        %vm1119 = vcmask 261120
        %v1121 = vsel %vm1119, %v1044, 0
        %1123 = vmatprep.subr.mxu0 0.0
        %1124 = vmatpush1.msra.mxu0 0.0
        %1125 = vmatprep.subr.mxu0 0.0
        %1126 = vmatpush1.msra.mxu0 0.0
        %1127 = vmatprep.subr.mxu0 0.0
        %1128 = vmatpush1.msra.mxu0 0.0
        %1129 = vmatprep.subr.mxu0 0.0
        %1130 = vmatpush1.msra.mxu0 0.0
        %1131 = vmatprep.subr.mxu0 0.0
        %1132 = vmatpush1.msra.mxu0 0.0
        %1133 = vmatprep.subr.mxu0 0.0
        %1134 = vmatpush1.msra.mxu0 0.0
        %1135 = vmatprep.subr.mxu0 0.0
        %1136 = vmatpush1.msra.mxu0 0.0
        %1137 = vmatprep.subr.mxu0 0.0
        %1138 = vmatpush1.msra.mxu0 0.0
        %1139 = vmatprep.subr.mxu0 0.0
        %1140 = vmatpush1.msra.mxu0 0.0
        %1141 = vmatprep.subr.mxu0 0.0
        %1142 = vmatpush1.msra.mxu0 0.0
        %1143 = vmatprep.subr.mxu0 0.0
        %1144 = vmatpush1.msra.mxu0 0.0
        %1145 = vmatprep.subr.mxu0 0.0
        %1146 = vmatpush1.msra.mxu0 0.0
        %1147 = vmatprep.subr.mxu0 %v1070
        %1148 = vmatpush1.msra.mxu0 %v1069
        %1149 = vmatprep.subr.mxu0 %v1062
        %1150 = vmatpush1.msra.mxu0 %v1061
        %1151 = vmatprep.subr.mxu0 %v1054
        %1152 = vmatpush1.msra.mxu0 %v1053
        %1153 = vmatprep.subr.mxu0 %v1046
        %1154 = vmatpush1.msra.mxu0 %v1045
        %1155 = vmatprep.subr.mxu0 0.0
        %1156 = vmatpush2.msra.mxu0 0.0
        %1157 = vmatprep.subr.mxu0 0.0
        %1158 = vmatpush2.msra.mxu0 0.0
        %1159 = vmatprep.subr.mxu0 0.0
        %1160 = vmatpush2.msra.mxu0 0.0
        %1161 = vmatprep.subr.mxu0 0.0
        %1162 = vmatpush2.msra.mxu0 0.0
        %1163 = vmatprep.subr.mxu0 0.0
        %1164 = vmatpush2.msra.mxu0 0.0
        %1165 = vmatprep.subr.mxu0 0.0
        %1166 = vmatpush2.msra.mxu0 0.0
        %1167 = vmatprep.subr.mxu0 0.0
        %1168 = vmatpush2.msra.mxu0 0.0
        %1169 = vmatprep.subr.mxu0 0.0
        %1170 = vmatpush2.msra.mxu0 0.0
        %1171 = vmatprep.subr.mxu0 0.0
        %1172 = vmatpush2.msra.mxu0 0.0
        %1173 = vmatprep.subr.mxu0 0.0
        %1174 = vmatpush2.msra.mxu0 0.0
        %1175 = vmatprep.subr.mxu0 0.0
        %1176 = vmatpush2.msra.mxu0 0.0
        %1177 = vmatprep.subr.mxu0 0.0
        %1178 = vmatpush2.msra.mxu0 0.0
        %1179 = vmatprep.subr.mxu0 0.0
        %1180 = vmatpush2.msra.mxu0 0.0
        %1181 = vmatprep.subr.mxu0 0.0
        %1182 = vmatpush2.msra.mxu0 0.0
        %1183 = vmatprep.subr.mxu0 0.0
        %1184 = vmatpush2.msra.mxu0 0.0
        %1185 = vmatprep.subr.mxu0 0.0
        %1186 = vmatpush2.msra.mxu0 0.0
        %1187 = vmatprep.mubr.f32.mxu0 0.0
        %1188 = vmatmul.mubr.f32.gmra.mxu0 %v1121
        %v1189 = vpop.f32.mrf.mxu0
        %v1190 = vadd.f32 %v1082, %v1189
        %v1191 = vpop.f32.mrf.mxu0
        %v1192 = vadd.f32 %v1086, %v1191
        %1193 = vdwg.mxu0
        %1194 = vmatprep.subr.mxu0 0.0
        %1195 = vmatpush1.msra.mxu0 0.0
        %1196 = vmatprep.subr.mxu0 0.0
        %1197 = vmatpush1.msra.mxu0 0.0
        %1198 = vmatprep.subr.mxu0 0.0
        %1199 = vmatpush1.msra.mxu0 0.0
        %1200 = vmatprep.subr.mxu0 0.0
        %1201 = vmatpush1.msra.mxu0 0.0
        %1202 = vmatprep.subr.mxu0 0.0
        %1203 = vmatpush1.msra.mxu0 0.0
        %1204 = vmatprep.subr.mxu0 0.0
        %1205 = vmatpush1.msra.mxu0 0.0
        %1206 = vmatprep.subr.mxu0 0.0
        %1207 = vmatpush1.msra.mxu0 0.0
        %1208 = vmatprep.subr.mxu0 0.0
        %1209 = vmatpush1.msra.mxu0 0.0
        %1210 = vmatprep.subr.mxu0 0.0
        %1211 = vmatpush1.msra.mxu0 0.0
        %1212 = vmatprep.subr.mxu0 0.0
        %1213 = vmatpush1.msra.mxu0 0.0
        %1214 = vmatprep.subr.mxu0 0.0
        %1215 = vmatpush1.msra.mxu0 0.0
        %1216 = vmatprep.subr.mxu0 0.0
        %1217 = vmatpush1.msra.mxu0 0.0
        %1218 = vmatprep.subr.mxu0 %v1072
        %1219 = vmatpush1.msra.mxu0 %v1071
        %1220 = vmatprep.subr.mxu0 %v1064
        %1221 = vmatpush1.msra.mxu0 %v1063
        %1222 = vmatprep.subr.mxu0 %v1056
        %1223 = vmatpush1.msra.mxu0 %v1055
        %1224 = vmatprep.subr.mxu0 %v1048
        %1225 = vmatpush1.msra.mxu0 %v1047
        %1226 = vmatprep.subr.mxu0 0.0
        %1227 = vmatpush2.msra.mxu0 0.0
        %1228 = vmatprep.subr.mxu0 0.0
        %1229 = vmatpush2.msra.mxu0 0.0
        %1230 = vmatprep.subr.mxu0 0.0
        %1231 = vmatpush2.msra.mxu0 0.0
        %1232 = vmatprep.subr.mxu0 0.0
        %1233 = vmatpush2.msra.mxu0 0.0
        %1234 = vmatprep.subr.mxu0 0.0
        %1235 = vmatpush2.msra.mxu0 0.0
        %1236 = vmatprep.subr.mxu0 0.0
        %1237 = vmatpush2.msra.mxu0 0.0
        %1238 = vmatprep.subr.mxu0 0.0
        %1239 = vmatpush2.msra.mxu0 0.0
        %1240 = vmatprep.subr.mxu0 0.0
        %1241 = vmatpush2.msra.mxu0 0.0
        %1242 = vmatprep.subr.mxu0 0.0
        %1243 = vmatpush2.msra.mxu0 0.0
        %1244 = vmatprep.subr.mxu0 0.0
        %1245 = vmatpush2.msra.mxu0 0.0
        %1246 = vmatprep.subr.mxu0 0.0
        %1247 = vmatpush2.msra.mxu0 0.0
        %1248 = vmatprep.subr.mxu0 0.0
        %1249 = vmatpush2.msra.mxu0 0.0
        %1250 = vmatprep.subr.mxu0 0.0
        %1251 = vmatpush2.msra.mxu0 0.0
        %1252 = vmatprep.subr.mxu0 0.0
        %1253 = vmatpush2.msra.mxu0 0.0
        %1254 = vmatprep.subr.mxu0 0.0
        %1255 = vmatpush2.msra.mxu0 0.0
        %1256 = vmatprep.subr.mxu0 0.0
        %1257 = vmatpush2.msra.mxu0 0.0
        %1258 = vmatprep.mubr.f32.mxu0 0.0
        %1259 = vmatmul.mubr.f32.gmra.mxu0 %v1121
        %v1260 = vpop.f32.mrf.mxu0
        %v1261 = vadd.f32 %v1090, %v1260
        %v1262 = vpop.f32.mrf.mxu0
        %v1263 = vadd.f32 %v1094, %v1262
        %1264 = vdwg.mxu0
        %1265 = vmatprep.subr.mxu0 0.0
        %1266 = vmatpush1.msra.mxu0 0.0
        %1267 = vmatprep.subr.mxu0 0.0
        %1268 = vmatpush1.msra.mxu0 0.0
        %1269 = vmatprep.subr.mxu0 0.0
        %1270 = vmatpush1.msra.mxu0 0.0
        %1271 = vmatprep.subr.mxu0 0.0
        %1272 = vmatpush1.msra.mxu0 0.0
        %1273 = vmatprep.subr.mxu0 0.0
        %1274 = vmatpush1.msra.mxu0 0.0
        %1275 = vmatprep.subr.mxu0 0.0
        %1276 = vmatpush1.msra.mxu0 0.0
        %1277 = vmatprep.subr.mxu0 0.0
        %1278 = vmatpush1.msra.mxu0 0.0
        %1279 = vmatprep.subr.mxu0 0.0
        %1280 = vmatpush1.msra.mxu0 0.0
        %1281 = vmatprep.subr.mxu0 0.0
        %1282 = vmatpush1.msra.mxu0 0.0
        %1283 = vmatprep.subr.mxu0 0.0
        %1284 = vmatpush1.msra.mxu0 0.0
        %1285 = vmatprep.subr.mxu0 0.0
        %1286 = vmatpush1.msra.mxu0 0.0
        %1287 = vmatprep.subr.mxu0 0.0
        %1288 = vmatpush1.msra.mxu0 0.0
        %1289 = vmatprep.subr.mxu0 %v1074
        %1290 = vmatpush1.msra.mxu0 %v1073
        %1291 = vmatprep.subr.mxu0 %v1066
        %1292 = vmatpush1.msra.mxu0 %v1065
        %1293 = vmatprep.subr.mxu0 %v1058
        %1294 = vmatpush1.msra.mxu0 %v1057
        %1295 = vmatprep.subr.mxu0 %v1050
        %1296 = vmatpush1.msra.mxu0 %v1049
        %1297 = vmatprep.subr.mxu0 0.0
        %1298 = vmatpush2.msra.mxu0 0.0
        %1299 = vmatprep.subr.mxu0 0.0
        %1300 = vmatpush2.msra.mxu0 0.0
        %1301 = vmatprep.subr.mxu0 0.0
        %1302 = vmatpush2.msra.mxu0 0.0
        %1303 = vmatprep.subr.mxu0 0.0
        %1304 = vmatpush2.msra.mxu0 0.0
        %1305 = vmatprep.subr.mxu0 0.0
        %1306 = vmatpush2.msra.mxu0 0.0
        %1307 = vmatprep.subr.mxu0 0.0
        %1308 = vmatpush2.msra.mxu0 0.0
        %1309 = vmatprep.subr.mxu0 0.0
        %1310 = vmatpush2.msra.mxu0 0.0
        %1311 = vmatprep.subr.mxu0 0.0
        %1312 = vmatpush2.msra.mxu0 0.0
        %1313 = vmatprep.subr.mxu0 0.0
        %1314 = vmatpush2.msra.mxu0 0.0
        %1315 = vmatprep.subr.mxu0 0.0
        %1316 = vmatpush2.msra.mxu0 0.0
        %1317 = vmatprep.subr.mxu0 0.0
        %1318 = vmatpush2.msra.mxu0 0.0
        %1319 = vmatprep.subr.mxu0 0.0
        %1320 = vmatpush2.msra.mxu0 0.0
        %1321 = vmatprep.subr.mxu0 0.0
        %1322 = vmatpush2.msra.mxu0 0.0
        %1323 = vmatprep.subr.mxu0 0.0
        %1324 = vmatpush2.msra.mxu0 0.0
        %1325 = vmatprep.subr.mxu0 0.0
        %1326 = vmatpush2.msra.mxu0 0.0
        %1327 = vmatprep.subr.mxu0 0.0
        %1328 = vmatpush2.msra.mxu0 0.0
        %1329 = vmatprep.mubr.f32.mxu0 0.0
        %1330 = vmatmul.mubr.f32.gmra.mxu0 %v1121
        %v1331 = vpop.f32.mrf.mxu0
        %v1332 = vadd.f32 %v1098, %v1331
        %v1333 = vpop.f32.mrf.mxu0
        %v1334 = vadd.f32 %v1102, %v1333
        %1335 = vdwg.mxu0
        %1336 = vmatprep.subr.mxu0 0.0
        %1337 = vmatpush1.msra.mxu0 0.0
        %1338 = vmatprep.subr.mxu0 0.0
        %1339 = vmatpush1.msra.mxu0 0.0
        %1340 = vmatprep.subr.mxu0 0.0
        %1341 = vmatpush1.msra.mxu0 0.0
        %1342 = vmatprep.subr.mxu0 0.0
        %1343 = vmatpush1.msra.mxu0 0.0
        %1344 = vmatprep.subr.mxu0 0.0
        %1345 = vmatpush1.msra.mxu0 0.0
        %1346 = vmatprep.subr.mxu0 0.0
        %1347 = vmatpush1.msra.mxu0 0.0
        %1348 = vmatprep.subr.mxu0 0.0
        %1349 = vmatpush1.msra.mxu0 0.0
        %1350 = vmatprep.subr.mxu0 0.0
        %1351 = vmatpush1.msra.mxu0 0.0
        %1352 = vmatprep.subr.mxu0 0.0
        %1353 = vmatpush1.msra.mxu0 0.0
        %1354 = vmatprep.subr.mxu0 0.0
        %1355 = vmatpush1.msra.mxu0 0.0
        %1356 = vmatprep.subr.mxu0 0.0
        %1357 = vmatpush1.msra.mxu0 0.0
        %1358 = vmatprep.subr.mxu0 0.0
        %1359 = vmatpush1.msra.mxu0 0.0
        %1360 = vmatprep.subr.mxu0 %v1076
        %1361 = vmatpush1.msra.mxu0 %v1075
        %1362 = vmatprep.subr.mxu0 %v1068
        %1363 = vmatpush1.msra.mxu0 %v1067
        %1364 = vmatprep.subr.mxu0 %v1060
        %1365 = vmatpush1.msra.mxu0 %v1059
        %1366 = vmatprep.subr.mxu0 %v1052
        %1367 = vmatpush1.msra.mxu0 %v1051
        %1368 = vmatprep.subr.mxu0 0.0
        %1369 = vmatpush2.msra.mxu0 0.0
        %1370 = vmatprep.subr.mxu0 0.0
        %1371 = vmatpush2.msra.mxu0 0.0
        %1372 = vmatprep.subr.mxu0 0.0
        %1373 = vmatpush2.msra.mxu0 0.0
        %1374 = vmatprep.subr.mxu0 0.0
        %1375 = vmatpush2.msra.mxu0 0.0
        %1376 = vmatprep.subr.mxu0 0.0
        %1377 = vmatpush2.msra.mxu0 0.0
        %1378 = vmatprep.subr.mxu0 0.0
        %1379 = vmatpush2.msra.mxu0 0.0
        %1380 = vmatprep.subr.mxu0 0.0
        %1381 = vmatpush2.msra.mxu0 0.0
        %1382 = vmatprep.subr.mxu0 0.0
        %1383 = vmatpush2.msra.mxu0 0.0
        %1384 = vmatprep.subr.mxu0 0.0
        %1385 = vmatpush2.msra.mxu0 0.0
        %1386 = vmatprep.subr.mxu0 0.0
        %1387 = vmatpush2.msra.mxu0 0.0
        %1388 = vmatprep.subr.mxu0 0.0
        %1389 = vmatpush2.msra.mxu0 0.0
        %1390 = vmatprep.subr.mxu0 0.0
        %1391 = vmatpush2.msra.mxu0 0.0
        %1392 = vmatprep.subr.mxu0 0.0
        %1393 = vmatpush2.msra.mxu0 0.0
        %1394 = vmatprep.subr.mxu0 0.0
        %1395 = vmatpush2.msra.mxu0 0.0
        %1396 = vmatprep.subr.mxu0 0.0
        %1397 = vmatpush2.msra.mxu0 0.0
        %1398 = vmatprep.subr.mxu0 0.0
        %1399 = vmatpush2.msra.mxu0 0.0
        %1400 = vmatprep.mubr.f32.mxu0 0.0
        %1401 = vmatmul.mubr.f32.gmra.mxu0 %v1121
        %v1402 = vpop.f32.mrf.mxu0
        %v1403 = vadd.f32 %v1106, %v1402
        %v1404 = vpop.f32.mrf.mxu0
        %v1405 = vadd.f32 %v1110, %v1404
        %1406 = vdwg.mxu0
        %v1407 = vmax.f32 %v1190, 0.0
        %v1408 = vmax.f32 %v1192, 0.0
        %v1409 = vmax.f32 %v1261, 0.0
        %v1410 = vmax.f32 %v1263, 0.0
        %v1411 = vmax.f32 %v1332, 0.0
        %v1412 = vmax.f32 %v1334, 0.0
        %v1413 = vmax.f32 %v1403, 0.0
        %v1414 = vmax.f32 %v1405, 0.0
        %v1415 = vld [vmem:[#allocation11] sm:$0xff]
        %v1417 = vlaneseq
        %v1418 = vshrl.u32 %v1417, 7
        %v1419 = vsub.s32 0, %v1418
        %v1420 = vrot.slane %v1415, %v1419
        %v1421 = vlaneseq
        %v1422 = vshrl.u32 %v1421, 7
        %v1423 = vsub.s32 1, %v1422
        %v1424 = vrot.slane %v1415, %v1423
        %v1425 = vlaneseq
        %v1426 = vshrl.u32 %v1425, 7
        %v1427 = vsub.s32 2, %v1426
        %v1428 = vrot.slane %v1415, %v1427
        %v1429 = vlaneseq
        %v1430 = vshrl.u32 %v1429, 7
        %v1431 = vsub.s32 3, %v1430
        %v1432 = vrot.slane %v1415, %v1431
        %v1433 = vlaneseq
        %v1434 = vshrl.u32 %v1433, 7
        %v1435 = vsub.s32 4, %v1434
        %v1436 = vrot.slane %v1415, %v1435
        %v1437 = vlaneseq
        %v1438 = vshrl.u32 %v1437, 7
        %v1439 = vsub.s32 5, %v1438
        %v1440 = vrot.slane %v1415, %v1439
        %v1441 = vlaneseq
        %v1442 = vshrl.u32 %v1441, 7
        %v1443 = vsub.s32 6, %v1442
        %v1444 = vrot.slane %v1415, %v1443
        %v1445 = vlaneseq
        %v1446 = vshrl.u32 %v1445, 7
        %v1447 = vsub.s32 7, %v1446
        %v1448 = vrot.slane %v1415, %v1447
        %v1457 = vmul.f32 %v1407, %v1420
        %v1458 = vmul.f32 %v1408, %v1424
        %v1459 = vmul.f32 %v1409, %v1428
        %v1460 = vmul.f32 %v1410, %v1432
        %v1461 = vmul.f32 %v1411, %v1436
        %v1462 = vmul.f32 %v1412, %v1440
        %v1463 = vmul.f32 %v1413, %v1444
        %v1464 = vmul.f32 %v1414, %v1448
        %v1473 = vcombine.low %v1457, %v1458
        %v1474 = vcombine.high %v1457, %v1458
        %v1475 = vcombine.low %v1459, %v1460
        %v1476 = vcombine.high %v1459, %v1460
        %v1477 = vcombine.low %v1461, %v1462
        %v1478 = vcombine.high %v1461, %v1462
        %v1479 = vcombine.low %v1463, %v1464
        %v1480 = vcombine.high %v1463, %v1464
        %v1482 = vunpack.c.l.s4 1966171168
        %v1483 = vunpack.c.0.s8 %v1482
        %v1484 = vlaneseq
        %v1485 = vshrl.u32 %v1484, 7
        %v1486 = vsub.s32 %v1483, %v1485
        %v1487 = vrot.slane %v1473, %v1486
        %v1489 = vunpack.c.l.s4 1966171168
        %v1490 = vunpack.c.0.s8 %v1489
        %v1491 = vlaneseq
        %v1492 = vshrl.u32 %v1491, 7
        %v1493 = vsub.s32 %v1490, %v1492
        %v1494 = vrot.slane %v1474, %v1493
        %v1496 = vunpack.c.l.s4 1966171168
        %v1497 = vunpack.c.0.s8 %v1496
        %v1498 = vlaneseq
        %v1499 = vshrl.u32 %v1498, 7
        %v1500 = vsub.s32 %v1497, %v1499
        %v1501 = vrot.slane %v1475, %v1500
        %v1503 = vunpack.c.l.s4 1966171168
        %v1504 = vunpack.c.0.s8 %v1503
        %v1505 = vlaneseq
        %v1506 = vshrl.u32 %v1505, 7
        %v1507 = vsub.s32 %v1504, %v1506
        %v1508 = vrot.slane %v1476, %v1507
        %v1510 = vunpack.c.l.s4 1966171168
        %v1511 = vunpack.c.0.s8 %v1510
        %v1512 = vlaneseq
        %v1513 = vshrl.u32 %v1512, 7
        %v1514 = vsub.s32 %v1511, %v1513
        %v1515 = vrot.slane %v1477, %v1514
        %v1517 = vunpack.c.l.s4 1966171168
        %v1518 = vunpack.c.0.s8 %v1517
        %v1519 = vlaneseq
        %v1520 = vshrl.u32 %v1519, 7
        %v1521 = vsub.s32 %v1518, %v1520
        %v1522 = vrot.slane %v1478, %v1521
        %v1524 = vunpack.c.l.s4 1966171168
        %v1525 = vunpack.c.0.s8 %v1524
        %v1526 = vlaneseq
        %v1527 = vshrl.u32 %v1526, 7
        %v1528 = vsub.s32 %v1525, %v1527
        %v1529 = vrot.slane %v1479, %v1528
        %v1531 = vunpack.c.l.s4 1966171168
        %v1532 = vunpack.c.0.s8 %v1531
        %v1533 = vlaneseq
        %v1534 = vshrl.u32 %v1533, 7
        %v1535 = vsub.s32 %v1532, %v1534
        %v1536 = vrot.slane %v1480, %v1535
        %v1537 = vcombine.low %v1487, %v1501
        %v1538 = vcombine.high %v1487, %v1501
        %v1539 = vcombine.low %v1494, %v1508
        %v1540 = vcombine.high %v1494, %v1508
        %v1541 = vcombine.low %v1515, %v1529
        %v1542 = vcombine.high %v1515, %v1529
        %v1543 = vcombine.low %v1522, %v1536
        %v1544 = vcombine.high %v1522, %v1536
        %v1546 = vunpack.c.l.s4 1966171168
        %v1547 = vunpack.c.0.s8 %v1546
        %v1548 = vlaneseq
        %v1549 = vshrl.u32 %v1548, 7
        %v1550 = vsub.s32 %v1547, %v1549
        %v1551 = vrot.slane %v1537, %v1550
        %v1553 = vunpack.c.l.s4 1966171168
        %v1554 = vunpack.c.0.s8 %v1553
        %v1555 = vlaneseq
        %v1556 = vshrl.u32 %v1555, 7
        %v1557 = vsub.s32 %v1554, %v1556
        %v1558 = vrot.slane %v1539, %v1557
        %v1560 = vunpack.c.l.s4 1966171168
        %v1561 = vunpack.c.0.s8 %v1560
        %v1562 = vlaneseq
        %v1563 = vshrl.u32 %v1562, 7
        %v1564 = vsub.s32 %v1561, %v1563
        %v1565 = vrot.slane %v1538, %v1564
        %v1567 = vunpack.c.l.s4 1966171168
        %v1568 = vunpack.c.0.s8 %v1567
        %v1569 = vlaneseq
        %v1570 = vshrl.u32 %v1569, 7
        %v1571 = vsub.s32 %v1568, %v1570
        %v1572 = vrot.slane %v1540, %v1571
        %v1574 = vunpack.c.l.s4 1966171168
        %v1575 = vunpack.c.0.s8 %v1574
        %v1576 = vlaneseq
        %v1577 = vshrl.u32 %v1576, 7
        %v1578 = vsub.s32 %v1575, %v1577
        %v1579 = vrot.slane %v1541, %v1578
        %v1581 = vunpack.c.l.s4 1966171168
        %v1582 = vunpack.c.0.s8 %v1581
        %v1583 = vlaneseq
        %v1584 = vshrl.u32 %v1583, 7
        %v1585 = vsub.s32 %v1582, %v1584
        %v1586 = vrot.slane %v1543, %v1585
        %v1588 = vunpack.c.l.s4 1966171168
        %v1589 = vunpack.c.0.s8 %v1588
        %v1590 = vlaneseq
        %v1591 = vshrl.u32 %v1590, 7
        %v1592 = vsub.s32 %v1589, %v1591
        %v1593 = vrot.slane %v1542, %v1592
        %v1595 = vunpack.c.l.s4 1966171168
        %v1596 = vunpack.c.0.s8 %v1595
        %v1597 = vlaneseq
        %v1598 = vshrl.u32 %v1597, 7
        %v1599 = vsub.s32 %v1596, %v1598
        %v1600 = vrot.slane %v1544, %v1599
        %v1601 = vcombine.low %v1551, %v1579
        %v1602 = vcombine.high %v1551, %v1579
        %v1603 = vcombine.low %v1558, %v1586
        %v1604 = vcombine.high %v1558, %v1586
        %v1605 = vcombine.low %v1565, %v1593
        %v1606 = vcombine.high %v1565, %v1593
        %v1607 = vcombine.low %v1572, %v1600
        %v1608 = vcombine.high %v1572, %v1600
        %v1609 = vlaneseq
        %v1610 = vshrl.u32 %v1609, 7
        %v1611 = vsub.s32 0, %v1610
        %v1612 = vrot.slane %v1601, %v1611
        %v1613 = vlaneseq
        %v1614 = vshrl.u32 %v1613, 7
        %v1615 = vsub.s32 1, %v1614
        %v1616 = vrot.slane %v1601, %v1615
        %v1617 = vlaneseq
        %v1618 = vshrl.u32 %v1617, 7
        %v1619 = vsub.s32 2, %v1618
        %v1620 = vrot.slane %v1601, %v1619
        %v1621 = vlaneseq
        %v1622 = vshrl.u32 %v1621, 7
        %v1623 = vsub.s32 3, %v1622
        %v1624 = vrot.slane %v1601, %v1623
        %v1625 = vlaneseq
        %v1626 = vshrl.u32 %v1625, 7
        %v1627 = vsub.s32 4, %v1626
        %v1628 = vrot.slane %v1601, %v1627
        %v1629 = vlaneseq
        %v1630 = vshrl.u32 %v1629, 7
        %v1631 = vsub.s32 5, %v1630
        %v1632 = vrot.slane %v1601, %v1631
        %v1633 = vlaneseq
        %v1634 = vshrl.u32 %v1633, 7
        %v1635 = vsub.s32 6, %v1634
        %v1636 = vrot.slane %v1601, %v1635
        %v1637 = vlaneseq
        %v1638 = vshrl.u32 %v1637, 7
        %v1639 = vsub.s32 7, %v1638
        %v1640 = vrot.slane %v1601, %v1639
        %v1641 = vlaneseq
        %v1642 = vshrl.u32 %v1641, 7
        %v1643 = vsub.s32 0, %v1642
        %v1644 = vrot.slane %v1605, %v1643
        %v1645 = vlaneseq
        %v1646 = vshrl.u32 %v1645, 7
        %v1647 = vsub.s32 1, %v1646
        %v1648 = vrot.slane %v1605, %v1647
        %v1649 = vlaneseq
        %v1650 = vshrl.u32 %v1649, 7
        %v1651 = vsub.s32 2, %v1650
        %v1652 = vrot.slane %v1605, %v1651
        %v1653 = vlaneseq
        %v1654 = vshrl.u32 %v1653, 7
        %v1655 = vsub.s32 3, %v1654
        %v1656 = vrot.slane %v1605, %v1655
        %v1657 = vlaneseq
        %v1658 = vshrl.u32 %v1657, 7
        %v1659 = vsub.s32 4, %v1658
        %v1660 = vrot.slane %v1605, %v1659
        %v1661 = vlaneseq
        %v1662 = vshrl.u32 %v1661, 7
        %v1663 = vsub.s32 5, %v1662
        %v1664 = vrot.slane %v1605, %v1663
        %v1665 = vlaneseq
        %v1666 = vshrl.u32 %v1665, 7
        %v1667 = vsub.s32 6, %v1666
        %v1668 = vrot.slane %v1605, %v1667
        %v1669 = vlaneseq
        %v1670 = vshrl.u32 %v1669, 7
        %v1671 = vsub.s32 7, %v1670
        %v1672 = vrot.slane %v1605, %v1671
        %v1673 = vlaneseq
        %v1674 = vshrl.u32 %v1673, 7
        %v1675 = vsub.s32 0, %v1674
        %v1676 = vrot.slane %v1602, %v1675
        %v1677 = vlaneseq
        %v1678 = vshrl.u32 %v1677, 7
        %v1679 = vsub.s32 1, %v1678
        %v1680 = vrot.slane %v1602, %v1679
        %v1681 = vlaneseq
        %v1682 = vshrl.u32 %v1681, 7
        %v1683 = vsub.s32 2, %v1682
        %v1684 = vrot.slane %v1602, %v1683
        %v1685 = vlaneseq
        %v1686 = vshrl.u32 %v1685, 7
        %v1687 = vsub.s32 3, %v1686
        %v1688 = vrot.slane %v1602, %v1687
        %v1689 = vlaneseq
        %v1690 = vshrl.u32 %v1689, 7
        %v1691 = vsub.s32 4, %v1690
        %v1692 = vrot.slane %v1602, %v1691
        %v1693 = vlaneseq
        %v1694 = vshrl.u32 %v1693, 7
        %v1695 = vsub.s32 5, %v1694
        %v1696 = vrot.slane %v1602, %v1695
        %v1697 = vlaneseq
        %v1698 = vshrl.u32 %v1697, 7
        %v1699 = vsub.s32 6, %v1698
        %v1700 = vrot.slane %v1602, %v1699
        %v1701 = vlaneseq
        %v1702 = vshrl.u32 %v1701, 7
        %v1703 = vsub.s32 7, %v1702
        %v1704 = vrot.slane %v1602, %v1703
        %v1705 = vlaneseq
        %v1706 = vshrl.u32 %v1705, 7
        %v1707 = vsub.s32 0, %v1706
        %v1708 = vrot.slane %v1606, %v1707
        %v1709 = vlaneseq
        %v1710 = vshrl.u32 %v1709, 7
        %v1711 = vsub.s32 1, %v1710
        %v1712 = vrot.slane %v1606, %v1711
        %v1713 = vlaneseq
        %v1714 = vshrl.u32 %v1713, 7
        %v1715 = vsub.s32 2, %v1714
        %v1716 = vrot.slane %v1606, %v1715
        %v1717 = vlaneseq
        %v1718 = vshrl.u32 %v1717, 7
        %v1719 = vsub.s32 3, %v1718
        %v1720 = vrot.slane %v1606, %v1719
        %v1721 = vlaneseq
        %v1722 = vshrl.u32 %v1721, 7
        %v1723 = vsub.s32 4, %v1722
        %v1724 = vrot.slane %v1606, %v1723
        %v1725 = vlaneseq
        %v1726 = vshrl.u32 %v1725, 7
        %v1727 = vsub.s32 5, %v1726
        %v1728 = vrot.slane %v1606, %v1727
        %v1729 = vlaneseq
        %v1730 = vshrl.u32 %v1729, 7
        %v1731 = vsub.s32 6, %v1730
        %v1732 = vrot.slane %v1606, %v1731
        %v1733 = vlaneseq
        %v1734 = vshrl.u32 %v1733, 7
        %v1735 = vsub.s32 7, %v1734
        %v1736 = vrot.slane %v1606, %v1735
        %v1737 = vlaneseq
        %v1738 = vshrl.u32 %v1737, 7
        %v1739 = vsub.s32 0, %v1738
        %v1740 = vrot.slane %v1603, %v1739
        %v1741 = vlaneseq
        %v1742 = vshrl.u32 %v1741, 7
        %v1743 = vsub.s32 1, %v1742
        %v1744 = vrot.slane %v1603, %v1743
        %v1745 = vlaneseq
        %v1746 = vshrl.u32 %v1745, 7
        %v1747 = vsub.s32 2, %v1746
        %v1748 = vrot.slane %v1603, %v1747
        %v1749 = vlaneseq
        %v1750 = vshrl.u32 %v1749, 7
        %v1751 = vsub.s32 3, %v1750
        %v1752 = vrot.slane %v1603, %v1751
        %v1753 = vlaneseq
        %v1754 = vshrl.u32 %v1753, 7
        %v1755 = vsub.s32 4, %v1754
        %v1756 = vrot.slane %v1603, %v1755
        %v1757 = vlaneseq
        %v1758 = vshrl.u32 %v1757, 7
        %v1759 = vsub.s32 5, %v1758
        %v1760 = vrot.slane %v1603, %v1759
        %v1761 = vlaneseq
        %v1762 = vshrl.u32 %v1761, 7
        %v1763 = vsub.s32 6, %v1762
        %v1764 = vrot.slane %v1603, %v1763
        %v1765 = vlaneseq
        %v1766 = vshrl.u32 %v1765, 7
        %v1767 = vsub.s32 7, %v1766
        %v1768 = vrot.slane %v1603, %v1767
        %v1769 = vlaneseq
        %v1770 = vshrl.u32 %v1769, 7
        %v1771 = vsub.s32 0, %v1770
        %v1772 = vrot.slane %v1607, %v1771
        %v1773 = vlaneseq
        %v1774 = vshrl.u32 %v1773, 7
        %v1775 = vsub.s32 1, %v1774
        %v1776 = vrot.slane %v1607, %v1775
        %v1777 = vlaneseq
        %v1778 = vshrl.u32 %v1777, 7
        %v1779 = vsub.s32 2, %v1778
        %v1780 = vrot.slane %v1607, %v1779
        %v1781 = vlaneseq
        %v1782 = vshrl.u32 %v1781, 7
        %v1783 = vsub.s32 3, %v1782
        %v1784 = vrot.slane %v1607, %v1783
        %v1785 = vlaneseq
        %v1786 = vshrl.u32 %v1785, 7
        %v1787 = vsub.s32 4, %v1786
        %v1788 = vrot.slane %v1607, %v1787
        %v1789 = vlaneseq
        %v1790 = vshrl.u32 %v1789, 7
        %v1791 = vsub.s32 5, %v1790
        %v1792 = vrot.slane %v1607, %v1791
        %v1793 = vlaneseq
        %v1794 = vshrl.u32 %v1793, 7
        %v1795 = vsub.s32 6, %v1794
        %v1796 = vrot.slane %v1607, %v1795
        %v1797 = vlaneseq
        %v1798 = vshrl.u32 %v1797, 7
        %v1799 = vsub.s32 7, %v1798
        %v1800 = vrot.slane %v1607, %v1799
        %v1801 = vlaneseq
        %v1802 = vshrl.u32 %v1801, 7
        %v1803 = vsub.s32 0, %v1802
        %v1804 = vrot.slane %v1604, %v1803
        %v1805 = vlaneseq
        %v1806 = vshrl.u32 %v1805, 7
        %v1807 = vsub.s32 1, %v1806
        %v1808 = vrot.slane %v1604, %v1807
        %v1809 = vlaneseq
        %v1810 = vshrl.u32 %v1809, 7
        %v1811 = vsub.s32 2, %v1810
        %v1812 = vrot.slane %v1604, %v1811
        %v1813 = vlaneseq
        %v1814 = vshrl.u32 %v1813, 7
        %v1815 = vsub.s32 3, %v1814
        %v1816 = vrot.slane %v1604, %v1815
        %v1817 = vlaneseq
        %v1818 = vshrl.u32 %v1817, 7
        %v1819 = vsub.s32 4, %v1818
        %v1820 = vrot.slane %v1604, %v1819
        %v1821 = vlaneseq
        %v1822 = vshrl.u32 %v1821, 7
        %v1823 = vsub.s32 5, %v1822
        %v1824 = vrot.slane %v1604, %v1823
        %v1825 = vlaneseq
        %v1826 = vshrl.u32 %v1825, 7
        %v1827 = vsub.s32 6, %v1826
        %v1828 = vrot.slane %v1604, %v1827
        %v1829 = vlaneseq
        %v1830 = vshrl.u32 %v1829, 7
        %v1831 = vsub.s32 7, %v1830
        %v1832 = vrot.slane %v1604, %v1831
        %v1833 = vlaneseq
        %v1834 = vshrl.u32 %v1833, 7
        %v1835 = vsub.s32 0, %v1834
        %v1836 = vrot.slane %v1608, %v1835
        %v1837 = vlaneseq
        %v1838 = vshrl.u32 %v1837, 7
        %v1839 = vsub.s32 1, %v1838
        %v1840 = vrot.slane %v1608, %v1839
        %v1841 = vlaneseq
        %v1842 = vshrl.u32 %v1841, 7
        %v1843 = vsub.s32 2, %v1842
        %v1844 = vrot.slane %v1608, %v1843
        %v1845 = vlaneseq
        %v1846 = vshrl.u32 %v1845, 7
        %v1847 = vsub.s32 3, %v1846
        %v1848 = vrot.slane %v1608, %v1847
        %v1849 = vlaneseq
        %v1850 = vshrl.u32 %v1849, 7
        %v1851 = vsub.s32 4, %v1850
        %v1852 = vrot.slane %v1608, %v1851
        %v1853 = vlaneseq
        %v1854 = vshrl.u32 %v1853, 7
        %v1855 = vsub.s32 5, %v1854
        %v1856 = vrot.slane %v1608, %v1855
        %v1857 = vlaneseq
        %v1858 = vshrl.u32 %v1857, 7
        %v1859 = vsub.s32 6, %v1858
        %v1860 = vrot.slane %v1608, %v1859
        %v1861 = vlaneseq
        %v1862 = vshrl.u32 %v1861, 7
        %v1863 = vsub.s32 7, %v1862
        %v1864 = vrot.slane %v1608, %v1863
        %v1929 = vmul.f32 %v980, %v1612
        %v1930 = vmul.f32 %v981, %v1616
        %v1931 = vmul.f32 %v982, %v1620
        %v1932 = vmul.f32 %v983, %v1624
        %v1933 = vmul.f32 %v984, %v1628
        %v1934 = vmul.f32 %v985, %v1632
        %v1935 = vmul.f32 %v986, %v1636
        %v1936 = vmul.f32 %v987, %v1640
        %v1937 = vmul.f32 %v988, %v1644
        %v1938 = vmul.f32 %v989, %v1648
        %v1939 = vmul.f32 %v990, %v1652
        %v1940 = vmul.f32 %v991, %v1656
        %v1941 = vmul.f32 %v992, %v1660
        %v1942 = vmul.f32 %v993, %v1664
        %v1943 = vmul.f32 %v994, %v1668
        %v1944 = vmul.f32 %v995, %v1672
        %v1945 = vmul.f32 %v996, %v1676
        %v1946 = vmul.f32 %v997, %v1680
        %v1947 = vmul.f32 %v998, %v1684
        %v1948 = vmul.f32 %v999, %v1688
        %v1949 = vmul.f32 %v1000, %v1692
        %v1950 = vmul.f32 %v1001, %v1696
        %v1951 = vmul.f32 %v1002, %v1700
        %v1952 = vmul.f32 %v1003, %v1704
        %v1953 = vmul.f32 %v1004, %v1708
        %v1954 = vmul.f32 %v1005, %v1712
        %v1955 = vmul.f32 %v1006, %v1716
        %v1956 = vmul.f32 %v1007, %v1720
        %v1957 = vmul.f32 %v1008, %v1724
        %v1958 = vmul.f32 %v1009, %v1728
        %v1959 = vmul.f32 %v1010, %v1732
        %v1960 = vmul.f32 %v1011, %v1736
        %v1961 = vmul.f32 %v1012, %v1740
        %v1962 = vmul.f32 %v1013, %v1744
        %v1963 = vmul.f32 %v1014, %v1748
        %v1964 = vmul.f32 %v1015, %v1752
        %v1965 = vmul.f32 %v1016, %v1756
        %v1966 = vmul.f32 %v1017, %v1760
        %v1967 = vmul.f32 %v1018, %v1764
        %v1968 = vmul.f32 %v1019, %v1768
        %v1969 = vmul.f32 %v1020, %v1772
        %v1970 = vmul.f32 %v1021, %v1776
        %v1971 = vmul.f32 %v1022, %v1780
        %v1972 = vmul.f32 %v1023, %v1784
        %v1973 = vmul.f32 %v1024, %v1788
        %v1974 = vmul.f32 %v1025, %v1792
        %v1975 = vmul.f32 %v1026, %v1796
        %v1976 = vmul.f32 %v1027, %v1800
        %v1977 = vmul.f32 %v1028, %v1804
        %v1978 = vmul.f32 %v1029, %v1808
        %v1979 = vmul.f32 %v1030, %v1812
        %v1980 = vmul.f32 %v1031, %v1816
        %v1981 = vmul.f32 %v1032, %v1820
        %v1982 = vmul.f32 %v1033, %v1824
        %v1983 = vmul.f32 %v1034, %v1828
        %v1984 = vmul.f32 %v1035, %v1832
        %v1985 = vmul.f32 %v1036, %v1836
        %v1986 = vmul.f32 %v1037, %v1840
        %v1987 = vmul.f32 %v1038, %v1844
        %v1988 = vmul.f32 %v1039, %v1848
        %v1989 = vmul.f32 %v1040, %v1852
        %v1990 = vmul.f32 %v1041, %v1856
        %v1991 = vmul.f32 %v1042, %v1860
        %v1992 = vmul.f32 %v1043, %v1864
        %v1993 = vadd.f32 %v1929, %v1930
        %v1994 = vadd.f32 %v1993, %v1931
        %v1995 = vadd.f32 %v1994, %v1932
        %v1996 = vadd.f32 %v1995, %v1933
        %v1997 = vadd.f32 %v1996, %v1934
        %v1998 = vadd.f32 %v1997, %v1935
        %v1999 = vadd.f32 %v1998, %v1936
        %2000 = vadd.xlane.f32.xlu0 %v1999
        %v2001 = vpop.xlane.xlu0 %2000
        %v2002 = vadd.f32 %v1937, %v1938
        %v2003 = vadd.f32 %v2002, %v1939
        %v2004 = vadd.f32 %v2003, %v1940
        %v2005 = vadd.f32 %v2004, %v1941
        %v2006 = vadd.f32 %v2005, %v1942
        %v2007 = vadd.f32 %v2006, %v1943
        %v2008 = vadd.f32 %v2007, %v1944
        %2009 = vadd.xlane.f32.xlu0 %v2008
        %v2010 = vpop.xlane.xlu0 %2009
        %v2011 = vadd.f32 %v1945, %v1946
        %v2012 = vadd.f32 %v2011, %v1947
        %v2013 = vadd.f32 %v2012, %v1948
        %v2014 = vadd.f32 %v2013, %v1949
        %v2015 = vadd.f32 %v2014, %v1950
        %v2016 = vadd.f32 %v2015, %v1951
        %v2017 = vadd.f32 %v2016, %v1952
        %2018 = vadd.xlane.f32.xlu0 %v2017
        %v2019 = vpop.xlane.xlu0 %2018
        %v2020 = vadd.f32 %v1953, %v1954
        %v2021 = vadd.f32 %v2020, %v1955
        %v2022 = vadd.f32 %v2021, %v1956
        %v2023 = vadd.f32 %v2022, %v1957
        %v2024 = vadd.f32 %v2023, %v1958
        %v2025 = vadd.f32 %v2024, %v1959
        %v2026 = vadd.f32 %v2025, %v1960
        %2027 = vadd.xlane.f32.xlu0 %v2026
        %v2028 = vpop.xlane.xlu0 %2027
        %v2029 = vadd.f32 %v1961, %v1962
        %v2030 = vadd.f32 %v2029, %v1963
        %v2031 = vadd.f32 %v2030, %v1964
        %v2032 = vadd.f32 %v2031, %v1965
        %v2033 = vadd.f32 %v2032, %v1966
        %v2034 = vadd.f32 %v2033, %v1967
        %v2035 = vadd.f32 %v2034, %v1968
        %2036 = vadd.xlane.f32.xlu0 %v2035
        %v2037 = vpop.xlane.xlu0 %2036
        %v2038 = vadd.f32 %v1969, %v1970
        %v2039 = vadd.f32 %v2038, %v1971
        %v2040 = vadd.f32 %v2039, %v1972
        %v2041 = vadd.f32 %v2040, %v1973
        %v2042 = vadd.f32 %v2041, %v1974
        %v2043 = vadd.f32 %v2042, %v1975
        %v2044 = vadd.f32 %v2043, %v1976
        %2045 = vadd.xlane.f32.xlu0 %v2044
        %v2046 = vpop.xlane.xlu0 %2045
        %v2047 = vadd.f32 %v1977, %v1978
        %v2048 = vadd.f32 %v2047, %v1979
        %v2049 = vadd.f32 %v2048, %v1980
        %v2050 = vadd.f32 %v2049, %v1981
        %v2051 = vadd.f32 %v2050, %v1982
        %v2052 = vadd.f32 %v2051, %v1983
        %v2053 = vadd.f32 %v2052, %v1984
        %2054 = vadd.xlane.f32.xlu0 %v2053
        %v2055 = vpop.xlane.xlu0 %2054
        %v2056 = vadd.f32 %v1985, %v1986
        %v2057 = vadd.f32 %v2056, %v1987
        %v2058 = vadd.f32 %v2057, %v1988
        %v2059 = vadd.f32 %v2058, %v1989
        %v2060 = vadd.f32 %v2059, %v1990
        %v2061 = vadd.f32 %v2060, %v1991
        %v2062 = vadd.f32 %v2061, %v1992
        %2063 = vadd.xlane.f32.xlu0 %v2062
        %v2064 = vpop.xlane.xlu0 %2063
        %v2073 = vlaneseq
        %v2074 = vand.u32 %v2073, 127
        %v2075 = vlaneseq
        %v2076 = vshrl.u32 %v2075, 7
        %v2077 = vsub.s32 %v2074, %v2076
        %v2078 = vrot.slane %v2001, %v2077
        %v2079 = vlaneseq
        %v2080 = vshrl.u32 %v2079, 7
        %v2081 = vsub.s32 %v2074, %v2080
        %v2082 = vrot.slane %v2010, %v2081
        %v2083 = vlaneseq
        %v2084 = vshrl.u32 %v2083, 7
        %v2085 = vsub.s32 %v2074, %v2084
        %v2086 = vrot.slane %v2019, %v2085
        %v2087 = vlaneseq
        %v2088 = vshrl.u32 %v2087, 7
        %v2089 = vsub.s32 %v2074, %v2088
        %v2090 = vrot.slane %v2028, %v2089
        %v2091 = vlaneseq
        %v2092 = vshrl.u32 %v2091, 7
        %v2093 = vsub.s32 %v2074, %v2092
        %v2094 = vrot.slane %v2037, %v2093
        %v2095 = vlaneseq
        %v2096 = vshrl.u32 %v2095, 7
        %v2097 = vsub.s32 %v2074, %v2096
        %v2098 = vrot.slane %v2046, %v2097
        %v2099 = vlaneseq
        %v2100 = vshrl.u32 %v2099, 7
        %v2101 = vsub.s32 %v2074, %v2100
        %v2102 = vrot.slane %v2055, %v2101
        %v2103 = vlaneseq
        %v2104 = vshrl.u32 %v2103, 7
        %v2105 = vsub.s32 %v2074, %v2104
        %v2106 = vrot.slane %v2064, %v2105
        %vm2107 = vcmask 1041409
        %v2108 = vsel %vm2107, %v2082, %v2078
        %vm2109 = vcmask 1042434
        %v2110 = vsel %vm2109, %v2086, %v2108
        %vm2111 = vcmask 1043459
        %v2112 = vsel %vm2111, %v2090, %v2110
        %vm2113 = vcmask 1044484
        %v2114 = vsel %vm2113, %v2094, %v2112
        %vm2115 = vcmask 1045509
        %v2116 = vsel %vm2115, %v2098, %v2114
        %vm2117 = vcmask 1046534
        %v2118 = vsel %vm2117, %v2102, %v2116
        %vm2119 = vcmask 1047559
        %v2120 = vsel %vm2119, %v2106, %v2118
        %vm2122 = vcmask 64512
        %v2123 = vsel %vm2122, %v2120, -inf
        %2124 = vmax.xlane.f32.xlu0 %v2123
        %v2125 = vpop.xlane.xlu0 %2124
        %v2127 = vlaneseq
        %v2128 = vshrl.u32 %v2127, 7
        %v2129 = vsub.s32 0, %v2128
        %v2130 = vrot.slane %v2125, %v2129
        %v2131 = vlaneseq
        %v2132 = vshrl.u32 %v2131, 7
        %v2133 = vsub.s32 1, %v2132
        %v2134 = vrot.slane %v2125, %v2133
        %v2135 = vlaneseq
        %v2136 = vshrl.u32 %v2135, 7
        %v2137 = vsub.s32 2, %v2136
        %v2138 = vrot.slane %v2125, %v2137
        %v2139 = vlaneseq
        %v2140 = vshrl.u32 %v2139, 7
        %v2141 = vsub.s32 3, %v2140
        %v2142 = vrot.slane %v2125, %v2141
        %v2143 = vlaneseq
        %v2144 = vshrl.u32 %v2143, 7
        %v2145 = vsub.s32 4, %v2144
        %v2146 = vrot.slane %v2125, %v2145
        %v2147 = vlaneseq
        %v2148 = vshrl.u32 %v2147, 7
        %v2149 = vsub.s32 5, %v2148
        %v2150 = vrot.slane %v2125, %v2149
        %v2151 = vlaneseq
        %v2152 = vshrl.u32 %v2151, 7
        %v2153 = vsub.s32 6, %v2152
        %v2154 = vrot.slane %v2125, %v2153
        %v2155 = vlaneseq
        %v2156 = vshrl.u32 %v2155, 7
        %v2157 = vsub.s32 7, %v2156
        %v2158 = vrot.slane %v2125, %v2157
        %v2167 = vsub.f32 %v2001, %v2130
        %v2168 = vsub.f32 %v2010, %v2134
        %v2169 = vsub.f32 %v2019, %v2138
        %v2170 = vsub.f32 %v2028, %v2142
        %v2171 = vsub.f32 %v2037, %v2146
        %v2172 = vsub.f32 %v2046, %v2150
        %v2173 = vsub.f32 %v2055, %v2154
        %v2174 = vsub.f32 %v2064, %v2158
        %v2175 = vmul.f32 %v2167, 1.442695
        %v2176 = vpow.pop %v2175
        %v2177 = vmul.f32 %v2168, 1.442695
        %v2178 = vpow.pop %v2177
        %v2179 = vmul.f32 %v2169, 1.442695
        %v2180 = vpow.pop %v2179
        %v2181 = vmul.f32 %v2170, 1.442695
        %v2182 = vpow.pop %v2181
        %v2183 = vmul.f32 %v2171, 1.442695
        %v2184 = vpow.pop %v2183
        %v2185 = vmul.f32 %v2172, 1.442695
        %v2186 = vpow.pop %v2185
        %v2187 = vmul.f32 %v2173, 1.442695
        %v2188 = vpow.pop %v2187
        %v2189 = vmul.f32 %v2174, 1.442695
        %v2190 = vpow.pop %v2189
        %2199 = vset.pattern.permute.xlu0 0
        %2200 = vperm.xlu0 %2199, %v2176
        %v2201 = vpop.permute.xlu0 %2200
        %2202 = vset.pattern.permute.xlu0 0
        %2203 = vperm.xlu0 %2202, %v2178
        %v2204 = vpop.permute.xlu0 %2203
        %2205 = vset.pattern.permute.xlu0 0
        %2206 = vperm.xlu0 %2205, %v2180
        %v2207 = vpop.permute.xlu0 %2206
        %2208 = vset.pattern.permute.xlu0 0
        %2209 = vperm.xlu0 %2208, %v2182
        %v2210 = vpop.permute.xlu0 %2209
        %2211 = vset.pattern.permute.xlu0 0
        %2212 = vperm.xlu0 %2211, %v2184
        %v2213 = vpop.permute.xlu0 %2212
        %2214 = vset.pattern.permute.xlu0 0
        %2215 = vperm.xlu0 %2214, %v2186
        %v2216 = vpop.permute.xlu0 %2215
        %2217 = vset.pattern.permute.xlu0 0
        %2218 = vperm.xlu0 %2217, %v2188
        %v2219 = vpop.permute.xlu0 %2218
        %2220 = vset.pattern.permute.xlu0 0
        %2221 = vperm.xlu0 %2220, %v2190
        %v2222 = vpop.permute.xlu0 %2221
        %v2223 = vlaneseq
        %v2224 = vshrl.u32 %v2223, 7
        %v2225 = vsub.s32 %v2074, %v2224
        %v2226 = vrot.slane %v2201, %v2225
        %v2227 = vlaneseq
        %v2228 = vshrl.u32 %v2227, 7
        %v2229 = vsub.s32 %v2074, %v2228
        %v2230 = vrot.slane %v2204, %v2229
        %v2231 = vlaneseq
        %v2232 = vshrl.u32 %v2231, 7
        %v2233 = vsub.s32 %v2074, %v2232
        %v2234 = vrot.slane %v2207, %v2233
        %v2235 = vlaneseq
        %v2236 = vshrl.u32 %v2235, 7
        %v2237 = vsub.s32 %v2074, %v2236
        %v2238 = vrot.slane %v2210, %v2237
        %v2239 = vlaneseq
        %v2240 = vshrl.u32 %v2239, 7
        %v2241 = vsub.s32 %v2074, %v2240
        %v2242 = vrot.slane %v2213, %v2241
        %v2243 = vlaneseq
        %v2244 = vshrl.u32 %v2243, 7
        %v2245 = vsub.s32 %v2074, %v2244
        %v2246 = vrot.slane %v2216, %v2245
        %v2247 = vlaneseq
        %v2248 = vshrl.u32 %v2247, 7
        %v2249 = vsub.s32 %v2074, %v2248
        %v2250 = vrot.slane %v2219, %v2249
        %v2251 = vlaneseq
        %v2252 = vshrl.u32 %v2251, 7
        %v2253 = vsub.s32 %v2074, %v2252
        %v2254 = vrot.slane %v2222, %v2253
        %v2255 = vsel %vm2107, %v2230, %v2226
        %v2256 = vsel %vm2109, %v2234, %v2255
        %v2257 = vsel %vm2111, %v2238, %v2256
        %v2258 = vsel %vm2113, %v2242, %v2257
        %v2259 = vsel %vm2115, %v2246, %v2258
        %v2260 = vsel %vm2117, %v2250, %v2259
        %v2261 = vsel %vm2119, %v2254, %v2260
        %v2263 = vsel %vm2122, %v2261, 0.0
        %2264 = vadd.xlane.f32.xlu0 %v2263
        %v2265 = vpop.xlane.xlu0 %2264
        %v2266 = vrcp.pop %v2265
        %v2268 = vlaneseq
        %v2269 = vshrl.u32 %v2268, 7
        %v2270 = vsub.s32 0, %v2269
        %v2271 = vrot.slane %v2266, %v2270
        %v2272 = vlaneseq
        %v2273 = vshrl.u32 %v2272, 7
        %v2274 = vsub.s32 1, %v2273
        %v2275 = vrot.slane %v2266, %v2274
        %v2276 = vlaneseq
        %v2277 = vshrl.u32 %v2276, 7
        %v2278 = vsub.s32 2, %v2277
        %v2279 = vrot.slane %v2266, %v2278
        %v2280 = vlaneseq
        %v2281 = vshrl.u32 %v2280, 7
        %v2282 = vsub.s32 3, %v2281
        %v2283 = vrot.slane %v2266, %v2282
        %v2284 = vlaneseq
        %v2285 = vshrl.u32 %v2284, 7
        %v2286 = vsub.s32 4, %v2285
        %v2287 = vrot.slane %v2266, %v2286
        %v2288 = vlaneseq
        %v2289 = vshrl.u32 %v2288, 7
        %v2290 = vsub.s32 5, %v2289
        %v2291 = vrot.slane %v2266, %v2290
        %v2292 = vlaneseq
        %v2293 = vshrl.u32 %v2292, 7
        %v2294 = vsub.s32 6, %v2293
        %v2295 = vrot.slane %v2266, %v2294
        %v2296 = vlaneseq
        %v2297 = vshrl.u32 %v2296, 7
        %v2298 = vsub.s32 7, %v2297
        %v2299 = vrot.slane %v2266, %v2298
        %v2308 = vmul.f32 %v2176, %v2271
        %v2309 = vmul.f32 %v2178, %v2275
        %v2310 = vmul.f32 %v2180, %v2279
        %v2311 = vmul.f32 %v2182, %v2283
        %v2312 = vmul.f32 %v2184, %v2287
        %v2313 = vmul.f32 %v2186, %v2291
        %v2314 = vmul.f32 %v2188, %v2295
        %v2315 = vmul.f32 %v2190, %v2299
        %2317 = vset.pattern.permute.xlu0 0
        %2318 = vperm.xlu0 %2317, %v2308
        %v2319 = vpop.permute.xlu0 %2318
        %2322 = vset.pattern.permute.xlu0 0
        %2323 = vperm.xlu0 %2322, %v2309
        %v2324 = vpop.permute.xlu0 %2323
        %2327 = vset.pattern.permute.xlu0 0
        %2328 = vperm.xlu0 %2327, %v2310
        %v2329 = vpop.permute.xlu0 %2328
        %2332 = vset.pattern.permute.xlu0 0
        %2333 = vperm.xlu0 %2332, %v2311
        %v2334 = vpop.permute.xlu0 %2333
        %2337 = vset.pattern.permute.xlu0 0
        %2338 = vperm.xlu0 %2337, %v2312
        %v2339 = vpop.permute.xlu0 %2338
        %2342 = vset.pattern.permute.xlu0 0
        %2343 = vperm.xlu0 %2342, %v2313
        %v2344 = vpop.permute.xlu0 %2343
        %2347 = vset.pattern.permute.xlu0 0
        %2348 = vperm.xlu0 %2347, %v2314
        %v2349 = vpop.permute.xlu0 %2348
        %2352 = vset.pattern.permute.xlu0 0
        %2353 = vperm.xlu0 %2352, %v2315
        %v2354 = vpop.permute.xlu0 %2353
        %v2356 = vmul.f32 %v2319, %v389
        %v2357 = vmul.f32 %v2324, %v390
        %v2358 = vmul.f32 %v2329, %v391
        %v2359 = vmul.f32 %v2334, %v392
        %v2360 = vmul.f32 %v2339, %v393
        %v2361 = vmul.f32 %v2344, %v394
        %v2362 = vmul.f32 %v2349, %v395
        %v2363 = vmul.f32 %v2354, %v396
        %v2364 = vsel %vm503, %v2356, 0.0
        %v2365 = vrot.slane %v2364, 4
        %v2366 = vadd.f32 %v2364, %v2365
        %v2367 = vrot.slane %v2366, 2
        %v2368 = vadd.f32 %v2366, %v2367
        %v2369 = vrot.slane %v2368, 1
        %v2370 = vadd.f32 %v2368, %v2369
        %v2371 = vsel %vm503, %v2357, 0.0
        %v2372 = vrot.slane %v2371, 4
        %v2373 = vadd.f32 %v2371, %v2372
        %v2374 = vrot.slane %v2373, 2
        %v2375 = vadd.f32 %v2373, %v2374
        %v2376 = vrot.slane %v2375, 1
        %v2377 = vadd.f32 %v2375, %v2376
        %v2378 = vsel %vm503, %v2358, 0.0
        %v2379 = vrot.slane %v2378, 4
        %v2380 = vadd.f32 %v2378, %v2379
        %v2381 = vrot.slane %v2380, 2
        %v2382 = vadd.f32 %v2380, %v2381
        %v2383 = vrot.slane %v2382, 1
        %v2384 = vadd.f32 %v2382, %v2383
        %v2385 = vsel %vm503, %v2359, 0.0
        %v2386 = vrot.slane %v2385, 4
        %v2387 = vadd.f32 %v2385, %v2386
        %v2388 = vrot.slane %v2387, 2
        %v2389 = vadd.f32 %v2387, %v2388
        %v2390 = vrot.slane %v2389, 1
        %v2391 = vadd.f32 %v2389, %v2390
        %v2392 = vsel %vm503, %v2360, 0.0
        %v2393 = vrot.slane %v2392, 4
        %v2394 = vadd.f32 %v2392, %v2393
        %v2395 = vrot.slane %v2394, 2
        %v2396 = vadd.f32 %v2394, %v2395
        %v2397 = vrot.slane %v2396, 1
        %v2398 = vadd.f32 %v2396, %v2397
        %v2399 = vsel %vm503, %v2361, 0.0
        %v2400 = vrot.slane %v2399, 4
        %v2401 = vadd.f32 %v2399, %v2400
        %v2402 = vrot.slane %v2401, 2
        %v2403 = vadd.f32 %v2401, %v2402
        %v2404 = vrot.slane %v2403, 1
        %v2405 = vadd.f32 %v2403, %v2404
        %v2406 = vsel %vm503, %v2362, 0.0
        %v2407 = vrot.slane %v2406, 4
        %v2408 = vadd.f32 %v2406, %v2407
        %v2409 = vrot.slane %v2408, 2
        %v2410 = vadd.f32 %v2408, %v2409
        %v2411 = vrot.slane %v2410, 1
        %v2412 = vadd.f32 %v2410, %v2411
        %v2413 = vsel %vm503, %v2363, 0.0
        %v2414 = vrot.slane %v2413, 4
        %v2415 = vadd.f32 %v2413, %v2414
        %v2416 = vrot.slane %v2415, 2
        %v2417 = vadd.f32 %v2415, %v2416
        %v2418 = vrot.slane %v2417, 1
        %v2419 = vadd.f32 %v2417, %v2418
        %v2428 = vsel %vm2107, %v2377, %v2370
        %v2429 = vsel %vm2109, %v2384, %v2428
        %v2430 = vsel %vm2111, %v2391, %v2429
        %v2431 = vsel %vm2113, %v2398, %v2430
        %v2432 = vsel %vm2115, %v2405, %v2431
        %v2433 = vsel %vm2117, %v2412, %v2432
        %v2434 = vsel %vm2119, %v2419, %v2433
        %2436 = vst.msk [vmem:[%s387] sm:$0xff] %vm503, %v2434
        %s2437 = sand.u32 %s194, 1
        %s2438 = scalar_lea.sflag [#allocation4], %s2437
        %s2439 = sand.u32 %s194, 1
        %s2440 = smul.addr %s2439, 8
        %s2441 = scalar_lea.vmem [#allocation13], %s2440
        // Predicated region
        $region73: #{tpu_custom_call.1} parent=47 // pred_check
          %p2442 = pneg %p204
        $region74: #{tpu_custom_call.1} parent=47 // pred_check_branch
          %2444 = sbr.rel (%p2442) target = $region76
        $region75: #{tpu_custom_call.1} parent=47 // pred_region
          %s2446 = ssub.s32 128, 128
          %2447 = vsyncadd %s2438, %s2446
          %s2448 = smul.addr %s29, 128
          %s2449 = scalar_lea.hbm %s7, %s2448
          %s2451 = sshll.u32 %s2441, 4
          %s2452 = int_to_ptr.vmem [resolvable:$true] %s2451
          %2454 = dma.vmem_to_hbm [thread:$0]  %s2452, 128, %s2449, %s2438
        $region76: #{tpu_custom_call.1} parent=47 // pred_fallthru
          _
      $region48: #{tpu_custom_call.1} parent=5 // pred_fallthru
        _
      %p2455 = scmp.le.s32.totalorder 2, %s24
      // Predicated region
      $region77: #{tpu_custom_call.1} parent=5 // pred_check
        %p2456 = pneg %p2455
      $region78: #{tpu_custom_call.1} parent=5 // pred_check_branch
        %2458 = sbr.rel (%p2456) target = $region80
      $region79: #{tpu_custom_call.1} parent=5 // pred_region
        %s2459 = ssub.s32 %s24, 2
        // Predicated region
        $region81: #{tpu_custom_call.1} parent=79 // pred_check
          %p2460 = pneg %p210
        $region82: #{tpu_custom_call.1} parent=79 // pred_check_branch
          %2462 = sbr.rel (%p2460) target = $region84
        $region83: #{tpu_custom_call.1} parent=79 // pred_region
          %s2463 = sand.u32 %s195, 1
          %s2464 = scalar_lea.sflag [#allocation4], %s2463
          %s2465 = sand.u32 %s195, 1
          %s2466 = smul.addr %s2465, 8
          %s2467 = scalar_lea.vmem [#allocation13], %s2466
          %2468 = dma.done %s2464, 128
        $region84: #{tpu_custom_call.1} parent=79 // pred_fallthru
          _
      $region80: #{tpu_custom_call.1} parent=5 // pred_fallthru
        _
    $region6: #{tpu_custom_call.1} parent=1 // loop_footer
      %s28 = sadd.s32 1, %s24
    $region7: #{tpu_custom_call.1} parent=1 // loop_footer_branch
      %23 = sbr.rel target = $region3
    $region8: #{tpu_custom_call.1} parent=1 // loop_exit
      _
    %2469 = vsyncpa [#allocation3], 1
    %s2470 = scalar_lea.sflag [#allocation3], 1
    %2471 = vsyncpa %s2470, 1
    %2472 = vsyncpa [#allocation6], 1
    %s2473 = scalar_lea.sflag [#allocation6], 1
    %2474 = vsyncpa %s2473, 1
    %2475 = vsyncpa [#allocation9], 1
    %2476 = vsyncpa [#allocation12], 1
    %2477 = vsyncpa [#allocation4], 1
    %s2478 = scalar_lea.sflag [#allocation4], 1
    %2479 = vsyncpa %s2478, 1

</llo_original>
